<compile_context>
chip_gen: v5e
topology: v5e:2x2
jax: 0.10.0
libtpu: 0.0.40
codegen_flags: <defaults>
</compile_context>

<pallas_src>
import functools

import jax
import jax.numpy as jnp
import numpy as np
from jax import lax
from jax.experimental import pallas as pl
from jax.experimental.pallas import tpu as pltpu


def _round_up(v, m):
    return (v + m - 1) // m * m


def _pick_hidden_tile(H, requested):
    """Largest divisor of H that is a multiple of 128 and <= requested."""
    best = None
    t = 128
    while t <= H:
        if H % t == 0 and t <= requested:
            best = t
        t += 128
    return best if best is not None else H  # fall back to resident weights


def ffn_kernel(x_ref, g_ref, b_ref, wh_ref, wg_ref, bh_ref, bg_ref,
               wd_ref, bd_ref, o_ref, xn_ref, acc_ref, *, eps):
    j = pl.program_id(1)

    @pl.when(j == 0)
    def _init():
        # LayerNorm once per row tile (f32 math, like PyTorch); cache the
        # result in the matmul-input dtype.
        xf = x_ref[...].astype(jnp.float32)
        mean = jnp.mean(xf, axis=-1, keepdims=True)
        var = jnp.mean(jnp.square(xf - mean), axis=-1, keepdims=True)
        xn = (xf - mean) * lax.rsqrt(var + eps)
        xn = xn * g_ref[...].astype(jnp.float32) + b_ref[...].astype(jnp.float32)
        xn_ref[...] = xn.astype(xn_ref.dtype)
        # Fold the down-projection bias into the accumulator init.
        acc_ref[...] = jnp.broadcast_to(bd_ref[...].astype(jnp.float32),
                                        acc_ref.shape)

    xn = xn_ref[...]
    # Up projection for this hidden tile: native-dtype weights on the MXU,
    # f32 accumulation via preferred_element_type.
    h = jnp.dot(xn, wh_ref[...], preferred_element_type=jnp.float32)
    h = h + bh_ref[...].astype(jnp.float32)
    y = jnp.dot(xn, wg_ref[...], preferred_element_type=jnp.float32)
    y = y + bg_ref[...].astype(jnp.float32)
    act = h * (y * jax.nn.sigmoid(y))            # value * silu(gate)
    # drop_1: identity (eval mode)

    # Partial down projection for this hidden tile, accumulated in f32.
    acc_ref[...] += jnp.dot(act.astype(wd_ref.dtype), wd_ref[...],
                            preferred_element_type=jnp.float32)

    @pl.when(j == pl.num_programs(1) - 1)
    def _finalize():
        # drop_2: identity (eval mode)
        o_ref[...] = acc_ref[...].astype(o_ref.dtype)


def feed_forward(x, gamma, beta, w_up, b_up, w_down, b_down, *,
                 tm=256, th=512, eps=1e-5, vmem_limit_bytes=64 * 1024 * 1024):
    """x: (B, T, D). Weights in "math" layout: w_up (D, 2H), w_down (H, D)."""
    B, T, D = x.shape
    H2 = w_up.shape[1]
    H = H2 // 2
    N = B * T

    # Row tile: large enough to fill the MXU, clamped for small inputs.
    # bf16 packs 2 rows/sublane -> keep tm a multiple of 16 for sub-32-bit.
    row_align = 16 if jnp.dtype(x.dtype).itemsize < 4 else 8
    tm = min(tm, _round_up(N, row_align))
    tm = _round_up(tm, row_align)
    N_pad = _round_up(N, tm)

    # Hidden tile: stream weights along H so VMEM stays bounded.
    th = _pick_hidden_tile(H, min(th, H))

    x2 = x.reshape(N, D)
    if N_pad != N:
        x2 = jnp.pad(x2, ((0, N_pad - N), (0, 0)))

    # Split the fused up projection into lane-contiguous value/gate halves
    # outside the kernel (no in-kernel (tm, 2H) slicing at a lane offset).
    w_h, w_gate = w_up[:, :H], w_up[:, H:]
    b_h = b_up[:H].reshape(1, H)
    b_gate = b_up[H:].reshape(1, H)
    g2 = gamma.reshape(1, D)
    be2 = beta.reshape(1, D)
    bd2 = b_down.reshape(1, D)

    grid = (N_pad // tm, H // th)
    w_dtype = w_up.dtype

    kernel = functools.partial(ffn_kernel, eps=eps)

    itemsize_x = jnp.dtype(x.dtype).itemsize
    itemsize_w = jnp.dtype(w_dtype).itemsize
    flops = 6 * N_pad * D * H + 8 * N_pad * D            # 2 up dots + down dot + LN
    bytes_accessed = (
        2 * N_pad * D * itemsize_x                       # x in + out
        + grid[0] * 3 * D * H * itemsize_w               # streamed weights per row tile
        + (2 * H + 3 * D) * 4                            # biases + LN affine
    )
    cost = pl.CostEstimate(flops=flops, transcendentals=N_pad * H,
                           bytes_accessed=bytes_accessed)

    out = pl.pallas_call(
        kernel,
        out_shape=jax.ShapeDtypeStruct((N_pad, D), x.dtype),
        grid_spec=pltpu.PrefetchScalarGridSpec(
            num_scalar_prefetch=0,
            grid=grid,
            in_specs=[
                pl.BlockSpec((tm, D), lambda i, j: (i, 0)),    # x rows
                pl.BlockSpec((1, D), lambda i, j: (0, 0)),     # LN gamma
                pl.BlockSpec((1, D), lambda i, j: (0, 0)),     # LN beta
                pl.BlockSpec((D, th), lambda i, j: (0, j)),    # up value weight tile
                pl.BlockSpec((D, th), lambda i, j: (0, j)),    # up gate weight tile
                pl.BlockSpec((1, th), lambda i, j: (0, j)),    # up value bias tile
                pl.BlockSpec((1, th), lambda i, j: (0, j)),    # up gate bias tile
                pl.BlockSpec((th, D), lambda i, j: (j, 0)),    # down weight tile
                pl.BlockSpec((1, D), lambda i, j: (0, 0)),     # down bias
            ],
            out_specs=pl.BlockSpec((tm, D), lambda i, j: (i, 0)),
            scratch_shapes=[
                pltpu.VMEM((tm, D), w_dtype),      # cached normalized rows
                pltpu.VMEM((tm, D), jnp.float32),  # f32 output accumulator
            ],
        ),
        compiler_params=pltpu.CompilerParams(
            dimension_semantics=("parallel", "arbitrary"),
            vmem_limit_bytes=vmem_limit_bytes,
        ),
        cost_estimate=cost,
    )(x2, g2, be2, w_h, w_gate, b_h, b_gate, w_down, bd2)

    if N_pad != N:
        out = out[:N]
    return out.reshape(B, T, D)


def feed_forward_ref(x, gamma, beta, w_up, b_up, w_down, b_down, *, eps=1e-5):
    xf = x.astype(jnp.float32)
    mean = jnp.mean(xf, axis=-1, keepdims=True)
    var = jnp.mean((xf - mean) ** 2, axis=-1, keepdims=True)
    xn = (xf - mean) * lax.rsqrt(var + eps)
    xn = xn * gamma.astype(jnp.float32) + beta.astype(jnp.float32)
    up = xn @ w_up.astype(jnp.float32) + b_up.astype(jnp.float32)
    h, y = jnp.split(up, 2, axis=-1)
    act = h * jax.nn.silu(y)
    return act @ w_down.astype(jnp.float32) + b_down.astype(jnp.float32)


if __name__ == "__main__":
    B, T, dim, hidden_dim = 2, 128, 256, 512

    key = jax.random.PRNGKey(0)
    kx, ku, kub, kd, kdb = jax.random.split(key, 5)

    x = jax.random.normal(kx, (B, T, dim), dtype=jnp.float32)

    # LayerNorm params: PyTorch default init (ones / zeros)
    gamma = jnp.ones((dim,), jnp.float32)
    beta = jnp.zeros((dim,), jnp.float32)

    # up: nn.Linear(dim, hidden_dim * 2)
    w_up = jax.random.normal(ku, (dim, hidden_dim * 2), jnp.float32) * (1.0 / np.sqrt(dim))
    b_up = jax.random.normal(kub, (hidden_dim * 2,), jnp.float32) * 0.01

    # down: zero_init in the module; small random values here so the down
    # matmul / accumulator path is actually exercised.
    w_down = jax.random.normal(kd, (hidden_dim, dim), jnp.float32) * (1.0 / np.sqrt(hidden_dim))
    b_down = jax.random.normal(kdb, (dim,), jnp.float32) * 0.01

    # f32 path
    out = feed_forward(x, gamma, beta, w_up, b_up, w_down, b_down, tm=128, th=256)
    out = jax.block_until_ready(out)
    ref = feed_forward_ref(x, gamma, beta, w_up, b_up, w_down, b_down)
    np.testing.assert_allclose(np.asarray(out), np.asarray(ref), rtol=1e-4, atol=1e-4)

    # Non-divisible row count (exercises the padding path)
    x_odd = x[:, :100, :]
    out_odd = feed_forward(x_odd, gamma, beta, w_up, b_up, w_down, b_down, tm=128, th=256)
    out_odd = jax.block_until_ready(out_odd)
    ref_odd = feed_forward_ref(x_odd, gamma, beta, w_up, b_up, w_down, b_down)
    np.testing.assert_allclose(np.asarray(out_odd), np.asarray(ref_odd), rtol=1e-4, atol=1e-4)

    # bf16 weights/activations path (f32 accumulation inside the kernel)
    xb = x.astype(jnp.bfloat16)
    w_up_b = w_up.astype(jnp.bfloat16)
    w_down_b = w_down.astype(jnp.bfloat16)
    out_b = feed_forward(xb, gamma, beta, w_up_b, b_up, w_down_b, b_down, tm=128, th=256)
    out_b = jax.block_until_ready(out_b)
    ref_b = feed_forward_ref(xb, gamma, beta, w_up_b, b_up, w_down_b, b_down)
    np.testing.assert_allclose(np.asarray(out_b.astype(jnp.float32)),
                               np.asarray(ref_b), rtol=1e-1, atol=1e-1)

    print("KERNEL_OK")
</pallas_src>

<mosaic_0001>
module attributes {stable_mosaic.version = 11 : i64} {
  func.func @ffn_kernel(%arg0: i32, %arg1: i32, %arg2: memref<128x256xf32, #tpu.memory_space<vmem>>, %arg3: memref<1x256xf32, #tpu.memory_space<vmem>>, %arg4: memref<1x256xf32, #tpu.memory_space<vmem>>, %arg5: memref<256x256xf32, #tpu.memory_space<vmem>>, %arg6: memref<256x256xf32, #tpu.memory_space<vmem>>, %arg7: memref<1x256xf32, #tpu.memory_space<vmem>>, %arg8: memref<1x256xf32, #tpu.memory_space<vmem>>, %arg9: memref<256x256xf32, #tpu.memory_space<vmem>>, %arg10: memref<1x256xf32, #tpu.memory_space<vmem>>, %arg11: memref<128x256xf32, #tpu.memory_space<vmem>>, %arg12: memref<128x256xf32, #tpu.memory_space<vmem>>, %arg13: memref<128x256xf32, #tpu.memory_space<vmem>>) attributes {dimension_semantics = [#tpu.dimension_semantics<parallel>, #tpu.dimension_semantics<arbitrary>], iteration_bounds = array<i64: 2, 2>, scalar_prefetch = 0 : i64, scratch_operands = 2 : i64, tpu.core_type = #tpu.core_type<tc>, window_params = [{transform_indices = @transform_0, window_bounds = array<i64: 128, 256>}, {pipeline_mode = #tpu.pipeline_mode<synchronous>, transform_indices = @transform_1, window_bounds = array<i64: 1, 256>}, {pipeline_mode = #tpu.pipeline_mode<synchronous>, transform_indices = @transform_2, window_bounds = array<i64: 1, 256>}, {transform_indices = @transform_3, window_bounds = array<i64: 256, 256>}, {transform_indices = @transform_4, window_bounds = array<i64: 256, 256>}, {transform_indices = @transform_5, window_bounds = array<i64: 1, 256>}, {transform_indices = @transform_6, window_bounds = array<i64: 1, 256>}, {transform_indices = @transform_7, window_bounds = array<i64: 256, 256>}, {pipeline_mode = #tpu.pipeline_mode<synchronous>, transform_indices = @transform_8, window_bounds = array<i64: 1, 256>}, {transform_indices = @transform_9, window_bounds = array<i64: 128, 256>}]} {
    %c0_i32 = arith.constant 0 : i32
    %0 = arith.cmpi eq, %arg1, %c0_i32 : i32
    %1 = arith.extui %0 : i1 to i32
    %c0_i32_0 = arith.constant 0 : i32
    %2 = arith.cmpi ne, %1, %c0_i32_0 : i32
    scf.if %2 {
      %c0_20 = arith.constant 0 : index
      %c0_21 = arith.constant 0 : index
      %29 = vector.load %arg2[%c0_20, %c0_21] : memref<128x256xf32, #tpu.memory_space<vmem>>, vector<128x256xf32>
      %cst_22 = arith.constant dense<0.000000e+00> : vector<128xf32>
      %30 = vector.multi_reduction <add>, %29, %cst_22 [1] : vector<128x256xf32> to vector<128xf32>
      %31 = vector.shape_cast %30 : vector<128xf32> to vector<128x1xf32>
      %cst_23 = arith.constant 2.560000e+02 : f32
      %32 = vector.broadcast %cst_23 : f32 to vector<128x1xf32>
      %33 = arith.divf %31, %32 : vector<128x1xf32>
      %34 = vector.broadcast %33 : vector<128x1xf32> to vector<128x256xf32>
      %35 = arith.subf %29, %34 : vector<128x256xf32>
      %36 = arith.mulf %35, %35 : vector<128x256xf32>
      %cst_24 = arith.constant dense<0.000000e+00> : vector<128xf32>
      %37 = vector.multi_reduction <add>, %36, %cst_24 [1] : vector<128x256xf32> to vector<128xf32>
      %38 = vector.shape_cast %37 : vector<128xf32> to vector<128x1xf32>
      %cst_25 = arith.constant 2.560000e+02 : f32
      %39 = vector.broadcast %cst_25 : f32 to vector<128x1xf32>
      %40 = arith.divf %38, %39 : vector<128x1xf32>
      %41 = vector.broadcast %33 : vector<128x1xf32> to vector<128x256xf32>
      %42 = arith.subf %29, %41 : vector<128x256xf32>
      %cst_26 = arith.constant 9.99999974E-6 : f32
      %43 = vector.broadcast %cst_26 : f32 to vector<128x1xf32>
      %44 = arith.addf %40, %43 : vector<128x1xf32>
      %45 = math.rsqrt %44 : vector<128x1xf32>
      %46 = vector.broadcast %45 : vector<128x1xf32> to vector<128x256xf32>
      %47 = arith.mulf %42, %46 : vector<128x256xf32>
      %c0_27 = arith.constant 0 : index
      %c0_28 = arith.constant 0 : index
      %48 = vector.load %arg3[%c0_27, %c0_28] : memref<1x256xf32, #tpu.memory_space<vmem>>, vector<1x256xf32>
      %49 = vector.broadcast %48 : vector<1x256xf32> to vector<128x256xf32>
      %50 = arith.mulf %47, %49 : vector<128x256xf32>
      %c0_29 = arith.constant 0 : index
      %c0_30 = arith.constant 0 : index
      %51 = vector.load %arg4[%c0_29, %c0_30] : memref<1x256xf32, #tpu.memory_space<vmem>>, vector<1x256xf32>
      %52 = vector.broadcast %51 : vector<1x256xf32> to vector<128x256xf32>
      %53 = arith.addf %50, %52 : vector<128x256xf32>
      %c0_31 = arith.constant 0 : index
      %c0_32 = arith.constant 0 : index
      %54 = vector.load %arg12[%c0_31, %c0_32] : memref<128x256xf32, #tpu.memory_space<vmem>>, vector<128x256xf32>
      tpu.vector_store %arg12[%c0_31, %c0_32], %53 {strides = array<i32>} : memref<128x256xf32, #tpu.memory_space<vmem>>, vector<128x256xf32>,
      %c0_33 = arith.constant 0 : index
      %c0_34 = arith.constant 0 : index
      %55 = vector.load %arg10[%c0_33, %c0_34] : memref<1x256xf32, #tpu.memory_space<vmem>>, vector<1x256xf32>
      %56 = vector.shape_cast %55 : vector<1x256xf32> to vector<1x256xf32>
      %57 = vector.broadcast %56 : vector<1x256xf32> to vector<128x256xf32>
      %c0_35 = arith.constant 0 : index
      %c0_36 = arith.constant 0 : index
      %58 = vector.load %arg13[%c0_35, %c0_36] : memref<128x256xf32, #tpu.memory_space<vmem>>, vector<128x256xf32>
      tpu.vector_store %arg13[%c0_35, %c0_36], %57 {strides = array<i32>} : memref<128x256xf32, #tpu.memory_space<vmem>>, vector<128x256xf32>,
    } else {
    }
    %c0 = arith.constant 0 : index
    %c0_1 = arith.constant 0 : index
    %3 = vector.load %arg12[%c0, %c0_1] : memref<128x256xf32, #tpu.memory_space<vmem>>, vector<128x256xf32>
    %c0_2 = arith.constant 0 : index
    %c0_3 = arith.constant 0 : index
    %4 = vector.load %arg5[%c0_2, %c0_3] : memref<256x256xf32, #tpu.memory_space<vmem>>, vector<256x256xf32>
    %cst = arith.constant dense<0.000000e+00> : vector<128x256xf32>
    %5 = tpu.matmul %3, %4, %cst {dimension_numbers = #tpu.dot_dimension_numbers<[1], [0], [0], [1], [0, 0, 1, 1], [], []>} : vector<128x256xf32>, vector<256x256xf32>, vector<128x256xf32> -> vector<128x256xf32>
    %c0_4 = arith.constant 0 : index
    %c0_5 = arith.constant 0 : index
    %6 = vector.load %arg7[%c0_4, %c0_5] : memref<1x256xf32, #tpu.memory_space<vmem>>, vector<1x256xf32>
    %7 = vector.broadcast %6 : vector<1x256xf32> to vector<128x256xf32>
    %8 = arith.addf %5, %7 : vector<128x256xf32>
    %c0_6 = arith.constant 0 : index
    %c0_7 = arith.constant 0 : index
    %9 = vector.load %arg6[%c0_6, %c0_7] : memref<256x256xf32, #tpu.memory_space<vmem>>, vector<256x256xf32>
    %cst_8 = arith.constant dense<0.000000e+00> : vector<128x256xf32>
    %10 = tpu.matmul %3, %9, %cst_8 {dimension_numbers = #tpu.dot_dimension_numbers<[1], [0], [0], [1], [0, 0, 1, 1], [], []>} : vector<128x256xf32>, vector<256x256xf32>, vector<128x256xf32> -> vector<128x256xf32>
    %c0_9 = arith.constant 0 : index
    %c0_10 = arith.constant 0 : index
    %11 = vector.load %arg8[%c0_9, %c0_10] : memref<1x256xf32, #tpu.memory_space<vmem>>, vector<1x256xf32>
    %12 = vector.broadcast %11 : vector<1x256xf32> to vector<128x256xf32>
    %13 = arith.addf %10, %12 : vector<128x256xf32>
    %14 = arith.negf %13 : vector<128x256xf32>
    %15 = math.exp %14 : vector<128x256xf32>
    %cst_11 = arith.constant 1.000000e+00 : f32
    %16 = vector.broadcast %cst_11 : f32 to vector<128x256xf32>
    %17 = arith.addf %16, %15 : vector<128x256xf32>
    %18 = arith.divf %16, %17 : vector<128x256xf32>
    %19 = arith.mulf %13, %18 : vector<128x256xf32>
    %20 = arith.mulf %8, %19 : vector<128x256xf32>
    %c0_12 = arith.constant 0 : index
    %c0_13 = arith.constant 0 : index
    %21 = vector.load %arg13[%c0_12, %c0_13] : memref<128x256xf32, #tpu.memory_space<vmem>>, vector<128x256xf32>
    %c0_14 = arith.constant 0 : index
    %c0_15 = arith.constant 0 : index
    %22 = vector.load %arg9[%c0_14, %c0_15] : memref<256x256xf32, #tpu.memory_space<vmem>>, vector<256x256xf32>
    %cst_16 = arith.constant dense<0.000000e+00> : vector<128x256xf32>
    %23 = tpu.matmul %20, %22, %cst_16 {dimension_numbers = #tpu.dot_dimension_numbers<[1], [0], [0], [1], [0, 0, 1, 1], [], []>} : vector<128x256xf32>, vector<256x256xf32>, vector<128x256xf32> -> vector<128x256xf32>
    %24 = arith.addf %21, %23 : vector<128x256xf32>
    %c0_17 = arith.constant 0 : index
    %c0_18 = arith.constant 0 : index
    %25 = vector.load %arg13[%c0_17, %c0_18] : memref<128x256xf32, #tpu.memory_space<vmem>>, vector<128x256xf32>
    tpu.vector_store %arg13[%c0_17, %c0_18], %24 {strides = array<i32>} : memref<128x256xf32, #tpu.memory_space<vmem>>, vector<128x256xf32>,
    %c1_i32 = arith.constant 1 : i32
    %26 = arith.cmpi eq, %arg1, %c1_i32 : i32
    %27 = arith.extui %26 : i1 to i32
    %c0_i32_19 = arith.constant 0 : i32
    %28 = arith.cmpi ne, %27, %c0_i32_19 : i32
    scf.if %28 {
      %c0_20 = arith.constant 0 : index
      %c0_21 = arith.constant 0 : index
      %29 = vector.load %arg13[%c0_20, %c0_21] : memref<128x256xf32, #tpu.memory_space<vmem>>, vector<128x256xf32>
      %c0_22 = arith.constant 0 : index
      %c0_23 = arith.constant 0 : index
      %30 = vector.load %arg11[%c0_22, %c0_23] : memref<128x256xf32, #tpu.memory_space<vmem>>, vector<128x256xf32>
      tpu.vector_store %arg11[%c0_22, %c0_23], %29 {strides = array<i32>} : memref<128x256xf32, #tpu.memory_space<vmem>>, vector<128x256xf32>,
    } else {
    }
    return
  }
  func.func @transform_0(%arg0: i32, %arg1: i32) -> (i32, i32) {
    %c0_i32 = arith.constant 0 : i32
    %c0_i32_0 = arith.constant 0 : i32
    return %arg0, %c0_i32 : i32, i32
  }
  func.func @transform_1(%arg0: i32, %arg1: i32) -> (i32, i32) {
    %c0_i32 = arith.constant 0 : i32
    %c0_i32_0 = arith.constant 0 : i32
    %c0_i32_1 = arith.constant 0 : i32
    return %c0_i32, %c0_i32_0 : i32, i32
  }
  func.func @transform_2(%arg0: i32, %arg1: i32) -> (i32, i32) {
    %c0_i32 = arith.constant 0 : i32
    %c0_i32_0 = arith.constant 0 : i32
    %c0_i32_1 = arith.constant 0 : i32
    return %c0_i32, %c0_i32_0 : i32, i32
  }
  func.func @transform_3(%arg0: i32, %arg1: i32) -> (i32, i32) {
    %c0_i32 = arith.constant 0 : i32
    %c0_i32_0 = arith.constant 0 : i32
    return %c0_i32, %arg1 : i32, i32
  }
  func.func @transform_4(%arg0: i32, %arg1: i32) -> (i32, i32) {
    %c0_i32 = arith.constant 0 : i32
    %c0_i32_0 = arith.constant 0 : i32
    return %c0_i32, %arg1 : i32, i32
  }
  func.func @transform_5(%arg0: i32, %arg1: i32) -> (i32, i32) {
    %c0_i32 = arith.constant 0 : i32
    %c0_i32_0 = arith.constant 0 : i32
    return %c0_i32, %arg1 : i32, i32
  }
  func.func @transform_6(%arg0: i32, %arg1: i32) -> (i32, i32) {
    %c0_i32 = arith.constant 0 : i32
    %c0_i32_0 = arith.constant 0 : i32
    return %c0_i32, %arg1 : i32, i32
  }
  func.func @transform_7(%arg0: i32, %arg1: i32) -> (i32, i32) {
    %c0_i32 = arith.constant 0 : i32
    %c0_i32_0 = arith.constant 0 : i32
    return %arg1, %c0_i32 : i32, i32
  }
  func.func @transform_8(%arg0: i32, %arg1: i32) -> (i32, i32) {
    %c0_i32 = arith.constant 0 : i32
    %c0_i32_0 = arith.constant 0 : i32
    %c0_i32_1 = arith.constant 0 : i32
    return %c0_i32, %c0_i32_0 : i32, i32
  }
  func.func @transform_9(%arg0: i32, %arg1: i32) -> (i32, i32) {
    %c0_i32 = arith.constant 0 : i32
    %c0_i32_0 = arith.constant 0 : i32
    return %arg0, %c0_i32 : i32, i32
  }
}

</mosaic_0001>

<llo_original>
// kernel: tpu_custom_call.1
$region0: #{tpu_custom_call.1}
  #allocation0 [shape = 'u32[]', space=smem, size = 0x4, offset = 0x4, fixed_abs, tag = 'smem constant byte address 0x4 - core index']
  #allocation1 [shape = 'u32[72,128]{1,0:T(1,128)}', space=vmem, size = 0x9000, scoped, tag = 'internal scratch']
  #allocation2 [shape = 'f32[128,256]{1,0:T(8,128)}', space=vmem, size = 0x20000, scoped, tag = 'scratch operand']
  #allocation3 [shape = 'f32[128,256]{1,0:T(8,128)}', space=vmem, size = 0x20000, scoped, tag = 'scratch operand']
  %s0 = inlined_call_operand.hbm [shape: f32[256,256], index: 0, kind: input, shape index: {}]
  %s1 = inlined_call_operand.hbm [shape: f32[1,256], index: 1, kind: input, shape index: {}]
  %s2 = inlined_call_operand.hbm [shape: f32[1,256], index: 2, kind: input, shape index: {}]
  %s3 = inlined_call_operand.hbm [shape: f32[256,512], index: 3, kind: input, shape index: {}]
  %s4 = inlined_call_operand.hbm [shape: f32[256,512], index: 4, kind: input, shape index: {}]
  %s5 = inlined_call_operand.vmem [shape: f32[1,512], index: 5, kind: input, shape index: {}]
  %s6 = inlined_call_operand.hbm [shape: f32[1,512], index: 6, kind: input, shape index: {}]
  %s7 = inlined_call_operand.hbm [shape: f32[512,256], index: 7, kind: input, shape index: {}]
  %s8 = inlined_call_operand.vmem [shape: f32[1,256], index: 8, kind: input, shape index: {}]
  %s9 = inlined_call_operand.hbm [shape: f32[256,256], index: 9, kind: output, shape index: {}]
  %s10 = sld [smem:[#allocation0]]
  $region105: #{tpu_custom_call.1} parent=0
    _
  %s12 = ssub.s32 1, %s10
  %s13 = scalar_select 0, %s12, %s10
  $region1: #{tpu_custom_call.1} parent=0
    #allocation4 [shape = 'u8[262144]{0}', space=vmem, size = 0x40000, scoped, tag = 'input window, operand 0']
    #allocation5 [shape = 's32[2]{0}', space=sflag, size = 0x8, scoped, tag = 'scoped memory for tpu_custom_call.1']
    #allocation6 [shape = 's32[2]{0}', space=sflag, size = 0x8, scoped, tag = 'scoped memory for tpu_custom_call.1']
    #allocation7 [shape = 'u8[1024]{0}', space=vmem, size = 0x400, scoped, tag = 'input window, operand 1, single buffered']
    #allocation8 [shape = 's32[1]{0}', space=sflag, size = 0x4, scoped, tag = 'scoped memory for tpu_custom_call.1']
    #allocation9 [shape = 'u8[1024]{0}', space=vmem, size = 0x400, scoped, tag = 'input window, operand 2, single buffered']
    #allocation10 [shape = 'u8[524288]{0}', space=vmem, size = 0x80000, scoped, tag = 'input window, operand 3']
    #allocation11 [shape = 's32[2]{0}', space=sflag, size = 0x8, scoped, tag = 'scoped memory for tpu_custom_call.1']
    #allocation12 [shape = 'u8[524288]{0}', space=vmem, size = 0x80000, scoped, tag = 'input window, operand 4']
    #allocation13 [shape = 'u8[2048]{0}', space=vmem, size = 0x800, scoped, tag = 'input window, operand 6']
    #allocation14 [shape = 's32[2]{0}', space=sflag, size = 0x8, scoped, tag = 'scoped memory for tpu_custom_call.1']
    #allocation15 [shape = 'u8[524288]{0}', space=vmem, size = 0x80000, scoped, tag = 'input window, operand 7']
    #allocation16 [shape = 'u8[262144]{0}', space=vmem, size = 0x40000, scoped, tag = 'output window, operand 0']
    %14 = vsyncpa [#allocation5], 0
    %s15 = scalar_lea.sflag [#allocation5], 1
    %16 = vsyncpa %s15, 0
    %17 = vsyncpa [#allocation8], 0
    %18 = vsyncpa [#allocation11], 0
    %s19 = scalar_lea.sflag [#allocation11], 1
    %20 = vsyncpa %s19, 0
    %21 = vsyncpa [#allocation14], 0
    %s22 = scalar_lea.sflag [#allocation14], 1
    %23 = vsyncpa %s22, 0
    %24 = vsyncpa [#allocation6], 0
    %s25 = scalar_lea.sflag [#allocation6], 1
    %26 = vsyncpa %s25, 0
    loop: start=0, step=1, limit=6
    $region2: #{tpu_custom_call.1} parent=1 // loop_pre_header
      _
    $region3: #{tpu_custom_call.1} parent=1 // loop_header
      %s28 = sphi 0, %s32
      %p29 = scmp.ge.s32.totalorder %s28, 6
      %s35 = sphi 0, %s47
      %s36 = sphi 0, %s43
      %s37 = sphi 0, %s35
      %s38 = sphi 0, %s36
      %s39 = sphi 0, %s37
      %s40 = sphi 0, %s38
      %s50 = sphi 0, %s52
      %s53 = sphi 0, %s50
      %s54 = sphi 0, %s53
      %s70 = sphi 0, %s54
      %s74 = sphi 0, %s74
      %s76 = sphi 0, %s74
      %s77 = sphi 0, %s76
      %s91 = sphi 0, %s77
      %s95 = sphi 0, %s95
      %s97 = sphi 0, %s95
      %s98 = sphi 0, %s97
      %s112 = sphi 0, %s98
      %s118 = sphi 0, %s120
      %s121 = sphi 0, %s118
      %s122 = sphi 0, %s121
      %s138 = sphi 0, %s122
      %s144 = sphi 0, %s146
      %s147 = sphi 0, %s144
      %s148 = sphi 0, %s147
      %s164 = sphi 0, %s148
      %s170 = sphi 0, %s172
      %s173 = sphi 0, %s170
      %s174 = sphi 0, %s173
      %s190 = sphi 0, %s174
      %s196 = sphi 0, %s198
      %s199 = sphi 0, %s196
      %s200 = sphi 0, %s199
      %s216 = sphi 0, %s200
      %s222 = sphi 0, %s224
      %s225 = sphi 0, %s222
      %s226 = sphi 0, %s225
      %s242 = sphi 0, %s226
      %s246 = sphi 0, %s246
      %s248 = sphi 0, %s246
      %s249 = sphi 0, %s248
      %s263 = sphi 0, %s249
      %s269 = sphi 0, %s271
      %s272 = sphi 0, %s269
      %s273 = sphi 0, %s272
      %s289 = sphi 0, %s273
    $region4: #{tpu_custom_call.1} parent=1 // loop_header_branch
      %31 = sbr.rel (%p29) target = $region8
    $region5: #{tpu_custom_call.1} parent=1 // loop_body
      %s33 = ssub.s32 %s28, 1
      %s34 = ssub.s32 %s28, 2
      %s41 = sadd.s32 1, %s36
      %p42 = scmp.ge.s32.totalorder %s41, 2
      %s43 = scalar_select %p42, 0, %s41
      %s44 = sadd.s32 1, %s35
      %s45 = scalar_select %p42, %s44, %s35
      %p46 = scmp.ge.s32.totalorder %s45, 2
      %s47 = scalar_select %p46, 0, %s45
      %s48 = ssub.s32 %s35, %s47
      %p49 = scmp.eq.s32.totalorder %s48, 0
      %s51 = sadd.s32 %s50, 1
      %s52 = scalar_select %p49, %s50, %s51
      %p55 = pneg %p49
      %p56 = scmp.eq.s32.totalorder %s28, 3
      %p57 = por %p55, %p56
      %p58 = scmp.ne.s32.totalorder %s50, %s53
      %p59 = scmp.eq.s32.totalorder %s28, 0
      %p60 = por %p58, %p59
      %p61 = scmp.ne.s32.totalorder %s50, %s53
      %p62 = scmp.eq.s32.totalorder %s33, 3
      %p63 = por %p61, %p62
      %p64 = scmp.ne.s32.totalorder %s53, %s54
      %p65 = scmp.eq.s32.totalorder %s33, 0
      %p66 = por %p64, %p65
      %p67 = scmp.ne.s32.totalorder %s53, %s54
      %p68 = scmp.eq.s32.totalorder %s34, 3
      %p69 = por %p67, %p68
      %p71 = scmp.ne.s32.totalorder %s54, %s70
      %p72 = scmp.eq.s32.totalorder %s34, 0
      %p73 = por %p71, %p72
      %s75 = sadd.s32 %s74, 1
      %p78 = scmp.eq.s32.totalorder %s28, 3
      %p79 = scmp.ne.s32.totalorder %s74, %s76
      %p80 = scmp.eq.s32.totalorder %s28, 0
      %p81 = por %p79, %p80
      %p82 = scmp.ne.s32.totalorder %s74, %s76
      %p83 = scmp.eq.s32.totalorder %s33, 3
      %p84 = por %p82, %p83
      %p85 = scmp.ne.s32.totalorder %s76, %s77
      %p86 = scmp.eq.s32.totalorder %s33, 0
      %p87 = por %p85, %p86
      %p88 = scmp.ne.s32.totalorder %s76, %s77
      %p89 = scmp.eq.s32.totalorder %s34, 3
      %p90 = por %p88, %p89
      %p92 = scmp.ne.s32.totalorder %s77, %s91
      %p93 = scmp.eq.s32.totalorder %s34, 0
      %p94 = por %p92, %p93
      %s96 = sadd.s32 %s95, 1
      %p99 = scmp.eq.s32.totalorder %s28, 3
      %p100 = scmp.ne.s32.totalorder %s95, %s97
      %p101 = scmp.eq.s32.totalorder %s28, 0
      %p102 = por %p100, %p101
      %p103 = scmp.ne.s32.totalorder %s95, %s97
      %p104 = scmp.eq.s32.totalorder %s33, 3
      %p105 = por %p103, %p104
      %p106 = scmp.ne.s32.totalorder %s97, %s98
      %p107 = scmp.eq.s32.totalorder %s33, 0
      %p108 = por %p106, %p107
      %p109 = scmp.ne.s32.totalorder %s97, %s98
      %p110 = scmp.eq.s32.totalorder %s34, 3
      %p111 = por %p109, %p110
      %p113 = scmp.ne.s32.totalorder %s98, %s112
      %p114 = scmp.eq.s32.totalorder %s34, 0
      %p115 = por %p113, %p114
      %s116 = ssub.s32 %s36, %s43
      %p117 = scmp.eq.s32.totalorder %s116, 0
      %s119 = sadd.s32 %s118, 1
      %s120 = scalar_select %p117, %s118, %s119
      %p123 = pneg %p117
      %p124 = scmp.eq.s32.totalorder %s28, 3
      %p125 = por %p123, %p124
      %p126 = scmp.ne.s32.totalorder %s118, %s121
      %p127 = scmp.eq.s32.totalorder %s28, 0
      %p128 = por %p126, %p127
      %p129 = scmp.ne.s32.totalorder %s118, %s121
      %p130 = scmp.eq.s32.totalorder %s33, 3
      %p131 = por %p129, %p130
      %p132 = scmp.ne.s32.totalorder %s121, %s122
      %p133 = scmp.eq.s32.totalorder %s33, 0
      %p134 = por %p132, %p133
      %p135 = scmp.ne.s32.totalorder %s121, %s122
      %p136 = scmp.eq.s32.totalorder %s34, 3
      %p137 = por %p135, %p136
      %p139 = scmp.ne.s32.totalorder %s122, %s138
      %p140 = scmp.eq.s32.totalorder %s34, 0
      %p141 = por %p139, %p140
      %s142 = ssub.s32 %s36, %s43
      %p143 = scmp.eq.s32.totalorder %s142, 0
      %s145 = sadd.s32 %s144, 1
      %s146 = scalar_select %p143, %s144, %s145
      %p149 = pneg %p143
      %p150 = scmp.eq.s32.totalorder %s28, 3
      %p151 = por %p149, %p150
      %p152 = scmp.ne.s32.totalorder %s144, %s147
      %p153 = scmp.eq.s32.totalorder %s28, 0
      %p154 = por %p152, %p153
      %p155 = scmp.ne.s32.totalorder %s144, %s147
      %p156 = scmp.eq.s32.totalorder %s33, 3
      %p157 = por %p155, %p156
      %p158 = scmp.ne.s32.totalorder %s147, %s148
      %p159 = scmp.eq.s32.totalorder %s33, 0
      %p160 = por %p158, %p159
      %p161 = scmp.ne.s32.totalorder %s147, %s148
      %p162 = scmp.eq.s32.totalorder %s34, 3
      %p163 = por %p161, %p162
      %p165 = scmp.ne.s32.totalorder %s148, %s164
      %p166 = scmp.eq.s32.totalorder %s34, 0
      %p167 = por %p165, %p166
      %s168 = ssub.s32 %s36, %s43
      %p169 = scmp.eq.s32.totalorder %s168, 0
      %s171 = sadd.s32 %s170, 1
      %s172 = scalar_select %p169, %s170, %s171
      %p175 = pneg %p169
      %p176 = scmp.eq.s32.totalorder %s28, 3
      %p177 = por %p175, %p176
      %p178 = scmp.ne.s32.totalorder %s170, %s173
      %p179 = scmp.eq.s32.totalorder %s28, 0
      %p180 = por %p178, %p179
      %p181 = scmp.ne.s32.totalorder %s170, %s173
      %p182 = scmp.eq.s32.totalorder %s33, 3
      %p183 = por %p181, %p182
      %p184 = scmp.ne.s32.totalorder %s173, %s174
      %p185 = scmp.eq.s32.totalorder %s33, 0
      %p186 = por %p184, %p185
      %p187 = scmp.ne.s32.totalorder %s173, %s174
      %p188 = scmp.eq.s32.totalorder %s34, 3
      %p189 = por %p187, %p188
      %p191 = scmp.ne.s32.totalorder %s174, %s190
      %p192 = scmp.eq.s32.totalorder %s34, 0
      %p193 = por %p191, %p192
      %s194 = ssub.s32 %s36, %s43
      %p195 = scmp.eq.s32.totalorder %s194, 0
      %s197 = sadd.s32 %s196, 1
      %s198 = scalar_select %p195, %s196, %s197
      %p201 = pneg %p195
      %p202 = scmp.eq.s32.totalorder %s28, 3
      %p203 = por %p201, %p202
      %p204 = scmp.ne.s32.totalorder %s196, %s199
      %p205 = scmp.eq.s32.totalorder %s28, 0
      %p206 = por %p204, %p205
      %p207 = scmp.ne.s32.totalorder %s196, %s199
      %p208 = scmp.eq.s32.totalorder %s33, 3
      %p209 = por %p207, %p208
      %p210 = scmp.ne.s32.totalorder %s199, %s200
      %p211 = scmp.eq.s32.totalorder %s33, 0
      %p212 = por %p210, %p211
      %p213 = scmp.ne.s32.totalorder %s199, %s200
      %p214 = scmp.eq.s32.totalorder %s34, 3
      %p215 = por %p213, %p214
      %p217 = scmp.ne.s32.totalorder %s200, %s216
      %p218 = scmp.eq.s32.totalorder %s34, 0
      %p219 = por %p217, %p218
      %s220 = ssub.s32 %s36, %s43
      %p221 = scmp.eq.s32.totalorder %s220, 0
      %s223 = sadd.s32 %s222, 1
      %s224 = scalar_select %p221, %s222, %s223
      %p227 = pneg %p221
      %p228 = scmp.eq.s32.totalorder %s28, 3
      %p229 = por %p227, %p228
      %p230 = scmp.ne.s32.totalorder %s222, %s225
      %p231 = scmp.eq.s32.totalorder %s28, 0
      %p232 = por %p230, %p231
      %p233 = scmp.ne.s32.totalorder %s222, %s225
      %p234 = scmp.eq.s32.totalorder %s33, 3
      %p235 = por %p233, %p234
      %p236 = scmp.ne.s32.totalorder %s225, %s226
      %p237 = scmp.eq.s32.totalorder %s33, 0
      %p238 = por %p236, %p237
      %p239 = scmp.ne.s32.totalorder %s225, %s226
      %p240 = scmp.eq.s32.totalorder %s34, 3
      %p241 = por %p239, %p240
      %p243 = scmp.ne.s32.totalorder %s226, %s242
      %p244 = scmp.eq.s32.totalorder %s34, 0
      %p245 = por %p243, %p244
      %s247 = sadd.s32 %s246, 1
      %p250 = scmp.eq.s32.totalorder %s28, 3
      %p251 = scmp.ne.s32.totalorder %s246, %s248
      %p252 = scmp.eq.s32.totalorder %s28, 0
      %p253 = por %p251, %p252
      %p254 = scmp.ne.s32.totalorder %s246, %s248
      %p255 = scmp.eq.s32.totalorder %s33, 3
      %p256 = por %p254, %p255
      %p257 = scmp.ne.s32.totalorder %s248, %s249
      %p258 = scmp.eq.s32.totalorder %s33, 0
      %p259 = por %p257, %p258
      %p260 = scmp.ne.s32.totalorder %s248, %s249
      %p261 = scmp.eq.s32.totalorder %s34, 3
      %p262 = por %p260, %p261
      %p264 = scmp.ne.s32.totalorder %s249, %s263
      %p265 = scmp.eq.s32.totalorder %s34, 0
      %p266 = por %p264, %p265
      %s267 = ssub.s32 %s35, %s47
      %p268 = scmp.eq.s32.totalorder %s267, 0
      %s270 = sadd.s32 %s269, 1
      %s271 = scalar_select %p268, %s269, %s270
      %p274 = pneg %p268
      %p275 = scmp.eq.s32.totalorder %s28, 3
      %p276 = por %p274, %p275
      %p277 = scmp.ne.s32.totalorder %s269, %s272
      %p278 = scmp.eq.s32.totalorder %s28, 0
      %p279 = por %p277, %p278
      %p280 = scmp.ne.s32.totalorder %s269, %s272
      %p281 = scmp.eq.s32.totalorder %s33, 3
      %p282 = por %p280, %p281
      %p283 = scmp.ne.s32.totalorder %s272, %s273
      %p284 = scmp.eq.s32.totalorder %s33, 0
      %p285 = por %p283, %p284
      %p286 = scmp.ne.s32.totalorder %s272, %s273
      %p287 = scmp.eq.s32.totalorder %s34, 3
      %p288 = por %p286, %p287
      %p290 = scmp.ne.s32.totalorder %s273, %s289
      %p291 = scmp.eq.s32.totalorder %s34, 0
      %p292 = por %p290, %p291
      %p293 = scmp.le.s32.totalorder 1, %s28
      %p294 = scmp.lt.s32.totalorder %s28, 5
      %p295 = pnand %p293, %p294
      %p296 = pneg %p295
      // Predicated region
      $region9: #{tpu_custom_call.1} parent=5 // pred_check
        _
      $region10: #{tpu_custom_call.1} parent=5 // pred_check_branch
        %298 = sbr.rel (%p295) target = $region12
      $region11: #{tpu_custom_call.1} parent=5 // pred_region
        %s299 = ssub.s32 %s28, 1
        // Predicated region
        $region13: #{tpu_custom_call.1} parent=11 // pred_check
          %p300 = pneg %p87
        $region14: #{tpu_custom_call.1} parent=11 // pred_check_branch
          %302 = sbr.rel (%p300) target = $region16
        $region15: #{tpu_custom_call.1} parent=11 // pred_region
          %304 = vsyncadd [#allocation8], 0
          %s306 = sshll.u32 %s1, 4
          %s307 = int_to_ptr.hbm [resolvable:$true] %s306
          %s308 = sshll.u32 [#allocation7], 4
          %s309 = int_to_ptr.vmem [resolvable:$true] %s308
          %311 = dma.hbm_to_vmem [thread:$0]  %s307, 32, %s309, [#allocation8]
        $region16: #{tpu_custom_call.1} parent=11 // pred_fallthru
          _
        // Predicated region
        $region17: #{tpu_custom_call.1} parent=11 // pred_check
          %p312 = pneg %p108
        $region18: #{tpu_custom_call.1} parent=11 // pred_check_branch
          %314 = sbr.rel (%p312) target = $region20
        $region19: #{tpu_custom_call.1} parent=11 // pred_region
          %316 = vsyncadd [#allocation8], 0
          %s318 = sshll.u32 %s2, 4
          %s319 = int_to_ptr.hbm [resolvable:$true] %s318
          %s320 = sshll.u32 [#allocation9], 4
          %s321 = int_to_ptr.vmem [resolvable:$true] %s320
          %323 = dma.hbm_to_vmem [thread:$0]  %s319, 32, %s321, [#allocation8]
        $region20: #{tpu_custom_call.1} parent=11 // pred_fallthru
          _
        // Predicated region
        $region21: #{tpu_custom_call.1} parent=11 // pred_check
          %p324 = pneg %p259
        $region22: #{tpu_custom_call.1} parent=11 // pred_check_branch
          %326 = sbr.rel (%p324) target = $region24
        $region23: #{tpu_custom_call.1} parent=11 // pred_region
          _
        $region24: #{tpu_custom_call.1} parent=11 // pred_fallthru
          _
      $region12: #{tpu_custom_call.1} parent=5 // pred_fallthru
        _
      %p327 = scmp.lt.s32.totalorder %s28, 4
      // Predicated region
      $region25: #{tpu_custom_call.1} parent=5 // pred_check
        %p328 = pneg %p327
      $region26: #{tpu_custom_call.1} parent=5 // pred_check_branch
        %330 = sbr.rel (%p328) target = $region28
      $region27: #{tpu_custom_call.1} parent=5 // pred_region
        // Predicated region
        $region29: #{tpu_custom_call.1} parent=27 // pred_check
          %p331 = pneg %p60
        $region30: #{tpu_custom_call.1} parent=27 // pred_check_branch
          %333 = sbr.rel (%p331) target = $region32
        $region31: #{tpu_custom_call.1} parent=27 // pred_region
          %s334 = sand.u32 %s50, 1
          %s335 = scalar_lea.sflag [#allocation5], %s334
          %s336 = sand.u32 %s50, 1
          %s337 = smul.addr %s336, 256
          %s338 = scalar_lea.vmem [#allocation4], %s337
          %s339 = smul.u32 16, %s35
          %341 = vsyncadd %s335, 0
          %s342 = smul.addr %s339, 2
          %s343 = smul.addr %s342, 8
          %s344 = scalar_lea.hbm %s0, %s343
          %s345 = sshll.u32 %s344, 4
          %s346 = int_to_ptr.hbm [resolvable:$true] %s345
          %s347 = sshll.u32 %s338, 4
          %s348 = int_to_ptr.vmem [resolvable:$true] %s347
          %353 = dma.hbm_to_vmem [thread:$0]  %s346, 4096, %s348, %s335, 256, 256, 16
        $region32: #{tpu_custom_call.1} parent=27 // pred_fallthru
          _
        // Predicated region
        $region33: #{tpu_custom_call.1} parent=27 // pred_check
          %p354 = pneg %p128
        $region34: #{tpu_custom_call.1} parent=27 // pred_check_branch
          %356 = sbr.rel (%p354) target = $region36
        $region35: #{tpu_custom_call.1} parent=27 // pred_region
          %s357 = sand.u32 %s28, 1
          %s358 = scalar_lea.sflag [#allocation11], %s357
          %s359 = sand.u32 %s118, 1
          %s360 = smul.addr %s359, 512
          %s361 = scalar_lea.vmem [#allocation10], %s360
          %s362 = smul.u32 2, %s36
          %364 = vsyncadd %s358, 0
          %s365 = smul.addr %s362, 8
          %s366 = scalar_lea.hbm %s3, %s365
          %s367 = sshll.u32 %s366, 4
          %s368 = int_to_ptr.hbm [resolvable:$true] %s367
          %s369 = sshll.u32 %s361, 4
          %s370 = int_to_ptr.vmem [resolvable:$true] %s369
          %375 = dma.hbm_to_vmem [thread:$0]  %s368, 8192, %s370, %s358, 512, 256, 16
        $region36: #{tpu_custom_call.1} parent=27 // pred_fallthru
          _
        // Predicated region
        $region37: #{tpu_custom_call.1} parent=27 // pred_check
          %p376 = pneg %p154
        $region38: #{tpu_custom_call.1} parent=27 // pred_check_branch
          %378 = sbr.rel (%p376) target = $region40
        $region39: #{tpu_custom_call.1} parent=27 // pred_region
          %s379 = sand.u32 %s28, 1
          %s380 = scalar_lea.sflag [#allocation11], %s379
          %s381 = sand.u32 %s144, 1
          %s382 = smul.addr %s381, 512
          %s383 = scalar_lea.vmem [#allocation12], %s382
          %s384 = smul.u32 2, %s36
          %386 = vsyncadd %s380, 0
          %s387 = smul.addr %s384, 8
          %s388 = scalar_lea.hbm %s4, %s387
          %s389 = sshll.u32 %s388, 4
          %s390 = int_to_ptr.hbm [resolvable:$true] %s389
          %s391 = sshll.u32 %s383, 4
          %s392 = int_to_ptr.vmem [resolvable:$true] %s391
          %397 = dma.hbm_to_vmem [thread:$0]  %s390, 8192, %s392, %s380, 512, 256, 16
        $region40: #{tpu_custom_call.1} parent=27 // pred_fallthru
          _
        // Predicated region
        $region41: #{tpu_custom_call.1} parent=27 // pred_check
          %p398 = pneg %p180
        $region42: #{tpu_custom_call.1} parent=27 // pred_check_branch
          %400 = sbr.rel (%p398) target = $region44
        $region43: #{tpu_custom_call.1} parent=27 // pred_region
          %s401 = smul.u32 2, %s36
          %p402 = scmp.lt.s32.totalorder %s401, 3
          %s403 = scalar_select %p402, %s401, 3
          %s404 = scalar_lea.vmem %s5, %s403
          %s405 = smul.u32 2, %s36
        $region44: #{tpu_custom_call.1} parent=27 // pred_fallthru
          _
        // Predicated region
        $region45: #{tpu_custom_call.1} parent=27 // pred_check
          %p406 = pneg %p206
        $region46: #{tpu_custom_call.1} parent=27 // pred_check_branch
          %408 = sbr.rel (%p406) target = $region48
        $region47: #{tpu_custom_call.1} parent=27 // pred_region
          %s409 = sand.u32 %s28, 1
          %s410 = scalar_lea.sflag [#allocation14], %s409
          %s411 = sand.u32 %s196, 1
          %s412 = smul.addr %s411, 2
          %s413 = scalar_lea.vmem [#allocation13], %s412
          %s414 = smul.u32 2, %s36
          %416 = vsyncadd %s410, 0
          %s417 = scalar_lea.hbm %s6, %s414
          %s419 = sshll.u32 %s417, 4
          %s420 = int_to_ptr.hbm [resolvable:$true] %s419
          %s421 = sshll.u32 %s413, 4
          %s422 = int_to_ptr.vmem [resolvable:$true] %s421
          %424 = dma.hbm_to_vmem [thread:$0]  %s420, 32, %s422, %s410
        $region48: #{tpu_custom_call.1} parent=27 // pred_fallthru
          _
        // Predicated region
        $region49: #{tpu_custom_call.1} parent=27 // pred_check
          %p425 = pneg %p232
        $region50: #{tpu_custom_call.1} parent=27 // pred_check_branch
          %427 = sbr.rel (%p425) target = $region52
        $region51: #{tpu_custom_call.1} parent=27 // pred_region
          %s428 = sand.u32 %s28, 1
          %s429 = scalar_lea.sflag [#allocation14], %s428
          %s430 = sand.u32 %s222, 1
          %s431 = smul.addr %s430, 512
          %s432 = scalar_lea.vmem [#allocation15], %s431
          %s433 = smul.u32 32, %s36
          %435 = vsyncadd %s429, 0
          %s436 = smul.addr %s433, 2
          %s437 = smul.addr %s436, 8
          %s438 = scalar_lea.hbm %s7, %s437
          %s439 = sshll.u32 %s438, 4
          %s440 = int_to_ptr.hbm [resolvable:$true] %s439
          %s441 = sshll.u32 %s432, 4
          %s442 = int_to_ptr.vmem [resolvable:$true] %s441
          %447 = dma.hbm_to_vmem [thread:$0]  %s440, 8192, %s442, %s429, 256, 256, 16
        $region52: #{tpu_custom_call.1} parent=27 // pred_fallthru
          _
      $region28: #{tpu_custom_call.1} parent=5 // pred_fallthru
        _
      %p448 = scmp.le.s32.totalorder 1, %s28
      %p449 = scmp.lt.s32.totalorder %s28, 5
      %p450 = pnand %p448, %p449
      %p451 = pneg %p450
      // Predicated region
      $region53: #{tpu_custom_call.1} parent=5 // pred_check
        _
      $region54: #{tpu_custom_call.1} parent=5 // pred_check_branch
        %453 = sbr.rel (%p450) target = $region56
      $region55: #{tpu_custom_call.1} parent=5 // pred_region
        %s454 = ssub.s32 %s28, 1
        %s455 = sand.u32 %s53, 1
        %s456 = scalar_lea.sflag [#allocation5], %s455
        %s457 = sand.u32 %s53, 1
        %s458 = smul.addr %s457, 256
        %s459 = scalar_lea.vmem [#allocation4], %s458
        // Predicated region
        $region57: #{tpu_custom_call.1} parent=55 // pred_check
          %p460 = pneg %p66
        $region58: #{tpu_custom_call.1} parent=55 // pred_check_branch
          %462 = sbr.rel (%p460) target = $region60
        $region59: #{tpu_custom_call.1} parent=55 // pred_region
          %464 = dma.done %s456, 4096
        $region60: #{tpu_custom_call.1} parent=55 // pred_fallthru
          _
        // Predicated region
        $region61: #{tpu_custom_call.1} parent=55 // pred_check
          %p465 = pneg %p87
        $region62: #{tpu_custom_call.1} parent=55 // pred_check_branch
          %467 = sbr.rel (%p465) target = $region64
        $region63: #{tpu_custom_call.1} parent=55 // pred_region
          %469 = dma.done [#allocation8], 32
        $region64: #{tpu_custom_call.1} parent=55 // pred_fallthru
          _
        // Predicated region
        $region65: #{tpu_custom_call.1} parent=55 // pred_check
          %p470 = pneg %p108
        $region66: #{tpu_custom_call.1} parent=55 // pred_check_branch
          %472 = sbr.rel (%p470) target = $region68
        $region67: #{tpu_custom_call.1} parent=55 // pred_region
          %474 = dma.done [#allocation8], 32
        $region68: #{tpu_custom_call.1} parent=55 // pred_fallthru
          _
        %s475 = sand.u32 %s33, 1
        %s476 = scalar_lea.sflag [#allocation11], %s475
        %s477 = sand.u32 %s121, 1
        %s478 = smul.addr %s477, 512
        %s479 = scalar_lea.vmem [#allocation10], %s478
        // Predicated region
        $region69: #{tpu_custom_call.1} parent=55 // pred_check
          %p480 = pneg %p134
        $region70: #{tpu_custom_call.1} parent=55 // pred_check_branch
          %482 = sbr.rel (%p480) target = $region72
        $region71: #{tpu_custom_call.1} parent=55 // pred_region
          %484 = dma.done %s476, 8192
        $region72: #{tpu_custom_call.1} parent=55 // pred_fallthru
          _
        %s485 = sand.u32 %s33, 1
        %s486 = scalar_lea.sflag [#allocation11], %s485
        %s487 = sand.u32 %s147, 1
        %s488 = smul.addr %s487, 512
        %s489 = scalar_lea.vmem [#allocation12], %s488
        // Predicated region
        $region73: #{tpu_custom_call.1} parent=55 // pred_check
          %p490 = pneg %p160
        $region74: #{tpu_custom_call.1} parent=55 // pred_check_branch
          %492 = sbr.rel (%p490) target = $region76
        $region75: #{tpu_custom_call.1} parent=55 // pred_region
          %494 = dma.done %s486, 8192
        $region76: #{tpu_custom_call.1} parent=55 // pred_fallthru
          _
        %s495 = sand.u32 %s33, 1
        %s496 = scalar_lea.sflag [#allocation14], %s495
        %s497 = sand.u32 %s199, 1
        %s498 = smul.addr %s497, 2
        %s499 = scalar_lea.vmem [#allocation13], %s498
        // Predicated region
        $region77: #{tpu_custom_call.1} parent=55 // pred_check
          %p500 = pneg %p212
        $region78: #{tpu_custom_call.1} parent=55 // pred_check_branch
          %502 = sbr.rel (%p500) target = $region80
        $region79: #{tpu_custom_call.1} parent=55 // pred_region
          %504 = dma.done %s496, 32
        $region80: #{tpu_custom_call.1} parent=55 // pred_fallthru
          _
        %s505 = sand.u32 %s33, 1
        %s506 = scalar_lea.sflag [#allocation14], %s505
        %s507 = sand.u32 %s225, 1
        %s508 = smul.addr %s507, 512
        %s509 = scalar_lea.vmem [#allocation15], %s508
        // Predicated region
        $region81: #{tpu_custom_call.1} parent=55 // pred_check
          %p510 = pneg %p238
        $region82: #{tpu_custom_call.1} parent=55 // pred_check_branch
          %512 = sbr.rel (%p510) target = $region84
        $region83: #{tpu_custom_call.1} parent=55 // pred_region
          %514 = dma.done %s506, 8192
        $region84: #{tpu_custom_call.1} parent=55 // pred_fallthru
          _
        %s515 = sand.u32 %s53, 1
        %s516 = scalar_lea.sflag [#allocation5], %s515
        %s517 = sand.u32 %s53, 1
        %s518 = smul.addr %s517, 256
        %s519 = scalar_lea.vmem [#allocation4], %s518
        %p520 = pneg %p66
        %p521 = pneg %p63
        %p522 = pneg %p87
        %p523 = pneg %p84
        %p524 = pneg %p108
        %p525 = pneg %p105
        %s526 = sand.u32 %s33, 1
        %s527 = scalar_lea.sflag [#allocation11], %s526
        %s528 = sand.u32 %s121, 1
        %s529 = smul.addr %s528, 512
        %s530 = scalar_lea.vmem [#allocation10], %s529
        %p531 = pneg %p134
        %p532 = pneg %p131
        %s533 = sand.u32 %s33, 1
        %s534 = scalar_lea.sflag [#allocation11], %s533
        %s535 = sand.u32 %s147, 1
        %s536 = smul.addr %s535, 512
        %s537 = scalar_lea.vmem [#allocation12], %s536
        %p538 = pneg %p160
        %p539 = pneg %p157
        %s540 = smul.u32 2, %s38
        %p541 = scmp.lt.s32.totalorder %s540, 3
        %s542 = scalar_select %p541, %s540, 3
        %s543 = scalar_lea.vmem %s5, %s542
        %p544 = pneg %p186
        %p545 = pneg %p183
        %s546 = sand.u32 %s33, 1
        %s547 = scalar_lea.sflag [#allocation14], %s546
        %s548 = sand.u32 %s199, 1
        %s549 = smul.addr %s548, 2
        %s550 = scalar_lea.vmem [#allocation13], %s549
        %p551 = pneg %p212
        %p552 = pneg %p209
        %s553 = sand.u32 %s33, 1
        %s554 = scalar_lea.sflag [#allocation14], %s553
        %s555 = sand.u32 %s225, 1
        %s556 = smul.addr %s555, 512
        %s557 = scalar_lea.vmem [#allocation15], %s556
        %p558 = pneg %p238
        %p559 = pneg %p235
        %p560 = pneg %p259
        %p561 = pneg %p256
        %p562 = pneg %p285
        %p563 = pneg %p282
        %s564 = sand.u32 %s272, 1
        %s565 = scalar_lea.sflag [#allocation6], %s564
        %s566 = sand.u32 %s272, 1
        %s567 = smul.addr %s566, 256
        %s568 = scalar_lea.vmem [#allocation16], %s567
        %s569 = smul.u32 16, %s37
        %s570 = smul.u32 2, %s38
        %s571 = smul.u32 2, %s38
        %s572 = smul.u32 2, %s38
        %p573 = scmp.lt.s32.totalorder %s572, 3
        %s574 = scalar_select %p573, %s572, 3
        %s575 = scalar_lea.vmem %s5, %s574
        %s576 = smul.u32 2, %s38
        %s577 = smul.u32 2, %s38
        %s578 = smul.u32 32, %s38
        %s579 = smul.u32 16, %s37
        %p580 = scmp.eq.s32.totalorder %s38, 0
        // Predicated region
        $region85: #{tpu_custom_call.1} parent=55 // pred_check
          %p581 = pneg %p580
        $region86: #{tpu_custom_call.1} parent=55 // pred_check_branch
          %583 = sbr.rel (%p581) target = $region88
        $region87: #{tpu_custom_call.1} parent=55 // pred_region
          %v584 = vld [vmem:[%s459] sm:$0xff]
          %v585 = vld [vmem:[%s459 + $0x8] sm:$0xff]
          %v586 = vld [vmem:[%s459 + $0x10] sm:$0xff]
          %v587 = vld [vmem:[%s459 + $0x18] sm:$0xff]
          %v588 = vld [vmem:[%s459 + $0x20] sm:$0xff]
          %v589 = vld [vmem:[%s459 + $0x28] sm:$0xff]
          %v590 = vld [vmem:[%s459 + $0x30] sm:$0xff]
          %v591 = vld [vmem:[%s459 + $0x38] sm:$0xff]
          %v592 = vld [vmem:[%s459 + $0x40] sm:$0xff]
          %v593 = vld [vmem:[%s459 + $0x48] sm:$0xff]
          %v594 = vld [vmem:[%s459 + $0x50] sm:$0xff]
          %v595 = vld [vmem:[%s459 + $0x58] sm:$0xff]
          %v596 = vld [vmem:[%s459 + $0x60] sm:$0xff]
          %v597 = vld [vmem:[%s459 + $0x68] sm:$0xff]
          %v598 = vld [vmem:[%s459 + $0x70] sm:$0xff]
          %v599 = vld [vmem:[%s459 + $0x78] sm:$0xff]
          %v600 = vld [vmem:[%s459 + $0x80] sm:$0xff]
          %v601 = vld [vmem:[%s459 + $0x88] sm:$0xff]
          %v602 = vld [vmem:[%s459 + $0x90] sm:$0xff]
          %v603 = vld [vmem:[%s459 + $0x98] sm:$0xff]
          %v604 = vld [vmem:[%s459 + $0xa0] sm:$0xff]
          %v605 = vld [vmem:[%s459 + $0xa8] sm:$0xff]
          %v606 = vld [vmem:[%s459 + $0xb0] sm:$0xff]
          %v607 = vld [vmem:[%s459 + $0xb8] sm:$0xff]
          %v608 = vld [vmem:[%s459 + $0xc0] sm:$0xff]
          %v609 = vld [vmem:[%s459 + $0xc8] sm:$0xff]
          %v610 = vld [vmem:[%s459 + $0xd0] sm:$0xff]
          %v611 = vld [vmem:[%s459 + $0xd8] sm:$0xff]
          %v612 = vld [vmem:[%s459 + $0xe0] sm:$0xff]
          %v613 = vld [vmem:[%s459 + $0xe8] sm:$0xff]
          %v614 = vld [vmem:[%s459 + $0xf0] sm:$0xff]
          %v615 = vld [vmem:[%s459 + $0xf8] sm:$0xff]
          %v616 = vadd.f32 %v584, %v585
          %617 = vadd.xlane.f32.xlu0 %v616
          %v618 = vpop.xlane.xlu0 %617
          %v619 = vadd.f32 %v586, %v587
          %620 = vadd.xlane.f32.xlu0 %v619
          %v621 = vpop.xlane.xlu0 %620
          %v622 = vadd.f32 %v588, %v589
          %623 = vadd.xlane.f32.xlu0 %v622
          %v624 = vpop.xlane.xlu0 %623
          %v625 = vadd.f32 %v590, %v591
          %626 = vadd.xlane.f32.xlu0 %v625
          %v627 = vpop.xlane.xlu0 %626
          %v628 = vadd.f32 %v592, %v593
          %629 = vadd.xlane.f32.xlu0 %v628
          %v630 = vpop.xlane.xlu0 %629
          %v631 = vadd.f32 %v594, %v595
          %632 = vadd.xlane.f32.xlu0 %v631
          %v633 = vpop.xlane.xlu0 %632
          %v634 = vadd.f32 %v596, %v597
          %635 = vadd.xlane.f32.xlu0 %v634
          %v636 = vpop.xlane.xlu0 %635
          %v637 = vadd.f32 %v598, %v599
          %638 = vadd.xlane.f32.xlu0 %v637
          %v639 = vpop.xlane.xlu0 %638
          %v640 = vadd.f32 %v600, %v601
          %641 = vadd.xlane.f32.xlu0 %v640
          %v642 = vpop.xlane.xlu0 %641
          %v643 = vadd.f32 %v602, %v603
          %644 = vadd.xlane.f32.xlu0 %v643
          %v645 = vpop.xlane.xlu0 %644
          %v646 = vadd.f32 %v604, %v605
          %647 = vadd.xlane.f32.xlu0 %v646
          %v648 = vpop.xlane.xlu0 %647
          %v649 = vadd.f32 %v606, %v607
          %650 = vadd.xlane.f32.xlu0 %v649
          %v651 = vpop.xlane.xlu0 %650
          %v652 = vadd.f32 %v608, %v609
          %653 = vadd.xlane.f32.xlu0 %v652
          %v654 = vpop.xlane.xlu0 %653
          %v655 = vadd.f32 %v610, %v611
          %656 = vadd.xlane.f32.xlu0 %v655
          %v657 = vpop.xlane.xlu0 %656
          %v658 = vadd.f32 %v612, %v613
          %659 = vadd.xlane.f32.xlu0 %v658
          %v660 = vpop.xlane.xlu0 %659
          %v661 = vadd.f32 %v614, %v615
          %662 = vadd.xlane.f32.xlu0 %v661
          %v663 = vpop.xlane.xlu0 %662
          %v664 = vrcp.pop 256.0
          %v665 = vmul.f32 256.0, %v664
          %v666 = vsub.f32 1.0, %v665
          %v667 = vmul.f32 %v664, %v666
          %v668 = vadd.f32 %v664, %v667
          %vm669 = vweird.f32 %v664
          %v670 = vsel %vm669, %v664, %v668
          %v671 = vmul.f32 %v618, %v670
          %v672 = vmul.f32 %v621, %v670
          %v673 = vmul.f32 %v624, %v670
          %v674 = vmul.f32 %v627, %v670
          %v675 = vmul.f32 %v630, %v670
          %v676 = vmul.f32 %v633, %v670
          %v677 = vmul.f32 %v636, %v670
          %v678 = vmul.f32 %v639, %v670
          %v679 = vmul.f32 %v642, %v670
          %v680 = vmul.f32 %v645, %v670
          %v681 = vmul.f32 %v648, %v670
          %v682 = vmul.f32 %v651, %v670
          %v683 = vmul.f32 %v654, %v670
          %v684 = vmul.f32 %v657, %v670
          %v685 = vmul.f32 %v660, %v670
          %v686 = vmul.f32 %v663, %v670
          %v687 = vsub.f32 %v584, %v671
          %v688 = vsub.f32 %v585, %v671
          %v689 = vsub.f32 %v586, %v672
          %v690 = vsub.f32 %v587, %v672
          %v691 = vsub.f32 %v588, %v673
          %v692 = vsub.f32 %v589, %v673
          %v693 = vsub.f32 %v590, %v674
          %v694 = vsub.f32 %v591, %v674
          %v695 = vsub.f32 %v592, %v675
          %v696 = vsub.f32 %v593, %v675
          %v697 = vsub.f32 %v594, %v676
          %v698 = vsub.f32 %v595, %v676
          %v699 = vsub.f32 %v596, %v677
          %v700 = vsub.f32 %v597, %v677
          %v701 = vsub.f32 %v598, %v678
          %v702 = vsub.f32 %v599, %v678
          %v703 = vsub.f32 %v600, %v679
          %v704 = vsub.f32 %v601, %v679
          %v705 = vsub.f32 %v602, %v680
          %v706 = vsub.f32 %v603, %v680
          %v707 = vsub.f32 %v604, %v681
          %v708 = vsub.f32 %v605, %v681
          %v709 = vsub.f32 %v606, %v682
          %v710 = vsub.f32 %v607, %v682
          %v711 = vsub.f32 %v608, %v683
          %v712 = vsub.f32 %v609, %v683
          %v713 = vsub.f32 %v610, %v684
          %v714 = vsub.f32 %v611, %v684
          %v715 = vsub.f32 %v612, %v685
          %v716 = vsub.f32 %v613, %v685
          %v717 = vsub.f32 %v614, %v686
          %v718 = vsub.f32 %v615, %v686
          %v719 = vmul.f32 %v687, %v687
          %v720 = vmul.f32 %v688, %v688
          %v721 = vmul.f32 %v689, %v689
          %v722 = vmul.f32 %v690, %v690
          %v723 = vmul.f32 %v691, %v691
          %v724 = vmul.f32 %v692, %v692
          %v725 = vmul.f32 %v693, %v693
          %v726 = vmul.f32 %v694, %v694
          %v727 = vmul.f32 %v695, %v695
          %v728 = vmul.f32 %v696, %v696
          %v729 = vmul.f32 %v697, %v697
          %v730 = vmul.f32 %v698, %v698
          %v731 = vmul.f32 %v699, %v699
          %v732 = vmul.f32 %v700, %v700
          %v733 = vmul.f32 %v701, %v701
          %v734 = vmul.f32 %v702, %v702
          %v735 = vmul.f32 %v703, %v703
          %v736 = vmul.f32 %v704, %v704
          %v737 = vmul.f32 %v705, %v705
          %v738 = vmul.f32 %v706, %v706
          %v739 = vmul.f32 %v707, %v707
          %v740 = vmul.f32 %v708, %v708
          %v741 = vmul.f32 %v709, %v709
          %v742 = vmul.f32 %v710, %v710
          %v743 = vmul.f32 %v711, %v711
          %v744 = vmul.f32 %v712, %v712
          %v745 = vmul.f32 %v713, %v713
          %v746 = vmul.f32 %v714, %v714
          %v747 = vmul.f32 %v715, %v715
          %v748 = vmul.f32 %v716, %v716
          %v749 = vmul.f32 %v717, %v717
          %v750 = vmul.f32 %v718, %v718
          %v751 = vadd.f32 %v719, %v720
          %752 = vadd.xlane.f32.xlu0 %v751
          %v753 = vpop.xlane.xlu0 %752
          %v754 = vadd.f32 %v721, %v722
          %755 = vadd.xlane.f32.xlu0 %v754
          %v756 = vpop.xlane.xlu0 %755
          %v757 = vadd.f32 %v723, %v724
          %758 = vadd.xlane.f32.xlu0 %v757
          %v759 = vpop.xlane.xlu0 %758
          %v760 = vadd.f32 %v725, %v726
          %761 = vadd.xlane.f32.xlu0 %v760
          %v762 = vpop.xlane.xlu0 %761
          %v763 = vadd.f32 %v727, %v728
          %764 = vadd.xlane.f32.xlu0 %v763
          %v765 = vpop.xlane.xlu0 %764
          %v766 = vadd.f32 %v729, %v730
          %767 = vadd.xlane.f32.xlu0 %v766
          %v768 = vpop.xlane.xlu0 %767
          %v769 = vadd.f32 %v731, %v732
          %770 = vadd.xlane.f32.xlu0 %v769
          %v771 = vpop.xlane.xlu0 %770
          %v772 = vadd.f32 %v733, %v734
          %773 = vadd.xlane.f32.xlu0 %v772
          %v774 = vpop.xlane.xlu0 %773
          %v775 = vadd.f32 %v735, %v736
          %776 = vadd.xlane.f32.xlu0 %v775
          %v777 = vpop.xlane.xlu0 %776
          %v778 = vadd.f32 %v737, %v738
          %779 = vadd.xlane.f32.xlu0 %v778
          %v780 = vpop.xlane.xlu0 %779
          %v781 = vadd.f32 %v739, %v740
          %782 = vadd.xlane.f32.xlu0 %v781
          %v783 = vpop.xlane.xlu0 %782
          %v784 = vadd.f32 %v741, %v742
          %785 = vadd.xlane.f32.xlu0 %v784
          %v786 = vpop.xlane.xlu0 %785
          %v787 = vadd.f32 %v743, %v744
          %788 = vadd.xlane.f32.xlu0 %v787
          %v789 = vpop.xlane.xlu0 %788
          %v790 = vadd.f32 %v745, %v746
          %791 = vadd.xlane.f32.xlu0 %v790
          %v792 = vpop.xlane.xlu0 %791
          %v793 = vadd.f32 %v747, %v748
          %794 = vadd.xlane.f32.xlu0 %v793
          %v795 = vpop.xlane.xlu0 %794
          %v796 = vadd.f32 %v749, %v750
          %797 = vadd.xlane.f32.xlu0 %v796
          %v798 = vpop.xlane.xlu0 %797
          %v799 = vmul.f32 %v753, %v670
          %v800 = vmul.f32 %v756, %v670
          %v801 = vmul.f32 %v759, %v670
          %v802 = vmul.f32 %v762, %v670
          %v803 = vmul.f32 %v765, %v670
          %v804 = vmul.f32 %v768, %v670
          %v805 = vmul.f32 %v771, %v670
          %v806 = vmul.f32 %v774, %v670
          %v807 = vmul.f32 %v777, %v670
          %v808 = vmul.f32 %v780, %v670
          %v809 = vmul.f32 %v783, %v670
          %v810 = vmul.f32 %v786, %v670
          %v811 = vmul.f32 %v789, %v670
          %v812 = vmul.f32 %v792, %v670
          %v813 = vmul.f32 %v795, %v670
          %v814 = vmul.f32 %v798, %v670
          %v815 = vadd.f32 %v799, 1e-05
          %v816 = vadd.f32 %v800, 1e-05
          %v817 = vadd.f32 %v801, 1e-05
          %v818 = vadd.f32 %v802, 1e-05
          %v819 = vadd.f32 %v803, 1e-05
          %v820 = vadd.f32 %v804, 1e-05
          %v821 = vadd.f32 %v805, 1e-05
          %v822 = vadd.f32 %v806, 1e-05
          %v823 = vadd.f32 %v807, 1e-05
          %v824 = vadd.f32 %v808, 1e-05
          %v825 = vadd.f32 %v809, 1e-05
          %v826 = vadd.f32 %v810, 1e-05
          %v827 = vadd.f32 %v811, 1e-05
          %v828 = vadd.f32 %v812, 1e-05
          %v829 = vadd.f32 %v813, 1e-05
          %v830 = vadd.f32 %v814, 1e-05
          %v831 = vrsqrt.pop %v815
          %v832 = vmul.f32 %v831, %v815
          %v833 = vmul.f32 %v832, %v831
          %v834 = vmul.f32 0.5, %v833
          %v835 = vsub.f32 1.5, %v834
          %v836 = vmul.f32 %v831, %v835
          %vm837 = vweird.f32 %v815
          %vm838 = vweird.f32 %v831
          %vm839 = vmor %vm837, %vm838
          %v840 = vsel %vm839, %v831, %v836
          %v841 = vrsqrt.pop %v816
          %v842 = vmul.f32 %v841, %v816
          %v843 = vmul.f32 %v842, %v841
          %v844 = vmul.f32 0.5, %v843
          %v845 = vsub.f32 1.5, %v844
          %v846 = vmul.f32 %v841, %v845
          %vm847 = vweird.f32 %v816
          %vm848 = vweird.f32 %v841
          %vm849 = vmor %vm847, %vm848
          %v850 = vsel %vm849, %v841, %v846
          %v851 = vrsqrt.pop %v817
          %v852 = vmul.f32 %v851, %v817
          %v853 = vmul.f32 %v852, %v851
          %v854 = vmul.f32 0.5, %v853
          %v855 = vsub.f32 1.5, %v854
          %v856 = vmul.f32 %v851, %v855
          %vm857 = vweird.f32 %v817
          %vm858 = vweird.f32 %v851
          %vm859 = vmor %vm857, %vm858
          %v860 = vsel %vm859, %v851, %v856
          %v861 = vrsqrt.pop %v818
          %v862 = vmul.f32 %v861, %v818
          %v863 = vmul.f32 %v862, %v861
          %v864 = vmul.f32 0.5, %v863
          %v865 = vsub.f32 1.5, %v864
          %v866 = vmul.f32 %v861, %v865
          %vm867 = vweird.f32 %v818
          %vm868 = vweird.f32 %v861
          %vm869 = vmor %vm867, %vm868
          %v870 = vsel %vm869, %v861, %v866
          %v871 = vrsqrt.pop %v819
          %v872 = vmul.f32 %v871, %v819
          %v873 = vmul.f32 %v872, %v871
          %v874 = vmul.f32 0.5, %v873
          %v875 = vsub.f32 1.5, %v874
          %v876 = vmul.f32 %v871, %v875
          %vm877 = vweird.f32 %v819
          %vm878 = vweird.f32 %v871
          %vm879 = vmor %vm877, %vm878
          %v880 = vsel %vm879, %v871, %v876
          %v881 = vrsqrt.pop %v820
          %v882 = vmul.f32 %v881, %v820
          %v883 = vmul.f32 %v882, %v881
          %v884 = vmul.f32 0.5, %v883
          %v885 = vsub.f32 1.5, %v884
          %v886 = vmul.f32 %v881, %v885
          %vm887 = vweird.f32 %v820
          %vm888 = vweird.f32 %v881
          %vm889 = vmor %vm887, %vm888
          %v890 = vsel %vm889, %v881, %v886
          %v891 = vrsqrt.pop %v821
          %v892 = vmul.f32 %v891, %v821
          %v893 = vmul.f32 %v892, %v891
          %v894 = vmul.f32 0.5, %v893
          %v895 = vsub.f32 1.5, %v894
          %v896 = vmul.f32 %v891, %v895
          %vm897 = vweird.f32 %v821
          %vm898 = vweird.f32 %v891
          %vm899 = vmor %vm897, %vm898
          %v900 = vsel %vm899, %v891, %v896
          %v901 = vrsqrt.pop %v822
          %v902 = vmul.f32 %v901, %v822
          %v903 = vmul.f32 %v902, %v901
          %v904 = vmul.f32 0.5, %v903
          %v905 = vsub.f32 1.5, %v904
          %v906 = vmul.f32 %v901, %v905
          %vm907 = vweird.f32 %v822
          %vm908 = vweird.f32 %v901
          %vm909 = vmor %vm907, %vm908
          %v910 = vsel %vm909, %v901, %v906
          %v911 = vrsqrt.pop %v823
          %v912 = vmul.f32 %v911, %v823
          %v913 = vmul.f32 %v912, %v911
          %v914 = vmul.f32 0.5, %v913
          %v915 = vsub.f32 1.5, %v914
          %v916 = vmul.f32 %v911, %v915
          %vm917 = vweird.f32 %v823
          %vm918 = vweird.f32 %v911
          %vm919 = vmor %vm917, %vm918
          %v920 = vsel %vm919, %v911, %v916
          %v921 = vrsqrt.pop %v824
          %v922 = vmul.f32 %v921, %v824
          %v923 = vmul.f32 %v922, %v921
          %v924 = vmul.f32 0.5, %v923
          %v925 = vsub.f32 1.5, %v924
          %v926 = vmul.f32 %v921, %v925
          %vm927 = vweird.f32 %v824
          %vm928 = vweird.f32 %v921
          %vm929 = vmor %vm927, %vm928
          %v930 = vsel %vm929, %v921, %v926
          %v931 = vrsqrt.pop %v825
          %v932 = vmul.f32 %v931, %v825
          %v933 = vmul.f32 %v932, %v931
          %v934 = vmul.f32 0.5, %v933
          %v935 = vsub.f32 1.5, %v934
          %v936 = vmul.f32 %v931, %v935
          %vm937 = vweird.f32 %v825
          %vm938 = vweird.f32 %v931
          %vm939 = vmor %vm937, %vm938
          %v940 = vsel %vm939, %v931, %v936
          %v941 = vrsqrt.pop %v826
          %v942 = vmul.f32 %v941, %v826
          %v943 = vmul.f32 %v942, %v941
          %v944 = vmul.f32 0.5, %v943
          %v945 = vsub.f32 1.5, %v944
          %v946 = vmul.f32 %v941, %v945
          %vm947 = vweird.f32 %v826
          %vm948 = vweird.f32 %v941
          %vm949 = vmor %vm947, %vm948
          %v950 = vsel %vm949, %v941, %v946
          %v951 = vrsqrt.pop %v827
          %v952 = vmul.f32 %v951, %v827
          %v953 = vmul.f32 %v952, %v951
          %v954 = vmul.f32 0.5, %v953
          %v955 = vsub.f32 1.5, %v954
          %v956 = vmul.f32 %v951, %v955
          %vm957 = vweird.f32 %v827
          %vm958 = vweird.f32 %v951
          %vm959 = vmor %vm957, %vm958
          %v960 = vsel %vm959, %v951, %v956
          %v961 = vrsqrt.pop %v828
          %v962 = vmul.f32 %v961, %v828
          %v963 = vmul.f32 %v962, %v961
          %v964 = vmul.f32 0.5, %v963
          %v965 = vsub.f32 1.5, %v964
          %v966 = vmul.f32 %v961, %v965
          %vm967 = vweird.f32 %v828
          %vm968 = vweird.f32 %v961
          %vm969 = vmor %vm967, %vm968
          %v970 = vsel %vm969, %v961, %v966
          %v971 = vrsqrt.pop %v829
          %v972 = vmul.f32 %v971, %v829
          %v973 = vmul.f32 %v972, %v971
          %v974 = vmul.f32 0.5, %v973
          %v975 = vsub.f32 1.5, %v974
          %v976 = vmul.f32 %v971, %v975
          %vm977 = vweird.f32 %v829
          %vm978 = vweird.f32 %v971
          %vm979 = vmor %vm977, %vm978
          %v980 = vsel %vm979, %v971, %v976
          %v981 = vrsqrt.pop %v830
          %v982 = vmul.f32 %v981, %v830
          %v983 = vmul.f32 %v982, %v981
          %v984 = vmul.f32 0.5, %v983
          %v985 = vsub.f32 1.5, %v984
          %v986 = vmul.f32 %v981, %v985
          %vm987 = vweird.f32 %v830
          %vm988 = vweird.f32 %v981
          %vm989 = vmor %vm987, %vm988
          %v990 = vsel %vm989, %v981, %v986
          %v991 = vmul.f32 %v687, %v840
          %v992 = vmul.f32 %v688, %v840
          %v993 = vmul.f32 %v689, %v850
          %v994 = vmul.f32 %v690, %v850
          %v995 = vmul.f32 %v691, %v860
          %v996 = vmul.f32 %v692, %v860
          %v997 = vmul.f32 %v693, %v870
          %v998 = vmul.f32 %v694, %v870
          %v999 = vmul.f32 %v695, %v880
          %v1000 = vmul.f32 %v696, %v880
          %v1001 = vmul.f32 %v697, %v890
          %v1002 = vmul.f32 %v698, %v890
          %v1003 = vmul.f32 %v699, %v900
          %v1004 = vmul.f32 %v700, %v900
          %v1005 = vmul.f32 %v701, %v910
          %v1006 = vmul.f32 %v702, %v910
          %v1007 = vmul.f32 %v703, %v920
          %v1008 = vmul.f32 %v704, %v920
          %v1009 = vmul.f32 %v705, %v930
          %v1010 = vmul.f32 %v706, %v930
          %v1011 = vmul.f32 %v707, %v940
          %v1012 = vmul.f32 %v708, %v940
          %v1013 = vmul.f32 %v709, %v950
          %v1014 = vmul.f32 %v710, %v950
          %v1015 = vmul.f32 %v711, %v960
          %v1016 = vmul.f32 %v712, %v960
          %v1017 = vmul.f32 %v713, %v970
          %v1018 = vmul.f32 %v714, %v970
          %v1019 = vmul.f32 %v715, %v980
          %v1020 = vmul.f32 %v716, %v980
          %v1021 = vmul.f32 %v717, %v990
          %v1022 = vmul.f32 %v718, %v990
          %v1023 = vld [vmem:[#allocation7] sm:$0x3]
          %v1025 = vperm.slane %v1023, 0
          %v1026 = vperm.slane %v1023, 1
          %v1029 = vmul.f32 %v991, %v1025
          %v1030 = vmul.f32 %v992, %v1026
          %v1031 = vmul.f32 %v993, %v1025
          %v1032 = vmul.f32 %v994, %v1026
          %v1033 = vmul.f32 %v995, %v1025
          %v1034 = vmul.f32 %v996, %v1026
          %v1035 = vmul.f32 %v997, %v1025
          %v1036 = vmul.f32 %v998, %v1026
          %v1037 = vmul.f32 %v999, %v1025
          %v1038 = vmul.f32 %v1000, %v1026
          %v1039 = vmul.f32 %v1001, %v1025
          %v1040 = vmul.f32 %v1002, %v1026
          %v1041 = vmul.f32 %v1003, %v1025
          %v1042 = vmul.f32 %v1004, %v1026
          %v1043 = vmul.f32 %v1005, %v1025
          %v1044 = vmul.f32 %v1006, %v1026
          %v1045 = vmul.f32 %v1007, %v1025
          %v1046 = vmul.f32 %v1008, %v1026
          %v1047 = vmul.f32 %v1009, %v1025
          %v1048 = vmul.f32 %v1010, %v1026
          %v1049 = vmul.f32 %v1011, %v1025
          %v1050 = vmul.f32 %v1012, %v1026
          %v1051 = vmul.f32 %v1013, %v1025
          %v1052 = vmul.f32 %v1014, %v1026
          %v1053 = vmul.f32 %v1015, %v1025
          %v1054 = vmul.f32 %v1016, %v1026
          %v1055 = vmul.f32 %v1017, %v1025
          %v1056 = vmul.f32 %v1018, %v1026
          %v1057 = vmul.f32 %v1019, %v1025
          %v1058 = vmul.f32 %v1020, %v1026
          %v1059 = vmul.f32 %v1021, %v1025
          %v1060 = vmul.f32 %v1022, %v1026
          %v1061 = vld [vmem:[#allocation9] sm:$0x3]
          %v1063 = vperm.slane %v1061, 0
          %v1064 = vperm.slane %v1061, 1
          %v1067 = vadd.f32 %v1029, %v1063
          %v1068 = vadd.f32 %v1030, %v1064
          %v1069 = vadd.f32 %v1031, %v1063
          %v1070 = vadd.f32 %v1032, %v1064
          %v1071 = vadd.f32 %v1033, %v1063
          %v1072 = vadd.f32 %v1034, %v1064
          %v1073 = vadd.f32 %v1035, %v1063
          %v1074 = vadd.f32 %v1036, %v1064
          %v1075 = vadd.f32 %v1037, %v1063
          %v1076 = vadd.f32 %v1038, %v1064
          %v1077 = vadd.f32 %v1039, %v1063
          %v1078 = vadd.f32 %v1040, %v1064
          %v1079 = vadd.f32 %v1041, %v1063
          %v1080 = vadd.f32 %v1042, %v1064
          %v1081 = vadd.f32 %v1043, %v1063
          %v1082 = vadd.f32 %v1044, %v1064
          %v1083 = vadd.f32 %v1045, %v1063
          %v1084 = vadd.f32 %v1046, %v1064
          %v1085 = vadd.f32 %v1047, %v1063
          %v1086 = vadd.f32 %v1048, %v1064
          %v1087 = vadd.f32 %v1049, %v1063
          %v1088 = vadd.f32 %v1050, %v1064
          %v1089 = vadd.f32 %v1051, %v1063
          %v1090 = vadd.f32 %v1052, %v1064
          %v1091 = vadd.f32 %v1053, %v1063
          %v1092 = vadd.f32 %v1054, %v1064
          %v1093 = vadd.f32 %v1055, %v1063
          %v1094 = vadd.f32 %v1056, %v1064
          %v1095 = vadd.f32 %v1057, %v1063
          %v1096 = vadd.f32 %v1058, %v1064
          %v1097 = vadd.f32 %v1059, %v1063
          %v1098 = vadd.f32 %v1060, %v1064
          %1099 = vst [vmem:[#allocation2] sm:$0xff] %v1067
          %1100 = vst [vmem:[#allocation2 + $0x8] sm:$0xff] %v1068
          %1101 = vst [vmem:[#allocation2 + $0x10] sm:$0xff] %v1069
          %1102 = vst [vmem:[#allocation2 + $0x18] sm:$0xff] %v1070
          %1103 = vst [vmem:[#allocation2 + $0x20] sm:$0xff] %v1071
          %1104 = vst [vmem:[#allocation2 + $0x28] sm:$0xff] %v1072
          %1105 = vst [vmem:[#allocation2 + $0x30] sm:$0xff] %v1073
          %1106 = vst [vmem:[#allocation2 + $0x38] sm:$0xff] %v1074
          %1107 = vst [vmem:[#allocation2 + $0x40] sm:$0xff] %v1075
          %1108 = vst [vmem:[#allocation2 + $0x48] sm:$0xff] %v1076
          %1109 = vst [vmem:[#allocation2 + $0x50] sm:$0xff] %v1077
          %1110 = vst [vmem:[#allocation2 + $0x58] sm:$0xff] %v1078
          %1111 = vst [vmem:[#allocation2 + $0x60] sm:$0xff] %v1079
          %1112 = vst [vmem:[#allocation2 + $0x68] sm:$0xff] %v1080
          %1113 = vst [vmem:[#allocation2 + $0x70] sm:$0xff] %v1081
          %1114 = vst [vmem:[#allocation2 + $0x78] sm:$0xff] %v1082
          %1115 = vst [vmem:[#allocation2 + $0x80] sm:$0xff] %v1083
          %1116 = vst [vmem:[#allocation2 + $0x88] sm:$0xff] %v1084
          %1117 = vst [vmem:[#allocation2 + $0x90] sm:$0xff] %v1085
          %1118 = vst [vmem:[#allocation2 + $0x98] sm:$0xff] %v1086
          %1119 = vst [vmem:[#allocation2 + $0xa0] sm:$0xff] %v1087
          %1120 = vst [vmem:[#allocation2 + $0xa8] sm:$0xff] %v1088
          %1121 = vst [vmem:[#allocation2 + $0xb0] sm:$0xff] %v1089
          %1122 = vst [vmem:[#allocation2 + $0xb8] sm:$0xff] %v1090
          %1123 = vst [vmem:[#allocation2 + $0xc0] sm:$0xff] %v1091
          %1124 = vst [vmem:[#allocation2 + $0xc8] sm:$0xff] %v1092
          %1125 = vst [vmem:[#allocation2 + $0xd0] sm:$0xff] %v1093
          %1126 = vst [vmem:[#allocation2 + $0xd8] sm:$0xff] %v1094
          %1127 = vst [vmem:[#allocation2 + $0xe0] sm:$0xff] %v1095
          %1128 = vst [vmem:[#allocation2 + $0xe8] sm:$0xff] %v1096
          %1129 = vst [vmem:[#allocation2 + $0xf0] sm:$0xff] %v1097
          %1130 = vst [vmem:[#allocation2 + $0xf8] sm:$0xff] %v1098
          %v1131 = vld [vmem:[%s8] sm:$0x3]
          %v1133 = vperm.slane %v1131, 0
          %v1134 = vperm.slane %v1131, 1
          %1137 = vst [vmem:[#allocation3] sm:$0xff] %v1133
          %1138 = vst [vmem:[#allocation3 + $0x8] sm:$0xff] %v1134
          %1139 = vst [vmem:[#allocation3 + $0x10] sm:$0xff] %v1133
          %1140 = vst [vmem:[#allocation3 + $0x18] sm:$0xff] %v1134
          %1141 = vst [vmem:[#allocation3 + $0x20] sm:$0xff] %v1133
          %1142 = vst [vmem:[#allocation3 + $0x28] sm:$0xff] %v1134
          %1143 = vst [vmem:[#allocation3 + $0x30] sm:$0xff] %v1133
          %1144 = vst [vmem:[#allocation3 + $0x38] sm:$0xff] %v1134
          %1145 = vst [vmem:[#allocation3 + $0x40] sm:$0xff] %v1133
          %1146 = vst [vmem:[#allocation3 + $0x48] sm:$0xff] %v1134
          %1147 = vst [vmem:[#allocation3 + $0x50] sm:$0xff] %v1133
          %1148 = vst [vmem:[#allocation3 + $0x58] sm:$0xff] %v1134
          %1149 = vst [vmem:[#allocation3 + $0x60] sm:$0xff] %v1133
          %1150 = vst [vmem:[#allocation3 + $0x68] sm:$0xff] %v1134
          %1151 = vst [vmem:[#allocation3 + $0x70] sm:$0xff] %v1133
          %1152 = vst [vmem:[#allocation3 + $0x78] sm:$0xff] %v1134
          %1153 = vst [vmem:[#allocation3 + $0x80] sm:$0xff] %v1133
          %1154 = vst [vmem:[#allocation3 + $0x88] sm:$0xff] %v1134
          %1155 = vst [vmem:[#allocation3 + $0x90] sm:$0xff] %v1133
          %1156 = vst [vmem:[#allocation3 + $0x98] sm:$0xff] %v1134
          %1157 = vst [vmem:[#allocation3 + $0xa0] sm:$0xff] %v1133
          %1158 = vst [vmem:[#allocation3 + $0xa8] sm:$0xff] %v1134
          %1159 = vst [vmem:[#allocation3 + $0xb0] sm:$0xff] %v1133
          %1160 = vst [vmem:[#allocation3 + $0xb8] sm:$0xff] %v1134
          %1161 = vst [vmem:[#allocation3 + $0xc0] sm:$0xff] %v1133
          %1162 = vst [vmem:[#allocation3 + $0xc8] sm:$0xff] %v1134
          %1163 = vst [vmem:[#allocation3 + $0xd0] sm:$0xff] %v1133
          %1164 = vst [vmem:[#allocation3 + $0xd8] sm:$0xff] %v1134
          %1165 = vst [vmem:[#allocation3 + $0xe0] sm:$0xff] %v1133
          %1166 = vst [vmem:[#allocation3 + $0xe8] sm:$0xff] %v1134
          %1167 = vst [vmem:[#allocation3 + $0xf0] sm:$0xff] %v1133
          %1168 = vst [vmem:[#allocation3 + $0xf8] sm:$0xff] %v1134
        $region88: #{tpu_custom_call.1} parent=55 // pred_fallthru
          _
        %v1169 = vld [vmem:[#allocation2] sm:$0xff]
        %v1170 = vld [vmem:[#allocation2 + $0x8] sm:$0xff]
        %v1171 = vld [vmem:[#allocation2 + $0x10] sm:$0xff]
        %v1172 = vld [vmem:[#allocation2 + $0x18] sm:$0xff]
        %v1173 = vld [vmem:[#allocation2 + $0x20] sm:$0xff]
        %v1174 = vld [vmem:[#allocation2 + $0x28] sm:$0xff]
        %v1175 = vld [vmem:[#allocation2 + $0x30] sm:$0xff]
        %v1176 = vld [vmem:[#allocation2 + $0x38] sm:$0xff]
        %v1177 = vld [vmem:[#allocation2 + $0x40] sm:$0xff]
        %v1178 = vld [vmem:[#allocation2 + $0x48] sm:$0xff]
        %v1179 = vld [vmem:[#allocation2 + $0x50] sm:$0xff]
        %v1180 = vld [vmem:[#allocation2 + $0x58] sm:$0xff]
        %v1181 = vld [vmem:[#allocation2 + $0x60] sm:$0xff]
        %v1182 = vld [vmem:[#allocation2 + $0x68] sm:$0xff]
        %v1183 = vld [vmem:[#allocation2 + $0x70] sm:$0xff]
        %v1184 = vld [vmem:[#allocation2 + $0x78] sm:$0xff]
        %v1185 = vld [vmem:[#allocation2 + $0x80] sm:$0xff]
        %v1186 = vld [vmem:[#allocation2 + $0x88] sm:$0xff]
        %v1187 = vld [vmem:[#allocation2 + $0x90] sm:$0xff]
        %v1188 = vld [vmem:[#allocation2 + $0x98] sm:$0xff]
        %v1189 = vld [vmem:[#allocation2 + $0xa0] sm:$0xff]
        %v1190 = vld [vmem:[#allocation2 + $0xa8] sm:$0xff]
        %v1191 = vld [vmem:[#allocation2 + $0xb0] sm:$0xff]
        %v1192 = vld [vmem:[#allocation2 + $0xb8] sm:$0xff]
        %v1193 = vld [vmem:[#allocation2 + $0xc0] sm:$0xff]
        %v1194 = vld [vmem:[#allocation2 + $0xc8] sm:$0xff]
        %v1195 = vld [vmem:[#allocation2 + $0xd0] sm:$0xff]
        %v1196 = vld [vmem:[#allocation2 + $0xd8] sm:$0xff]
        %v1197 = vld [vmem:[#allocation2 + $0xe0] sm:$0xff]
        %v1198 = vld [vmem:[#allocation2 + $0xe8] sm:$0xff]
        %v1199 = vld [vmem:[#allocation2 + $0xf0] sm:$0xff]
        %v1200 = vld [vmem:[#allocation2 + $0xf8] sm:$0xff]
        %v1201 = vld [vmem:[%s479] sm:$0xff]
        %v1202 = vld [vmem:[%s479 + $0x8] sm:$0xff]
        %v1203 = vld [vmem:[%s479 + $0x10] sm:$0xff]
        %v1204 = vld [vmem:[%s479 + $0x18] sm:$0xff]
        %v1205 = vld [vmem:[%s479 + $0x20] sm:$0xff]
        %v1206 = vld [vmem:[%s479 + $0x28] sm:$0xff]
        %v1207 = vld [vmem:[%s479 + $0x30] sm:$0xff]
        %v1208 = vld [vmem:[%s479 + $0x38] sm:$0xff]
        %v1209 = vld [vmem:[%s479 + $0x40] sm:$0xff]
        %v1210 = vld [vmem:[%s479 + $0x48] sm:$0xff]
        %v1211 = vld [vmem:[%s479 + $0x50] sm:$0xff]
        %v1212 = vld [vmem:[%s479 + $0x58] sm:$0xff]
        %v1213 = vld [vmem:[%s479 + $0x60] sm:$0xff]
        %v1214 = vld [vmem:[%s479 + $0x68] sm:$0xff]
        %v1215 = vld [vmem:[%s479 + $0x70] sm:$0xff]
        %v1216 = vld [vmem:[%s479 + $0x78] sm:$0xff]
        %v1217 = vld [vmem:[%s479 + $0x80] sm:$0xff]
        %v1218 = vld [vmem:[%s479 + $0x88] sm:$0xff]
        %v1219 = vld [vmem:[%s479 + $0x90] sm:$0xff]
        %v1220 = vld [vmem:[%s479 + $0x98] sm:$0xff]
        %v1221 = vld [vmem:[%s479 + $0xa0] sm:$0xff]
        %v1222 = vld [vmem:[%s479 + $0xa8] sm:$0xff]
        %v1223 = vld [vmem:[%s479 + $0xb0] sm:$0xff]
        %v1224 = vld [vmem:[%s479 + $0xb8] sm:$0xff]
        %v1225 = vld [vmem:[%s479 + $0xc0] sm:$0xff]
        %v1226 = vld [vmem:[%s479 + $0xc8] sm:$0xff]
        %v1227 = vld [vmem:[%s479 + $0xd0] sm:$0xff]
        %v1228 = vld [vmem:[%s479 + $0xd8] sm:$0xff]
        %v1229 = vld [vmem:[%s479 + $0xe0] sm:$0xff]
        %v1230 = vld [vmem:[%s479 + $0xe8] sm:$0xff]
        %v1231 = vld [vmem:[%s479 + $0xf0] sm:$0xff]
        %v1232 = vld [vmem:[%s479 + $0xf8] sm:$0xff]
        %v1233 = vld [vmem:[%s479 + $0x100] sm:$0xff]
        %v1234 = vld [vmem:[%s479 + $0x108] sm:$0xff]
        %v1235 = vld [vmem:[%s479 + $0x110] sm:$0xff]
        %v1236 = vld [vmem:[%s479 + $0x118] sm:$0xff]
        %v1237 = vld [vmem:[%s479 + $0x120] sm:$0xff]
        %v1238 = vld [vmem:[%s479 + $0x128] sm:$0xff]
        %v1239 = vld [vmem:[%s479 + $0x130] sm:$0xff]
        %v1240 = vld [vmem:[%s479 + $0x138] sm:$0xff]
        %v1241 = vld [vmem:[%s479 + $0x140] sm:$0xff]
        %v1242 = vld [vmem:[%s479 + $0x148] sm:$0xff]
        %v1243 = vld [vmem:[%s479 + $0x150] sm:$0xff]
        %v1244 = vld [vmem:[%s479 + $0x158] sm:$0xff]
        %v1245 = vld [vmem:[%s479 + $0x160] sm:$0xff]
        %v1246 = vld [vmem:[%s479 + $0x168] sm:$0xff]
        %v1247 = vld [vmem:[%s479 + $0x170] sm:$0xff]
        %v1248 = vld [vmem:[%s479 + $0x178] sm:$0xff]
        %v1249 = vld [vmem:[%s479 + $0x180] sm:$0xff]
        %v1250 = vld [vmem:[%s479 + $0x188] sm:$0xff]
        %v1251 = vld [vmem:[%s479 + $0x190] sm:$0xff]
        %v1252 = vld [vmem:[%s479 + $0x198] sm:$0xff]
        %v1253 = vld [vmem:[%s479 + $0x1a0] sm:$0xff]
        %v1254 = vld [vmem:[%s479 + $0x1a8] sm:$0xff]
        %v1255 = vld [vmem:[%s479 + $0x1b0] sm:$0xff]
        %v1256 = vld [vmem:[%s479 + $0x1b8] sm:$0xff]
        %v1257 = vld [vmem:[%s479 + $0x1c0] sm:$0xff]
        %v1258 = vld [vmem:[%s479 + $0x1c8] sm:$0xff]
        %v1259 = vld [vmem:[%s479 + $0x1d0] sm:$0xff]
        %v1260 = vld [vmem:[%s479 + $0x1d8] sm:$0xff]
        %v1261 = vld [vmem:[%s479 + $0x1e0] sm:$0xff]
        %v1262 = vld [vmem:[%s479 + $0x1e8] sm:$0xff]
        %v1263 = vld [vmem:[%s479 + $0x1f0] sm:$0xff]
        %v1264 = vld [vmem:[%s479 + $0x1f8] sm:$0xff]
        %v1265 = vld [vmem:[%s575] sm:$0x3]
        %v1267 = vperm.slane %v1265, 0
        %v1268 = vperm.slane %v1265, 1
        %1271 = vmatpush.msra.mxu0 %v1231
        %1272 = vmatpush.msra.mxu0 %v1229
        %1273 = vmatpush.msra.mxu0 %v1227
        %1274 = vmatpush.msra.mxu0 %v1225
        %1275 = vmatpush.msra.mxu0 %v1223
        %1276 = vmatpush.msra.mxu0 %v1221
        %1277 = vmatpush.msra.mxu0 %v1219
        %1278 = vmatpush.msra.mxu0 %v1217
        %1279 = vmatpush.msra.mxu0 %v1215
        %1280 = vmatpush.msra.mxu0 %v1213
        %1281 = vmatpush.msra.mxu0 %v1211
        %1282 = vmatpush.msra.mxu0 %v1209
        %1283 = vmatpush.msra.mxu0 %v1207
        %1284 = vmatpush.msra.mxu0 %v1205
        %1285 = vmatpush.msra.mxu0 %v1203
        %1286 = vmatpush.msra.mxu0 %v1201
        %1287 = vmatmul.f32.gmra.mxu0 %v1169
        %v1288 = vpop.f32.mrf.mxu0
        %v1289 = vadd.f32 %v1267, %v1288
        %1290 = vmatmul.f32.gmra.mxu0 %v1171
        %v1291 = vpop.f32.mrf.mxu0
        %v1292 = vadd.f32 %v1267, %v1291
        %1293 = vmatmul.f32.gmra.mxu0 %v1173
        %v1294 = vpop.f32.mrf.mxu0
        %v1295 = vadd.f32 %v1267, %v1294
        %1296 = vmatmul.f32.gmra.mxu0 %v1175
        %v1297 = vpop.f32.mrf.mxu0
        %v1298 = vadd.f32 %v1267, %v1297
        %1299 = vmatmul.f32.gmra.mxu0 %v1177
        %v1300 = vpop.f32.mrf.mxu0
        %v1301 = vadd.f32 %v1267, %v1300
        %1302 = vmatmul.f32.gmra.mxu0 %v1179
        %v1303 = vpop.f32.mrf.mxu0
        %v1304 = vadd.f32 %v1267, %v1303
        %1305 = vmatmul.f32.gmra.mxu0 %v1181
        %v1306 = vpop.f32.mrf.mxu0
        %v1307 = vadd.f32 %v1267, %v1306
        %1308 = vmatmul.f32.gmra.mxu0 %v1183
        %v1309 = vpop.f32.mrf.mxu0
        %v1310 = vadd.f32 %v1267, %v1309
        %1311 = vmatmul.f32.gmra.mxu0 %v1185
        %v1312 = vpop.f32.mrf.mxu0
        %v1313 = vadd.f32 %v1267, %v1312
        %1314 = vmatmul.f32.gmra.mxu0 %v1187
        %v1315 = vpop.f32.mrf.mxu0
        %v1316 = vadd.f32 %v1267, %v1315
        %1317 = vmatmul.f32.gmra.mxu0 %v1189
        %v1318 = vpop.f32.mrf.mxu0
        %v1319 = vadd.f32 %v1267, %v1318
        %1320 = vmatmul.f32.gmra.mxu0 %v1191
        %v1321 = vpop.f32.mrf.mxu0
        %v1322 = vadd.f32 %v1267, %v1321
        %1323 = vmatmul.f32.gmra.mxu0 %v1193
        %v1324 = vpop.f32.mrf.mxu0
        %v1325 = vadd.f32 %v1267, %v1324
        %1326 = vmatmul.f32.gmra.mxu0 %v1195
        %v1327 = vpop.f32.mrf.mxu0
        %v1328 = vadd.f32 %v1267, %v1327
        %1329 = vmatmul.f32.gmra.mxu0 %v1197
        %v1330 = vpop.f32.mrf.mxu0
        %v1331 = vadd.f32 %v1267, %v1330
        %1332 = vmatmul.f32.gmra.mxu0 %v1199
        %v1333 = vpop.f32.mrf.mxu0
        %v1334 = vadd.f32 %v1267, %v1333
        %1335 = vdwg.mxu0
        %1336 = vmatpush.msra.mxu0 %v1263
        %1337 = vmatpush.msra.mxu0 %v1261
        %1338 = vmatpush.msra.mxu0 %v1259
        %1339 = vmatpush.msra.mxu0 %v1257
        %1340 = vmatpush.msra.mxu0 %v1255
        %1341 = vmatpush.msra.mxu0 %v1253
        %1342 = vmatpush.msra.mxu0 %v1251
        %1343 = vmatpush.msra.mxu0 %v1249
        %1344 = vmatpush.msra.mxu0 %v1247
        %1345 = vmatpush.msra.mxu0 %v1245
        %1346 = vmatpush.msra.mxu0 %v1243
        %1347 = vmatpush.msra.mxu0 %v1241
        %1348 = vmatpush.msra.mxu0 %v1239
        %1349 = vmatpush.msra.mxu0 %v1237
        %1350 = vmatpush.msra.mxu0 %v1235
        %1351 = vmatpush.msra.mxu0 %v1233
        %1352 = vmatmul.f32.gmra.mxu0 %v1170
        %v1353 = vpop.f32.mrf.mxu0
        %v1354 = vadd.f32 %v1289, %v1353
        %1355 = vmatmul.f32.gmra.mxu0 %v1172
        %v1356 = vpop.f32.mrf.mxu0
        %v1357 = vadd.f32 %v1292, %v1356
        %1358 = vmatmul.f32.gmra.mxu0 %v1174
        %v1359 = vpop.f32.mrf.mxu0
        %v1360 = vadd.f32 %v1295, %v1359
        %1361 = vmatmul.f32.gmra.mxu0 %v1176
        %v1362 = vpop.f32.mrf.mxu0
        %v1363 = vadd.f32 %v1298, %v1362
        %1364 = vmatmul.f32.gmra.mxu0 %v1178
        %v1365 = vpop.f32.mrf.mxu0
        %v1366 = vadd.f32 %v1301, %v1365
        %1367 = vmatmul.f32.gmra.mxu0 %v1180
        %v1368 = vpop.f32.mrf.mxu0
        %v1369 = vadd.f32 %v1304, %v1368
        %1370 = vmatmul.f32.gmra.mxu0 %v1182
        %v1371 = vpop.f32.mrf.mxu0
        %v1372 = vadd.f32 %v1307, %v1371
        %1373 = vmatmul.f32.gmra.mxu0 %v1184
        %v1374 = vpop.f32.mrf.mxu0
        %v1375 = vadd.f32 %v1310, %v1374
        %1376 = vmatmul.f32.gmra.mxu0 %v1186
        %v1377 = vpop.f32.mrf.mxu0
        %v1378 = vadd.f32 %v1313, %v1377
        %1379 = vmatmul.f32.gmra.mxu0 %v1188
        %v1380 = vpop.f32.mrf.mxu0
        %v1381 = vadd.f32 %v1316, %v1380
        %1382 = vmatmul.f32.gmra.mxu0 %v1190
        %v1383 = vpop.f32.mrf.mxu0
        %v1384 = vadd.f32 %v1319, %v1383
        %1385 = vmatmul.f32.gmra.mxu0 %v1192
        %v1386 = vpop.f32.mrf.mxu0
        %v1387 = vadd.f32 %v1322, %v1386
        %1388 = vmatmul.f32.gmra.mxu0 %v1194
        %v1389 = vpop.f32.mrf.mxu0
        %v1390 = vadd.f32 %v1325, %v1389
        %1391 = vmatmul.f32.gmra.mxu0 %v1196
        %v1392 = vpop.f32.mrf.mxu0
        %v1393 = vadd.f32 %v1328, %v1392
        %1394 = vmatmul.f32.gmra.mxu0 %v1198
        %v1395 = vpop.f32.mrf.mxu0
        %v1396 = vadd.f32 %v1331, %v1395
        %1397 = vmatmul.f32.gmra.mxu0 %v1200
        %v1398 = vpop.f32.mrf.mxu0
        %v1399 = vadd.f32 %v1334, %v1398
        %1400 = vdwg.mxu0
        %1401 = vmatpush.msra.mxu0 %v1232
        %1402 = vmatpush.msra.mxu0 %v1230
        %1403 = vmatpush.msra.mxu0 %v1228
        %1404 = vmatpush.msra.mxu0 %v1226
        %1405 = vmatpush.msra.mxu0 %v1224
        %1406 = vmatpush.msra.mxu0 %v1222
        %1407 = vmatpush.msra.mxu0 %v1220
        %1408 = vmatpush.msra.mxu0 %v1218
        %1409 = vmatpush.msra.mxu0 %v1216
        %1410 = vmatpush.msra.mxu0 %v1214
        %1411 = vmatpush.msra.mxu0 %v1212
        %1412 = vmatpush.msra.mxu0 %v1210
        %1413 = vmatpush.msra.mxu0 %v1208
        %1414 = vmatpush.msra.mxu0 %v1206
        %1415 = vmatpush.msra.mxu0 %v1204
        %1416 = vmatpush.msra.mxu0 %v1202
        %1417 = vmatmul.f32.gmra.mxu0 %v1169
        %v1418 = vpop.f32.mrf.mxu0
        %v1419 = vadd.f32 %v1268, %v1418
        %1420 = vmatmul.f32.gmra.mxu0 %v1171
        %v1421 = vpop.f32.mrf.mxu0
        %v1422 = vadd.f32 %v1268, %v1421
        %1423 = vmatmul.f32.gmra.mxu0 %v1173
        %v1424 = vpop.f32.mrf.mxu0
        %v1425 = vadd.f32 %v1268, %v1424
        %1426 = vmatmul.f32.gmra.mxu0 %v1175
        %v1427 = vpop.f32.mrf.mxu0
        %v1428 = vadd.f32 %v1268, %v1427
        %1429 = vmatmul.f32.gmra.mxu0 %v1177
        %v1430 = vpop.f32.mrf.mxu0
        %v1431 = vadd.f32 %v1268, %v1430
        %1432 = vmatmul.f32.gmra.mxu0 %v1179
        %v1433 = vpop.f32.mrf.mxu0
        %v1434 = vadd.f32 %v1268, %v1433
        %1435 = vmatmul.f32.gmra.mxu0 %v1181
        %v1436 = vpop.f32.mrf.mxu0
        %v1437 = vadd.f32 %v1268, %v1436
        %1438 = vmatmul.f32.gmra.mxu0 %v1183
        %v1439 = vpop.f32.mrf.mxu0
        %v1440 = vadd.f32 %v1268, %v1439
        %1441 = vmatmul.f32.gmra.mxu0 %v1185
        %v1442 = vpop.f32.mrf.mxu0
        %v1443 = vadd.f32 %v1268, %v1442
        %1444 = vmatmul.f32.gmra.mxu0 %v1187
        %v1445 = vpop.f32.mrf.mxu0
        %v1446 = vadd.f32 %v1268, %v1445
        %1447 = vmatmul.f32.gmra.mxu0 %v1189
        %v1448 = vpop.f32.mrf.mxu0
        %v1449 = vadd.f32 %v1268, %v1448
        %1450 = vmatmul.f32.gmra.mxu0 %v1191
        %v1451 = vpop.f32.mrf.mxu0
        %v1452 = vadd.f32 %v1268, %v1451
        %1453 = vmatmul.f32.gmra.mxu0 %v1193
        %v1454 = vpop.f32.mrf.mxu0
        %v1455 = vadd.f32 %v1268, %v1454
        %1456 = vmatmul.f32.gmra.mxu0 %v1195
        %v1457 = vpop.f32.mrf.mxu0
        %v1458 = vadd.f32 %v1268, %v1457
        %1459 = vmatmul.f32.gmra.mxu0 %v1197
        %v1460 = vpop.f32.mrf.mxu0
        %v1461 = vadd.f32 %v1268, %v1460
        %1462 = vmatmul.f32.gmra.mxu0 %v1199
        %v1463 = vpop.f32.mrf.mxu0
        %v1464 = vadd.f32 %v1268, %v1463
        %1465 = vdwg.mxu0
        %1466 = vmatpush.msra.mxu0 %v1264
        %1467 = vmatpush.msra.mxu0 %v1262
        %1468 = vmatpush.msra.mxu0 %v1260
        %1469 = vmatpush.msra.mxu0 %v1258
        %1470 = vmatpush.msra.mxu0 %v1256
        %1471 = vmatpush.msra.mxu0 %v1254
        %1472 = vmatpush.msra.mxu0 %v1252
        %1473 = vmatpush.msra.mxu0 %v1250
        %1474 = vmatpush.msra.mxu0 %v1248
        %1475 = vmatpush.msra.mxu0 %v1246
        %1476 = vmatpush.msra.mxu0 %v1244
        %1477 = vmatpush.msra.mxu0 %v1242
        %1478 = vmatpush.msra.mxu0 %v1240
        %1479 = vmatpush.msra.mxu0 %v1238
        %1480 = vmatpush.msra.mxu0 %v1236
        %1481 = vmatpush.msra.mxu0 %v1234
        %1482 = vmatmul.f32.gmra.mxu0 %v1170
        %v1483 = vpop.f32.mrf.mxu0
        %v1484 = vadd.f32 %v1419, %v1483
        %1485 = vmatmul.f32.gmra.mxu0 %v1172
        %v1486 = vpop.f32.mrf.mxu0
        %v1487 = vadd.f32 %v1422, %v1486
        %1488 = vmatmul.f32.gmra.mxu0 %v1174
        %v1489 = vpop.f32.mrf.mxu0
        %v1490 = vadd.f32 %v1425, %v1489
        %1491 = vmatmul.f32.gmra.mxu0 %v1176
        %v1492 = vpop.f32.mrf.mxu0
        %v1493 = vadd.f32 %v1428, %v1492
        %1494 = vmatmul.f32.gmra.mxu0 %v1178
        %v1495 = vpop.f32.mrf.mxu0
        %v1496 = vadd.f32 %v1431, %v1495
        %1497 = vmatmul.f32.gmra.mxu0 %v1180
        %v1498 = vpop.f32.mrf.mxu0
        %v1499 = vadd.f32 %v1434, %v1498
        %1500 = vmatmul.f32.gmra.mxu0 %v1182
        %v1501 = vpop.f32.mrf.mxu0
        %v1502 = vadd.f32 %v1437, %v1501
        %1503 = vmatmul.f32.gmra.mxu0 %v1184
        %v1504 = vpop.f32.mrf.mxu0
        %v1505 = vadd.f32 %v1440, %v1504
        %1506 = vmatmul.f32.gmra.mxu0 %v1186
        %v1507 = vpop.f32.mrf.mxu0
        %v1508 = vadd.f32 %v1443, %v1507
        %1509 = vmatmul.f32.gmra.mxu0 %v1188
        %v1510 = vpop.f32.mrf.mxu0
        %v1511 = vadd.f32 %v1446, %v1510
        %1512 = vmatmul.f32.gmra.mxu0 %v1190
        %v1513 = vpop.f32.mrf.mxu0
        %v1514 = vadd.f32 %v1449, %v1513
        %1515 = vmatmul.f32.gmra.mxu0 %v1192
        %v1516 = vpop.f32.mrf.mxu0
        %v1517 = vadd.f32 %v1452, %v1516
        %1518 = vmatmul.f32.gmra.mxu0 %v1194
        %v1519 = vpop.f32.mrf.mxu0
        %v1520 = vadd.f32 %v1455, %v1519
        %1521 = vmatmul.f32.gmra.mxu0 %v1196
        %v1522 = vpop.f32.mrf.mxu0
        %v1523 = vadd.f32 %v1458, %v1522
        %1524 = vmatmul.f32.gmra.mxu0 %v1198
        %v1525 = vpop.f32.mrf.mxu0
        %v1526 = vadd.f32 %v1461, %v1525
        %1527 = vmatmul.f32.gmra.mxu0 %v1200
        %v1528 = vpop.f32.mrf.mxu0
        %v1529 = vadd.f32 %v1464, %v1528
        %1530 = vdwg.mxu0
        %v1531 = vld [vmem:[%s489] sm:$0xff]
        %v1532 = vld [vmem:[%s489 + $0x8] sm:$0xff]
        %v1533 = vld [vmem:[%s489 + $0x10] sm:$0xff]
        %v1534 = vld [vmem:[%s489 + $0x18] sm:$0xff]
        %v1535 = vld [vmem:[%s489 + $0x20] sm:$0xff]
        %v1536 = vld [vmem:[%s489 + $0x28] sm:$0xff]
        %v1537 = vld [vmem:[%s489 + $0x30] sm:$0xff]
        %v1538 = vld [vmem:[%s489 + $0x38] sm:$0xff]
        %v1539 = vld [vmem:[%s489 + $0x40] sm:$0xff]
        %v1540 = vld [vmem:[%s489 + $0x48] sm:$0xff]
        %v1541 = vld [vmem:[%s489 + $0x50] sm:$0xff]
        %v1542 = vld [vmem:[%s489 + $0x58] sm:$0xff]
        %v1543 = vld [vmem:[%s489 + $0x60] sm:$0xff]
        %v1544 = vld [vmem:[%s489 + $0x68] sm:$0xff]
        %v1545 = vld [vmem:[%s489 + $0x70] sm:$0xff]
        %v1546 = vld [vmem:[%s489 + $0x78] sm:$0xff]
        %v1547 = vld [vmem:[%s489 + $0x80] sm:$0xff]
        %v1548 = vld [vmem:[%s489 + $0x88] sm:$0xff]
        %v1549 = vld [vmem:[%s489 + $0x90] sm:$0xff]
        %v1550 = vld [vmem:[%s489 + $0x98] sm:$0xff]
        %v1551 = vld [vmem:[%s489 + $0xa0] sm:$0xff]
        %v1552 = vld [vmem:[%s489 + $0xa8] sm:$0xff]
        %v1553 = vld [vmem:[%s489 + $0xb0] sm:$0xff]
        %v1554 = vld [vmem:[%s489 + $0xb8] sm:$0xff]
        %v1555 = vld [vmem:[%s489 + $0xc0] sm:$0xff]
        %v1556 = vld [vmem:[%s489 + $0xc8] sm:$0xff]
        %v1557 = vld [vmem:[%s489 + $0xd0] sm:$0xff]
        %v1558 = vld [vmem:[%s489 + $0xd8] sm:$0xff]
        %v1559 = vld [vmem:[%s489 + $0xe0] sm:$0xff]
        %v1560 = vld [vmem:[%s489 + $0xe8] sm:$0xff]
        %v1561 = vld [vmem:[%s489 + $0xf0] sm:$0xff]
        %v1562 = vld [vmem:[%s489 + $0xf8] sm:$0xff]
        %v1563 = vld [vmem:[%s489 + $0x100] sm:$0xff]
        %v1564 = vld [vmem:[%s489 + $0x108] sm:$0xff]
        %v1565 = vld [vmem:[%s489 + $0x110] sm:$0xff]
        %v1566 = vld [vmem:[%s489 + $0x118] sm:$0xff]
        %v1567 = vld [vmem:[%s489 + $0x120] sm:$0xff]
        %v1568 = vld [vmem:[%s489 + $0x128] sm:$0xff]
        %v1569 = vld [vmem:[%s489 + $0x130] sm:$0xff]
        %v1570 = vld [vmem:[%s489 + $0x138] sm:$0xff]
        %v1571 = vld [vmem:[%s489 + $0x140] sm:$0xff]
        %v1572 = vld [vmem:[%s489 + $0x148] sm:$0xff]
        %v1573 = vld [vmem:[%s489 + $0x150] sm:$0xff]
        %v1574 = vld [vmem:[%s489 + $0x158] sm:$0xff]
        %v1575 = vld [vmem:[%s489 + $0x160] sm:$0xff]
        %v1576 = vld [vmem:[%s489 + $0x168] sm:$0xff]
        %v1577 = vld [vmem:[%s489 + $0x170] sm:$0xff]
        %v1578 = vld [vmem:[%s489 + $0x178] sm:$0xff]
        %v1579 = vld [vmem:[%s489 + $0x180] sm:$0xff]
        %v1580 = vld [vmem:[%s489 + $0x188] sm:$0xff]
        %v1581 = vld [vmem:[%s489 + $0x190] sm:$0xff]
        %v1582 = vld [vmem:[%s489 + $0x198] sm:$0xff]
        %v1583 = vld [vmem:[%s489 + $0x1a0] sm:$0xff]
        %v1584 = vld [vmem:[%s489 + $0x1a8] sm:$0xff]
        %v1585 = vld [vmem:[%s489 + $0x1b0] sm:$0xff]
        %v1586 = vld [vmem:[%s489 + $0x1b8] sm:$0xff]
        %v1587 = vld [vmem:[%s489 + $0x1c0] sm:$0xff]
        %v1588 = vld [vmem:[%s489 + $0x1c8] sm:$0xff]
        %v1589 = vld [vmem:[%s489 + $0x1d0] sm:$0xff]
        %v1590 = vld [vmem:[%s489 + $0x1d8] sm:$0xff]
        %v1591 = vld [vmem:[%s489 + $0x1e0] sm:$0xff]
        %v1592 = vld [vmem:[%s489 + $0x1e8] sm:$0xff]
        %v1593 = vld [vmem:[%s489 + $0x1f0] sm:$0xff]
        %v1594 = vld [vmem:[%s489 + $0x1f8] sm:$0xff]
        %v1595 = vld [vmem:[%s499] sm:$0x3]
        %v1597 = vperm.slane %v1595, 0
        %v1598 = vperm.slane %v1595, 1
        %1601 = vmatpush.msra.mxu0 %v1561
        %1602 = vmatpush.msra.mxu0 %v1559
        %1603 = vmatpush.msra.mxu0 %v1557
        %1604 = vmatpush.msra.mxu0 %v1555
        %1605 = vmatpush.msra.mxu0 %v1553
        %1606 = vmatpush.msra.mxu0 %v1551
        %1607 = vmatpush.msra.mxu0 %v1549
        %1608 = vmatpush.msra.mxu0 %v1547
        %1609 = vmatpush.msra.mxu0 %v1545
        %1610 = vmatpush.msra.mxu0 %v1543
        %1611 = vmatpush.msra.mxu0 %v1541
        %1612 = vmatpush.msra.mxu0 %v1539
        %1613 = vmatpush.msra.mxu0 %v1537
        %1614 = vmatpush.msra.mxu0 %v1535
        %1615 = vmatpush.msra.mxu0 %v1533
        %1616 = vmatpush.msra.mxu0 %v1531
        %1617 = vmatmul.f32.gmra.mxu0 %v1169
        %v1618 = vpop.f32.mrf.mxu0
        %v1619 = vadd.f32 %v1597, %v1618
        %1620 = vmatmul.f32.gmra.mxu0 %v1171
        %v1621 = vpop.f32.mrf.mxu0
        %v1622 = vadd.f32 %v1597, %v1621
        %1623 = vmatmul.f32.gmra.mxu0 %v1173
        %v1624 = vpop.f32.mrf.mxu0
        %v1625 = vadd.f32 %v1597, %v1624
        %1626 = vmatmul.f32.gmra.mxu0 %v1175
        %v1627 = vpop.f32.mrf.mxu0
        %v1628 = vadd.f32 %v1597, %v1627
        %1629 = vmatmul.f32.gmra.mxu0 %v1177
        %v1630 = vpop.f32.mrf.mxu0
        %v1631 = vadd.f32 %v1597, %v1630
        %1632 = vmatmul.f32.gmra.mxu0 %v1179
        %v1633 = vpop.f32.mrf.mxu0
        %v1634 = vadd.f32 %v1597, %v1633
        %1635 = vmatmul.f32.gmra.mxu0 %v1181
        %v1636 = vpop.f32.mrf.mxu0
        %v1637 = vadd.f32 %v1597, %v1636
        %1638 = vmatmul.f32.gmra.mxu0 %v1183
        %v1639 = vpop.f32.mrf.mxu0
        %v1640 = vadd.f32 %v1597, %v1639
        %1641 = vmatmul.f32.gmra.mxu0 %v1185
        %v1642 = vpop.f32.mrf.mxu0
        %v1643 = vadd.f32 %v1597, %v1642
        %1644 = vmatmul.f32.gmra.mxu0 %v1187
        %v1645 = vpop.f32.mrf.mxu0
        %v1646 = vadd.f32 %v1597, %v1645
        %1647 = vmatmul.f32.gmra.mxu0 %v1189
        %v1648 = vpop.f32.mrf.mxu0
        %v1649 = vadd.f32 %v1597, %v1648
        %1650 = vmatmul.f32.gmra.mxu0 %v1191
        %v1651 = vpop.f32.mrf.mxu0
        %v1652 = vadd.f32 %v1597, %v1651
        %1653 = vmatmul.f32.gmra.mxu0 %v1193
        %v1654 = vpop.f32.mrf.mxu0
        %v1655 = vadd.f32 %v1597, %v1654
        %1656 = vmatmul.f32.gmra.mxu0 %v1195
        %v1657 = vpop.f32.mrf.mxu0
        %v1658 = vadd.f32 %v1597, %v1657
        %1659 = vmatmul.f32.gmra.mxu0 %v1197
        %v1660 = vpop.f32.mrf.mxu0
        %v1661 = vadd.f32 %v1597, %v1660
        %1662 = vmatmul.f32.gmra.mxu0 %v1199
        %v1663 = vpop.f32.mrf.mxu0
        %v1664 = vadd.f32 %v1597, %v1663
        %1665 = vdwg.mxu0
        %1666 = vmatpush.msra.mxu0 %v1593
        %1667 = vmatpush.msra.mxu0 %v1591
        %1668 = vmatpush.msra.mxu0 %v1589
        %1669 = vmatpush.msra.mxu0 %v1587
        %1670 = vmatpush.msra.mxu0 %v1585
        %1671 = vmatpush.msra.mxu0 %v1583
        %1672 = vmatpush.msra.mxu0 %v1581
        %1673 = vmatpush.msra.mxu0 %v1579
        %1674 = vmatpush.msra.mxu0 %v1577
        %1675 = vmatpush.msra.mxu0 %v1575
        %1676 = vmatpush.msra.mxu0 %v1573
        %1677 = vmatpush.msra.mxu0 %v1571
        %1678 = vmatpush.msra.mxu0 %v1569
        %1679 = vmatpush.msra.mxu0 %v1567
        %1680 = vmatpush.msra.mxu0 %v1565
        %1681 = vmatpush.msra.mxu0 %v1563
        %1682 = vmatmul.f32.gmra.mxu0 %v1170
        %v1683 = vpop.f32.mrf.mxu0
        %v1684 = vadd.f32 %v1619, %v1683
        %1685 = vmatmul.f32.gmra.mxu0 %v1172
        %v1686 = vpop.f32.mrf.mxu0
        %v1687 = vadd.f32 %v1622, %v1686
        %1688 = vmatmul.f32.gmra.mxu0 %v1174
        %v1689 = vpop.f32.mrf.mxu0
        %v1690 = vadd.f32 %v1625, %v1689
        %1691 = vmatmul.f32.gmra.mxu0 %v1176
        %v1692 = vpop.f32.mrf.mxu0
        %v1693 = vadd.f32 %v1628, %v1692
        %1694 = vmatmul.f32.gmra.mxu0 %v1178
        %v1695 = vpop.f32.mrf.mxu0
        %v1696 = vadd.f32 %v1631, %v1695
        %1697 = vmatmul.f32.gmra.mxu0 %v1180
        %v1698 = vpop.f32.mrf.mxu0
        %v1699 = vadd.f32 %v1634, %v1698
        %1700 = vmatmul.f32.gmra.mxu0 %v1182
        %v1701 = vpop.f32.mrf.mxu0
        %v1702 = vadd.f32 %v1637, %v1701
        %1703 = vmatmul.f32.gmra.mxu0 %v1184
        %v1704 = vpop.f32.mrf.mxu0
        %v1705 = vadd.f32 %v1640, %v1704
        %1706 = vmatmul.f32.gmra.mxu0 %v1186
        %v1707 = vpop.f32.mrf.mxu0
        %v1708 = vadd.f32 %v1643, %v1707
        %1709 = vmatmul.f32.gmra.mxu0 %v1188
        %v1710 = vpop.f32.mrf.mxu0
        %v1711 = vadd.f32 %v1646, %v1710
        %1712 = vmatmul.f32.gmra.mxu0 %v1190
        %v1713 = vpop.f32.mrf.mxu0
        %v1714 = vadd.f32 %v1649, %v1713
        %1715 = vmatmul.f32.gmra.mxu0 %v1192
        %v1716 = vpop.f32.mrf.mxu0
        %v1717 = vadd.f32 %v1652, %v1716
        %1718 = vmatmul.f32.gmra.mxu0 %v1194
        %v1719 = vpop.f32.mrf.mxu0
        %v1720 = vadd.f32 %v1655, %v1719
        %1721 = vmatmul.f32.gmra.mxu0 %v1196
        %v1722 = vpop.f32.mrf.mxu0
        %v1723 = vadd.f32 %v1658, %v1722
        %1724 = vmatmul.f32.gmra.mxu0 %v1198
        %v1725 = vpop.f32.mrf.mxu0
        %v1726 = vadd.f32 %v1661, %v1725
        %1727 = vmatmul.f32.gmra.mxu0 %v1200
        %v1728 = vpop.f32.mrf.mxu0
        %v1729 = vadd.f32 %v1664, %v1728
        %1730 = vdwg.mxu0
        %1731 = vmatpush.msra.mxu0 %v1562
        %1732 = vmatpush.msra.mxu0 %v1560
        %1733 = vmatpush.msra.mxu0 %v1558
        %1734 = vmatpush.msra.mxu0 %v1556
        %1735 = vmatpush.msra.mxu0 %v1554
        %1736 = vmatpush.msra.mxu0 %v1552
        %1737 = vmatpush.msra.mxu0 %v1550
        %1738 = vmatpush.msra.mxu0 %v1548
        %1739 = vmatpush.msra.mxu0 %v1546
        %1740 = vmatpush.msra.mxu0 %v1544
        %1741 = vmatpush.msra.mxu0 %v1542
        %1742 = vmatpush.msra.mxu0 %v1540
        %1743 = vmatpush.msra.mxu0 %v1538
        %1744 = vmatpush.msra.mxu0 %v1536
        %1745 = vmatpush.msra.mxu0 %v1534
        %1746 = vmatpush.msra.mxu0 %v1532
        %1747 = vmatmul.f32.gmra.mxu0 %v1169
        %v1748 = vpop.f32.mrf.mxu0
        %v1749 = vadd.f32 %v1598, %v1748
        %1750 = vmatmul.f32.gmra.mxu0 %v1171
        %v1751 = vpop.f32.mrf.mxu0
        %v1752 = vadd.f32 %v1598, %v1751
        %1753 = vmatmul.f32.gmra.mxu0 %v1173
        %v1754 = vpop.f32.mrf.mxu0
        %v1755 = vadd.f32 %v1598, %v1754
        %1756 = vmatmul.f32.gmra.mxu0 %v1175
        %v1757 = vpop.f32.mrf.mxu0
        %v1758 = vadd.f32 %v1598, %v1757
        %1759 = vmatmul.f32.gmra.mxu0 %v1177
        %v1760 = vpop.f32.mrf.mxu0
        %v1761 = vadd.f32 %v1598, %v1760
        %1762 = vmatmul.f32.gmra.mxu0 %v1179
        %v1763 = vpop.f32.mrf.mxu0
        %v1764 = vadd.f32 %v1598, %v1763
        %1765 = vmatmul.f32.gmra.mxu0 %v1181
        %v1766 = vpop.f32.mrf.mxu0
        %v1767 = vadd.f32 %v1598, %v1766
        %1768 = vmatmul.f32.gmra.mxu0 %v1183
        %v1769 = vpop.f32.mrf.mxu0
        %v1770 = vadd.f32 %v1598, %v1769
        %1771 = vmatmul.f32.gmra.mxu0 %v1185
        %v1772 = vpop.f32.mrf.mxu0
        %v1773 = vadd.f32 %v1598, %v1772
        %1774 = vmatmul.f32.gmra.mxu0 %v1187
        %v1775 = vpop.f32.mrf.mxu0
        %v1776 = vadd.f32 %v1598, %v1775
        %1777 = vmatmul.f32.gmra.mxu0 %v1189
        %v1778 = vpop.f32.mrf.mxu0
        %v1779 = vadd.f32 %v1598, %v1778
        %1780 = vmatmul.f32.gmra.mxu0 %v1191
        %v1781 = vpop.f32.mrf.mxu0
        %v1782 = vadd.f32 %v1598, %v1781
        %1783 = vmatmul.f32.gmra.mxu0 %v1193
        %v1784 = vpop.f32.mrf.mxu0
        %v1785 = vadd.f32 %v1598, %v1784
        %1786 = vmatmul.f32.gmra.mxu0 %v1195
        %v1787 = vpop.f32.mrf.mxu0
        %v1788 = vadd.f32 %v1598, %v1787
        %1789 = vmatmul.f32.gmra.mxu0 %v1197
        %v1790 = vpop.f32.mrf.mxu0
        %v1791 = vadd.f32 %v1598, %v1790
        %1792 = vmatmul.f32.gmra.mxu0 %v1199
        %v1793 = vpop.f32.mrf.mxu0
        %v1794 = vadd.f32 %v1598, %v1793
        %1795 = vdwg.mxu0
        %1796 = vmatpush.msra.mxu0 %v1594
        %1797 = vmatpush.msra.mxu0 %v1592
        %1798 = vmatpush.msra.mxu0 %v1590
        %1799 = vmatpush.msra.mxu0 %v1588
        %1800 = vmatpush.msra.mxu0 %v1586
        %1801 = vmatpush.msra.mxu0 %v1584
        %1802 = vmatpush.msra.mxu0 %v1582
        %1803 = vmatpush.msra.mxu0 %v1580
        %1804 = vmatpush.msra.mxu0 %v1578
        %1805 = vmatpush.msra.mxu0 %v1576
        %1806 = vmatpush.msra.mxu0 %v1574
        %1807 = vmatpush.msra.mxu0 %v1572
        %1808 = vmatpush.msra.mxu0 %v1570
        %1809 = vmatpush.msra.mxu0 %v1568
        %1810 = vmatpush.msra.mxu0 %v1566
        %1811 = vmatpush.msra.mxu0 %v1564
        %1812 = vmatmul.f32.gmra.mxu0 %v1170
        %v1813 = vpop.f32.mrf.mxu0
        %v1814 = vadd.f32 %v1749, %v1813
        %1815 = vmatmul.f32.gmra.mxu0 %v1172
        %v1816 = vpop.f32.mrf.mxu0
        %v1817 = vadd.f32 %v1752, %v1816
        %1818 = vmatmul.f32.gmra.mxu0 %v1174
        %v1819 = vpop.f32.mrf.mxu0
        %v1820 = vadd.f32 %v1755, %v1819
        %1821 = vmatmul.f32.gmra.mxu0 %v1176
        %v1822 = vpop.f32.mrf.mxu0
        %v1823 = vadd.f32 %v1758, %v1822
        %1824 = vmatmul.f32.gmra.mxu0 %v1178
        %v1825 = vpop.f32.mrf.mxu0
        %v1826 = vadd.f32 %v1761, %v1825
        %1827 = vmatmul.f32.gmra.mxu0 %v1180
        %v1828 = vpop.f32.mrf.mxu0
        %v1829 = vadd.f32 %v1764, %v1828
        %1830 = vmatmul.f32.gmra.mxu0 %v1182
        %v1831 = vpop.f32.mrf.mxu0
        %v1832 = vadd.f32 %v1767, %v1831
        %1833 = vmatmul.f32.gmra.mxu0 %v1184
        %v1834 = vpop.f32.mrf.mxu0
        %v1835 = vadd.f32 %v1770, %v1834
        %1836 = vmatmul.f32.gmra.mxu0 %v1186
        %v1837 = vpop.f32.mrf.mxu0
        %v1838 = vadd.f32 %v1773, %v1837
        %1839 = vmatmul.f32.gmra.mxu0 %v1188
        %v1840 = vpop.f32.mrf.mxu0
        %v1841 = vadd.f32 %v1776, %v1840
        %1842 = vmatmul.f32.gmra.mxu0 %v1190
        %v1843 = vpop.f32.mrf.mxu0
        %v1844 = vadd.f32 %v1779, %v1843
        %1845 = vmatmul.f32.gmra.mxu0 %v1192
        %v1846 = vpop.f32.mrf.mxu0
        %v1847 = vadd.f32 %v1782, %v1846
        %1848 = vmatmul.f32.gmra.mxu0 %v1194
        %v1849 = vpop.f32.mrf.mxu0
        %v1850 = vadd.f32 %v1785, %v1849
        %1851 = vmatmul.f32.gmra.mxu0 %v1196
        %v1852 = vpop.f32.mrf.mxu0
        %v1853 = vadd.f32 %v1788, %v1852
        %1854 = vmatmul.f32.gmra.mxu0 %v1198
        %v1855 = vpop.f32.mrf.mxu0
        %v1856 = vadd.f32 %v1791, %v1855
        %1857 = vmatmul.f32.gmra.mxu0 %v1200
        %v1858 = vpop.f32.mrf.mxu0
        %v1859 = vadd.f32 %v1794, %v1858
        %1860 = vdwg.mxu0
        %v1861 = vxor.u32 %v1684, 2147483648
        %v1862 = vxor.u32 %v1814, 2147483648
        %v1863 = vxor.u32 %v1687, 2147483648
        %v1864 = vxor.u32 %v1817, 2147483648
        %v1865 = vxor.u32 %v1690, 2147483648
        %v1866 = vxor.u32 %v1820, 2147483648
        %v1867 = vxor.u32 %v1693, 2147483648
        %v1868 = vxor.u32 %v1823, 2147483648
        %v1869 = vxor.u32 %v1696, 2147483648
        %v1870 = vxor.u32 %v1826, 2147483648
        %v1871 = vxor.u32 %v1699, 2147483648
        %v1872 = vxor.u32 %v1829, 2147483648
        %v1873 = vxor.u32 %v1702, 2147483648
        %v1874 = vxor.u32 %v1832, 2147483648
        %v1875 = vxor.u32 %v1705, 2147483648
        %v1876 = vxor.u32 %v1835, 2147483648
        %v1877 = vxor.u32 %v1708, 2147483648
        %v1878 = vxor.u32 %v1838, 2147483648
        %v1879 = vxor.u32 %v1711, 2147483648
        %v1880 = vxor.u32 %v1841, 2147483648
        %v1881 = vxor.u32 %v1714, 2147483648
        %v1882 = vxor.u32 %v1844, 2147483648
        %v1883 = vxor.u32 %v1717, 2147483648
        %v1884 = vxor.u32 %v1847, 2147483648
        %v1885 = vxor.u32 %v1720, 2147483648
        %v1886 = vxor.u32 %v1850, 2147483648
        %v1887 = vxor.u32 %v1723, 2147483648
        %v1888 = vxor.u32 %v1853, 2147483648
        %v1889 = vxor.u32 %v1726, 2147483648
        %v1890 = vxor.u32 %v1856, 2147483648
        %v1891 = vxor.u32 %v1729, 2147483648
        %v1892 = vxor.u32 %v1859, 2147483648
        %v1893 = vmul.f32 %v1861, 1.442695
        %v1894 = vpow.pop %v1893
        %v1895 = vmul.f32 %v1862, 1.442695
        %v1896 = vpow.pop %v1895
        %v1897 = vmul.f32 %v1863, 1.442695
        %v1898 = vpow.pop %v1897
        %v1899 = vmul.f32 %v1864, 1.442695
        %v1900 = vpow.pop %v1899
        %v1901 = vmul.f32 %v1865, 1.442695
        %v1902 = vpow.pop %v1901
        %v1903 = vmul.f32 %v1866, 1.442695
        %v1904 = vpow.pop %v1903
        %v1905 = vmul.f32 %v1867, 1.442695
        %v1906 = vpow.pop %v1905
        %v1907 = vmul.f32 %v1868, 1.442695
        %v1908 = vpow.pop %v1907
        %v1909 = vmul.f32 %v1869, 1.442695
        %v1910 = vpow.pop %v1909
        %v1911 = vmul.f32 %v1870, 1.442695
        %v1912 = vpow.pop %v1911
        %v1913 = vmul.f32 %v1871, 1.442695
        %v1914 = vpow.pop %v1913
        %v1915 = vmul.f32 %v1872, 1.442695
        %v1916 = vpow.pop %v1915
        %v1917 = vmul.f32 %v1873, 1.442695
        %v1918 = vpow.pop %v1917
        %v1919 = vmul.f32 %v1874, 1.442695
        %v1920 = vpow.pop %v1919
        %v1921 = vmul.f32 %v1875, 1.442695
        %v1922 = vpow.pop %v1921
        %v1923 = vmul.f32 %v1876, 1.442695
        %v1924 = vpow.pop %v1923
        %v1925 = vmul.f32 %v1877, 1.442695
        %v1926 = vpow.pop %v1925
        %v1927 = vmul.f32 %v1878, 1.442695
        %v1928 = vpow.pop %v1927
        %v1929 = vmul.f32 %v1879, 1.442695
        %v1930 = vpow.pop %v1929
        %v1931 = vmul.f32 %v1880, 1.442695
        %v1932 = vpow.pop %v1931
        %v1933 = vmul.f32 %v1881, 1.442695
        %v1934 = vpow.pop %v1933
        %v1935 = vmul.f32 %v1882, 1.442695
        %v1936 = vpow.pop %v1935
        %v1937 = vmul.f32 %v1883, 1.442695
        %v1938 = vpow.pop %v1937
        %v1939 = vmul.f32 %v1884, 1.442695
        %v1940 = vpow.pop %v1939
        %v1941 = vmul.f32 %v1885, 1.442695
        %v1942 = vpow.pop %v1941
        %v1943 = vmul.f32 %v1886, 1.442695
        %v1944 = vpow.pop %v1943
        %v1945 = vmul.f32 %v1887, 1.442695
        %v1946 = vpow.pop %v1945
        %v1947 = vmul.f32 %v1888, 1.442695
        %v1948 = vpow.pop %v1947
        %v1949 = vmul.f32 %v1889, 1.442695
        %v1950 = vpow.pop %v1949
        %v1951 = vmul.f32 %v1890, 1.442695
        %v1952 = vpow.pop %v1951
        %v1953 = vmul.f32 %v1891, 1.442695
        %v1954 = vpow.pop %v1953
        %v1955 = vmul.f32 %v1892, 1.442695
        %v1956 = vpow.pop %v1955
        %v1957 = vadd.f32 %v1894, 1.0
        %v1958 = vadd.f32 %v1896, 1.0
        %v1959 = vadd.f32 %v1898, 1.0
        %v1960 = vadd.f32 %v1900, 1.0
        %v1961 = vadd.f32 %v1902, 1.0
        %v1962 = vadd.f32 %v1904, 1.0
        %v1963 = vadd.f32 %v1906, 1.0
        %v1964 = vadd.f32 %v1908, 1.0
        %v1965 = vadd.f32 %v1910, 1.0
        %v1966 = vadd.f32 %v1912, 1.0
        %v1967 = vadd.f32 %v1914, 1.0
        %v1968 = vadd.f32 %v1916, 1.0
        %v1969 = vadd.f32 %v1918, 1.0
        %v1970 = vadd.f32 %v1920, 1.0
        %v1971 = vadd.f32 %v1922, 1.0
        %v1972 = vadd.f32 %v1924, 1.0
        %v1973 = vadd.f32 %v1926, 1.0
        %v1974 = vadd.f32 %v1928, 1.0
        %v1975 = vadd.f32 %v1930, 1.0
        %v1976 = vadd.f32 %v1932, 1.0
        %v1977 = vadd.f32 %v1934, 1.0
        %v1978 = vadd.f32 %v1936, 1.0
        %v1979 = vadd.f32 %v1938, 1.0
        %v1980 = vadd.f32 %v1940, 1.0
        %v1981 = vadd.f32 %v1942, 1.0
        %v1982 = vadd.f32 %v1944, 1.0
        %v1983 = vadd.f32 %v1946, 1.0
        %v1984 = vadd.f32 %v1948, 1.0
        %v1985 = vadd.f32 %v1950, 1.0
        %v1986 = vadd.f32 %v1952, 1.0
        %v1987 = vadd.f32 %v1954, 1.0
        %v1988 = vadd.f32 %v1956, 1.0
        %v1989 = vrcp.pop %v1957
        %v1990 = vmul.f32 %v1957, %v1989
        %v1991 = vsub.f32 1.0, %v1990
        %v1992 = vmul.f32 %v1989, %v1991
        %v1993 = vadd.f32 %v1989, %v1992
        %vm1994 = vweird.f32 %v1957
        %vm1995 = vweird.f32 %v1989
        %vm1996 = vmor %vm1994, %vm1995
        %v1997 = vsel %vm1996, %v1989, %v1993
        %v1998 = vand.u32 2147483647, %v1957
        %vm1999 = vcmp.eq.f32.partialorder %v1998, 8.507059e+37
        %v2000 = vand.u32 %v1957, 2147483648
        %v2001 = vor.u32 1.1754944e-38, %v2000
        %v2002 = vsel %vm1999, %v2001, %v1997
        %v2003 = vmul.f32 1.0, %v2002
        %v2004 = vrcp.pop %v1958
        %v2005 = vmul.f32 %v1958, %v2004
        %v2006 = vsub.f32 1.0, %v2005
        %v2007 = vmul.f32 %v2004, %v2006
        %v2008 = vadd.f32 %v2004, %v2007
        %vm2009 = vweird.f32 %v1958
        %vm2010 = vweird.f32 %v2004
        %vm2011 = vmor %vm2009, %vm2010
        %v2012 = vsel %vm2011, %v2004, %v2008
        %v2013 = vand.u32 2147483647, %v1958
        %vm2014 = vcmp.eq.f32.partialorder %v2013, 8.507059e+37
        %v2015 = vand.u32 %v1958, 2147483648
        %v2016 = vor.u32 1.1754944e-38, %v2015
        %v2017 = vsel %vm2014, %v2016, %v2012
        %v2018 = vmul.f32 1.0, %v2017
        %v2019 = vrcp.pop %v1959
        %v2020 = vmul.f32 %v1959, %v2019
        %v2021 = vsub.f32 1.0, %v2020
        %v2022 = vmul.f32 %v2019, %v2021
        %v2023 = vadd.f32 %v2019, %v2022
        %vm2024 = vweird.f32 %v1959
        %vm2025 = vweird.f32 %v2019
        %vm2026 = vmor %vm2024, %vm2025
        %v2027 = vsel %vm2026, %v2019, %v2023
        %v2028 = vand.u32 2147483647, %v1959
        %vm2029 = vcmp.eq.f32.partialorder %v2028, 8.507059e+37
        %v2030 = vand.u32 %v1959, 2147483648
        %v2031 = vor.u32 1.1754944e-38, %v2030
        %v2032 = vsel %vm2029, %v2031, %v2027
        %v2033 = vmul.f32 1.0, %v2032
        %v2034 = vrcp.pop %v1960
        %v2035 = vmul.f32 %v1960, %v2034
        %v2036 = vsub.f32 1.0, %v2035
        %v2037 = vmul.f32 %v2034, %v2036
        %v2038 = vadd.f32 %v2034, %v2037
        %vm2039 = vweird.f32 %v1960
        %vm2040 = vweird.f32 %v2034
        %vm2041 = vmor %vm2039, %vm2040
        %v2042 = vsel %vm2041, %v2034, %v2038
        %v2043 = vand.u32 2147483647, %v1960
        %vm2044 = vcmp.eq.f32.partialorder %v2043, 8.507059e+37
        %v2045 = vand.u32 %v1960, 2147483648
        %v2046 = vor.u32 1.1754944e-38, %v2045
        %v2047 = vsel %vm2044, %v2046, %v2042
        %v2048 = vmul.f32 1.0, %v2047
        %v2049 = vrcp.pop %v1961
        %v2050 = vmul.f32 %v1961, %v2049
        %v2051 = vsub.f32 1.0, %v2050
        %v2052 = vmul.f32 %v2049, %v2051
        %v2053 = vadd.f32 %v2049, %v2052
        %vm2054 = vweird.f32 %v1961
        %vm2055 = vweird.f32 %v2049
        %vm2056 = vmor %vm2054, %vm2055
        %v2057 = vsel %vm2056, %v2049, %v2053
        %v2058 = vand.u32 2147483647, %v1961
        %vm2059 = vcmp.eq.f32.partialorder %v2058, 8.507059e+37
        %v2060 = vand.u32 %v1961, 2147483648
        %v2061 = vor.u32 1.1754944e-38, %v2060
        %v2062 = vsel %vm2059, %v2061, %v2057
        %v2063 = vmul.f32 1.0, %v2062
        %v2064 = vrcp.pop %v1962
        %v2065 = vmul.f32 %v1962, %v2064
        %v2066 = vsub.f32 1.0, %v2065
        %v2067 = vmul.f32 %v2064, %v2066
        %v2068 = vadd.f32 %v2064, %v2067
        %vm2069 = vweird.f32 %v1962
        %vm2070 = vweird.f32 %v2064
        %vm2071 = vmor %vm2069, %vm2070
        %v2072 = vsel %vm2071, %v2064, %v2068
        %v2073 = vand.u32 2147483647, %v1962
        %vm2074 = vcmp.eq.f32.partialorder %v2073, 8.507059e+37
        %v2075 = vand.u32 %v1962, 2147483648
        %v2076 = vor.u32 1.1754944e-38, %v2075
        %v2077 = vsel %vm2074, %v2076, %v2072
        %v2078 = vmul.f32 1.0, %v2077
        %v2079 = vrcp.pop %v1963
        %v2080 = vmul.f32 %v1963, %v2079
        %v2081 = vsub.f32 1.0, %v2080
        %v2082 = vmul.f32 %v2079, %v2081
        %v2083 = vadd.f32 %v2079, %v2082
        %vm2084 = vweird.f32 %v1963
        %vm2085 = vweird.f32 %v2079
        %vm2086 = vmor %vm2084, %vm2085
        %v2087 = vsel %vm2086, %v2079, %v2083
        %v2088 = vand.u32 2147483647, %v1963
        %vm2089 = vcmp.eq.f32.partialorder %v2088, 8.507059e+37
        %v2090 = vand.u32 %v1963, 2147483648
        %v2091 = vor.u32 1.1754944e-38, %v2090
        %v2092 = vsel %vm2089, %v2091, %v2087
        %v2093 = vmul.f32 1.0, %v2092
        %v2094 = vrcp.pop %v1964
        %v2095 = vmul.f32 %v1964, %v2094
        %v2096 = vsub.f32 1.0, %v2095
        %v2097 = vmul.f32 %v2094, %v2096
        %v2098 = vadd.f32 %v2094, %v2097
        %vm2099 = vweird.f32 %v1964
        %vm2100 = vweird.f32 %v2094
        %vm2101 = vmor %vm2099, %vm2100
        %v2102 = vsel %vm2101, %v2094, %v2098
        %v2103 = vand.u32 2147483647, %v1964
        %vm2104 = vcmp.eq.f32.partialorder %v2103, 8.507059e+37
        %v2105 = vand.u32 %v1964, 2147483648
        %v2106 = vor.u32 1.1754944e-38, %v2105
        %v2107 = vsel %vm2104, %v2106, %v2102
        %v2108 = vmul.f32 1.0, %v2107
        %v2109 = vrcp.pop %v1965
        %v2110 = vmul.f32 %v1965, %v2109
        %v2111 = vsub.f32 1.0, %v2110
        %v2112 = vmul.f32 %v2109, %v2111
        %v2113 = vadd.f32 %v2109, %v2112
        %vm2114 = vweird.f32 %v1965
        %vm2115 = vweird.f32 %v2109
        %vm2116 = vmor %vm2114, %vm2115
        %v2117 = vsel %vm2116, %v2109, %v2113
        %v2118 = vand.u32 2147483647, %v1965
        %vm2119 = vcmp.eq.f32.partialorder %v2118, 8.507059e+37
        %v2120 = vand.u32 %v1965, 2147483648
        %v2121 = vor.u32 1.1754944e-38, %v2120
        %v2122 = vsel %vm2119, %v2121, %v2117
        %v2123 = vmul.f32 1.0, %v2122
        %v2124 = vrcp.pop %v1966
        %v2125 = vmul.f32 %v1966, %v2124
        %v2126 = vsub.f32 1.0, %v2125
        %v2127 = vmul.f32 %v2124, %v2126
        %v2128 = vadd.f32 %v2124, %v2127
        %vm2129 = vweird.f32 %v1966
        %vm2130 = vweird.f32 %v2124
        %vm2131 = vmor %vm2129, %vm2130
        %v2132 = vsel %vm2131, %v2124, %v2128
        %v2133 = vand.u32 2147483647, %v1966
        %vm2134 = vcmp.eq.f32.partialorder %v2133, 8.507059e+37
        %v2135 = vand.u32 %v1966, 2147483648
        %v2136 = vor.u32 1.1754944e-38, %v2135
        %v2137 = vsel %vm2134, %v2136, %v2132
        %v2138 = vmul.f32 1.0, %v2137
        %v2139 = vrcp.pop %v1967
        %v2140 = vmul.f32 %v1967, %v2139
        %v2141 = vsub.f32 1.0, %v2140
        %v2142 = vmul.f32 %v2139, %v2141
        %v2143 = vadd.f32 %v2139, %v2142
        %vm2144 = vweird.f32 %v1967
        %vm2145 = vweird.f32 %v2139
        %vm2146 = vmor %vm2144, %vm2145
        %v2147 = vsel %vm2146, %v2139, %v2143
        %v2148 = vand.u32 2147483647, %v1967
        %vm2149 = vcmp.eq.f32.partialorder %v2148, 8.507059e+37
        %v2150 = vand.u32 %v1967, 2147483648
        %v2151 = vor.u32 1.1754944e-38, %v2150
        %v2152 = vsel %vm2149, %v2151, %v2147
        %v2153 = vmul.f32 1.0, %v2152
        %v2154 = vrcp.pop %v1968
        %v2155 = vmul.f32 %v1968, %v2154
        %v2156 = vsub.f32 1.0, %v2155
        %v2157 = vmul.f32 %v2154, %v2156
        %v2158 = vadd.f32 %v2154, %v2157
        %vm2159 = vweird.f32 %v1968
        %vm2160 = vweird.f32 %v2154
        %vm2161 = vmor %vm2159, %vm2160
        %v2162 = vsel %vm2161, %v2154, %v2158
        %v2163 = vand.u32 2147483647, %v1968
        %vm2164 = vcmp.eq.f32.partialorder %v2163, 8.507059e+37
        %v2165 = vand.u32 %v1968, 2147483648
        %v2166 = vor.u32 1.1754944e-38, %v2165
        %v2167 = vsel %vm2164, %v2166, %v2162
        %v2168 = vmul.f32 1.0, %v2167
        %v2169 = vrcp.pop %v1969
        %v2170 = vmul.f32 %v1969, %v2169
        %v2171 = vsub.f32 1.0, %v2170
        %v2172 = vmul.f32 %v2169, %v2171
        %v2173 = vadd.f32 %v2169, %v2172
        %vm2174 = vweird.f32 %v1969
        %vm2175 = vweird.f32 %v2169
        %vm2176 = vmor %vm2174, %vm2175
        %v2177 = vsel %vm2176, %v2169, %v2173
        %v2178 = vand.u32 2147483647, %v1969
        %vm2179 = vcmp.eq.f32.partialorder %v2178, 8.507059e+37
        %v2180 = vand.u32 %v1969, 2147483648
        %v2181 = vor.u32 1.1754944e-38, %v2180
        %v2182 = vsel %vm2179, %v2181, %v2177
        %v2183 = vmul.f32 1.0, %v2182
        %v2184 = vrcp.pop %v1970
        %v2185 = vmul.f32 %v1970, %v2184
        %v2186 = vsub.f32 1.0, %v2185
        %v2187 = vmul.f32 %v2184, %v2186
        %v2188 = vadd.f32 %v2184, %v2187
        %vm2189 = vweird.f32 %v1970
        %vm2190 = vweird.f32 %v2184
        %vm2191 = vmor %vm2189, %vm2190
        %v2192 = vsel %vm2191, %v2184, %v2188
        %v2193 = vand.u32 2147483647, %v1970
        %vm2194 = vcmp.eq.f32.partialorder %v2193, 8.507059e+37
        %v2195 = vand.u32 %v1970, 2147483648
        %v2196 = vor.u32 1.1754944e-38, %v2195
        %v2197 = vsel %vm2194, %v2196, %v2192
        %v2198 = vmul.f32 1.0, %v2197
        %v2199 = vrcp.pop %v1971
        %v2200 = vmul.f32 %v1971, %v2199
        %v2201 = vsub.f32 1.0, %v2200
        %v2202 = vmul.f32 %v2199, %v2201
        %v2203 = vadd.f32 %v2199, %v2202
        %vm2204 = vweird.f32 %v1971
        %vm2205 = vweird.f32 %v2199
        %vm2206 = vmor %vm2204, %vm2205
        %v2207 = vsel %vm2206, %v2199, %v2203
        %v2208 = vand.u32 2147483647, %v1971
        %vm2209 = vcmp.eq.f32.partialorder %v2208, 8.507059e+37
        %v2210 = vand.u32 %v1971, 2147483648
        %v2211 = vor.u32 1.1754944e-38, %v2210
        %v2212 = vsel %vm2209, %v2211, %v2207
        %v2213 = vmul.f32 1.0, %v2212
        %v2214 = vrcp.pop %v1972
        %v2215 = vmul.f32 %v1972, %v2214
        %v2216 = vsub.f32 1.0, %v2215
        %v2217 = vmul.f32 %v2214, %v2216
        %v2218 = vadd.f32 %v2214, %v2217
        %vm2219 = vweird.f32 %v1972
        %vm2220 = vweird.f32 %v2214
        %vm2221 = vmor %vm2219, %vm2220
        %v2222 = vsel %vm2221, %v2214, %v2218
        %v2223 = vand.u32 2147483647, %v1972
        %vm2224 = vcmp.eq.f32.partialorder %v2223, 8.507059e+37
        %v2225 = vand.u32 %v1972, 2147483648
        %v2226 = vor.u32 1.1754944e-38, %v2225
        %v2227 = vsel %vm2224, %v2226, %v2222
        %v2228 = vmul.f32 1.0, %v2227
        %v2229 = vrcp.pop %v1973
        %v2230 = vmul.f32 %v1973, %v2229
        %v2231 = vsub.f32 1.0, %v2230
        %v2232 = vmul.f32 %v2229, %v2231
        %v2233 = vadd.f32 %v2229, %v2232
        %vm2234 = vweird.f32 %v1973
        %vm2235 = vweird.f32 %v2229
        %vm2236 = vmor %vm2234, %vm2235
        %v2237 = vsel %vm2236, %v2229, %v2233
        %v2238 = vand.u32 2147483647, %v1973
        %vm2239 = vcmp.eq.f32.partialorder %v2238, 8.507059e+37
        %v2240 = vand.u32 %v1973, 2147483648
        %v2241 = vor.u32 1.1754944e-38, %v2240
        %v2242 = vsel %vm2239, %v2241, %v2237
        %v2243 = vmul.f32 1.0, %v2242
        %v2244 = vrcp.pop %v1974
        %v2245 = vmul.f32 %v1974, %v2244
        %v2246 = vsub.f32 1.0, %v2245
        %v2247 = vmul.f32 %v2244, %v2246
        %v2248 = vadd.f32 %v2244, %v2247
        %vm2249 = vweird.f32 %v1974
        %vm2250 = vweird.f32 %v2244
        %vm2251 = vmor %vm2249, %vm2250
        %v2252 = vsel %vm2251, %v2244, %v2248
        %v2253 = vand.u32 2147483647, %v1974
        %vm2254 = vcmp.eq.f32.partialorder %v2253, 8.507059e+37
        %v2255 = vand.u32 %v1974, 2147483648
        %v2256 = vor.u32 1.1754944e-38, %v2255
        %v2257 = vsel %vm2254, %v2256, %v2252
        %v2258 = vmul.f32 1.0, %v2257
        %v2259 = vrcp.pop %v1975
        %v2260 = vmul.f32 %v1975, %v2259
        %v2261 = vsub.f32 1.0, %v2260
        %v2262 = vmul.f32 %v2259, %v2261
        %v2263 = vadd.f32 %v2259, %v2262
        %vm2264 = vweird.f32 %v1975
        %vm2265 = vweird.f32 %v2259
        %vm2266 = vmor %vm2264, %vm2265
        %v2267 = vsel %vm2266, %v2259, %v2263
        %v2268 = vand.u32 2147483647, %v1975
        %vm2269 = vcmp.eq.f32.partialorder %v2268, 8.507059e+37
        %v2270 = vand.u32 %v1975, 2147483648
        %v2271 = vor.u32 1.1754944e-38, %v2270
        %v2272 = vsel %vm2269, %v2271, %v2267
        %v2273 = vmul.f32 1.0, %v2272
        %v2274 = vrcp.pop %v1976
        %v2275 = vmul.f32 %v1976, %v2274
        %v2276 = vsub.f32 1.0, %v2275
        %v2277 = vmul.f32 %v2274, %v2276
        %v2278 = vadd.f32 %v2274, %v2277
        %vm2279 = vweird.f32 %v1976
        %vm2280 = vweird.f32 %v2274
        %vm2281 = vmor %vm2279, %vm2280
        %v2282 = vsel %vm2281, %v2274, %v2278
        %v2283 = vand.u32 2147483647, %v1976
        %vm2284 = vcmp.eq.f32.partialorder %v2283, 8.507059e+37
        %v2285 = vand.u32 %v1976, 2147483648
        %v2286 = vor.u32 1.1754944e-38, %v2285
        %v2287 = vsel %vm2284, %v2286, %v2282
        %v2288 = vmul.f32 1.0, %v2287
        %v2289 = vrcp.pop %v1977
        %v2290 = vmul.f32 %v1977, %v2289
        %v2291 = vsub.f32 1.0, %v2290
        %v2292 = vmul.f32 %v2289, %v2291
        %v2293 = vadd.f32 %v2289, %v2292
        %vm2294 = vweird.f32 %v1977
        %vm2295 = vweird.f32 %v2289
        %vm2296 = vmor %vm2294, %vm2295
        %v2297 = vsel %vm2296, %v2289, %v2293
        %v2298 = vand.u32 2147483647, %v1977
        %vm2299 = vcmp.eq.f32.partialorder %v2298, 8.507059e+37
        %v2300 = vand.u32 %v1977, 2147483648
        %v2301 = vor.u32 1.1754944e-38, %v2300
        %v2302 = vsel %vm2299, %v2301, %v2297
        %v2303 = vmul.f32 1.0, %v2302
        %v2304 = vrcp.pop %v1978
        %v2305 = vmul.f32 %v1978, %v2304
        %v2306 = vsub.f32 1.0, %v2305
        %v2307 = vmul.f32 %v2304, %v2306
        %v2308 = vadd.f32 %v2304, %v2307
        %vm2309 = vweird.f32 %v1978
        %vm2310 = vweird.f32 %v2304
        %vm2311 = vmor %vm2309, %vm2310
        %v2312 = vsel %vm2311, %v2304, %v2308
        %v2313 = vand.u32 2147483647, %v1978
        %vm2314 = vcmp.eq.f32.partialorder %v2313, 8.507059e+37
        %v2315 = vand.u32 %v1978, 2147483648
        %v2316 = vor.u32 1.1754944e-38, %v2315
        %v2317 = vsel %vm2314, %v2316, %v2312
        %v2318 = vmul.f32 1.0, %v2317
        %v2319 = vrcp.pop %v1979
        %v2320 = vmul.f32 %v1979, %v2319
        %v2321 = vsub.f32 1.0, %v2320
        %v2322 = vmul.f32 %v2319, %v2321
        %v2323 = vadd.f32 %v2319, %v2322
        %vm2324 = vweird.f32 %v1979
        %vm2325 = vweird.f32 %v2319
        %vm2326 = vmor %vm2324, %vm2325
        %v2327 = vsel %vm2326, %v2319, %v2323
        %v2328 = vand.u32 2147483647, %v1979
        %vm2329 = vcmp.eq.f32.partialorder %v2328, 8.507059e+37
        %v2330 = vand.u32 %v1979, 2147483648
        %v2331 = vor.u32 1.1754944e-38, %v2330
        %v2332 = vsel %vm2329, %v2331, %v2327
        %v2333 = vmul.f32 1.0, %v2332
        %v2334 = vrcp.pop %v1980
        %v2335 = vmul.f32 %v1980, %v2334
        %v2336 = vsub.f32 1.0, %v2335
        %v2337 = vmul.f32 %v2334, %v2336
        %v2338 = vadd.f32 %v2334, %v2337
        %vm2339 = vweird.f32 %v1980
        %vm2340 = vweird.f32 %v2334
        %vm2341 = vmor %vm2339, %vm2340
        %v2342 = vsel %vm2341, %v2334, %v2338
        %v2343 = vand.u32 2147483647, %v1980
        %vm2344 = vcmp.eq.f32.partialorder %v2343, 8.507059e+37
        %v2345 = vand.u32 %v1980, 2147483648
        %v2346 = vor.u32 1.1754944e-38, %v2345
        %v2347 = vsel %vm2344, %v2346, %v2342
        %v2348 = vmul.f32 1.0, %v2347
        %v2349 = vrcp.pop %v1981
        %v2350 = vmul.f32 %v1981, %v2349
        %v2351 = vsub.f32 1.0, %v2350
        %v2352 = vmul.f32 %v2349, %v2351
        %v2353 = vadd.f32 %v2349, %v2352
        %vm2354 = vweird.f32 %v1981
        %vm2355 = vweird.f32 %v2349
        %vm2356 = vmor %vm2354, %vm2355
        %v2357 = vsel %vm2356, %v2349, %v2353
        %v2358 = vand.u32 2147483647, %v1981
        %vm2359 = vcmp.eq.f32.partialorder %v2358, 8.507059e+37
        %v2360 = vand.u32 %v1981, 2147483648
        %v2361 = vor.u32 1.1754944e-38, %v2360
        %v2362 = vsel %vm2359, %v2361, %v2357
        %v2363 = vmul.f32 1.0, %v2362
        %v2364 = vrcp.pop %v1982
        %v2365 = vmul.f32 %v1982, %v2364
        %v2366 = vsub.f32 1.0, %v2365
        %v2367 = vmul.f32 %v2364, %v2366
        %v2368 = vadd.f32 %v2364, %v2367
        %vm2369 = vweird.f32 %v1982
        %vm2370 = vweird.f32 %v2364
        %vm2371 = vmor %vm2369, %vm2370
        %v2372 = vsel %vm2371, %v2364, %v2368
        %v2373 = vand.u32 2147483647, %v1982
        %vm2374 = vcmp.eq.f32.partialorder %v2373, 8.507059e+37
        %v2375 = vand.u32 %v1982, 2147483648
        %v2376 = vor.u32 1.1754944e-38, %v2375
        %v2377 = vsel %vm2374, %v2376, %v2372
        %v2378 = vmul.f32 1.0, %v2377
        %v2379 = vrcp.pop %v1983
        %v2380 = vmul.f32 %v1983, %v2379
        %v2381 = vsub.f32 1.0, %v2380
        %v2382 = vmul.f32 %v2379, %v2381
        %v2383 = vadd.f32 %v2379, %v2382
        %vm2384 = vweird.f32 %v1983
        %vm2385 = vweird.f32 %v2379
        %vm2386 = vmor %vm2384, %vm2385
        %v2387 = vsel %vm2386, %v2379, %v2383
        %v2388 = vand.u32 2147483647, %v1983
        %vm2389 = vcmp.eq.f32.partialorder %v2388, 8.507059e+37
        %v2390 = vand.u32 %v1983, 2147483648
        %v2391 = vor.u32 1.1754944e-38, %v2390
        %v2392 = vsel %vm2389, %v2391, %v2387
        %v2393 = vmul.f32 1.0, %v2392
        %v2394 = vrcp.pop %v1984
        %v2395 = vmul.f32 %v1984, %v2394
        %v2396 = vsub.f32 1.0, %v2395
        %v2397 = vmul.f32 %v2394, %v2396
        %v2398 = vadd.f32 %v2394, %v2397
        %vm2399 = vweird.f32 %v1984
        %vm2400 = vweird.f32 %v2394
        %vm2401 = vmor %vm2399, %vm2400
        %v2402 = vsel %vm2401, %v2394, %v2398
        %v2403 = vand.u32 2147483647, %v1984
        %vm2404 = vcmp.eq.f32.partialorder %v2403, 8.507059e+37
        %v2405 = vand.u32 %v1984, 2147483648
        %v2406 = vor.u32 1.1754944e-38, %v2405
        %v2407 = vsel %vm2404, %v2406, %v2402
        %v2408 = vmul.f32 1.0, %v2407
        %v2409 = vrcp.pop %v1985
        %v2410 = vmul.f32 %v1985, %v2409
        %v2411 = vsub.f32 1.0, %v2410
        %v2412 = vmul.f32 %v2409, %v2411
        %v2413 = vadd.f32 %v2409, %v2412
        %vm2414 = vweird.f32 %v1985
        %vm2415 = vweird.f32 %v2409
        %vm2416 = vmor %vm2414, %vm2415
        %v2417 = vsel %vm2416, %v2409, %v2413
        %v2418 = vand.u32 2147483647, %v1985
        %vm2419 = vcmp.eq.f32.partialorder %v2418, 8.507059e+37
        %v2420 = vand.u32 %v1985, 2147483648
        %v2421 = vor.u32 1.1754944e-38, %v2420
        %v2422 = vsel %vm2419, %v2421, %v2417
        %v2423 = vmul.f32 1.0, %v2422
        %v2424 = vrcp.pop %v1986
        %v2425 = vmul.f32 %v1986, %v2424
        %v2426 = vsub.f32 1.0, %v2425
        %v2427 = vmul.f32 %v2424, %v2426
        %v2428 = vadd.f32 %v2424, %v2427
        %vm2429 = vweird.f32 %v1986
        %vm2430 = vweird.f32 %v2424
        %vm2431 = vmor %vm2429, %vm2430
        %v2432 = vsel %vm2431, %v2424, %v2428
        %v2433 = vand.u32 2147483647, %v1986
        %vm2434 = vcmp.eq.f32.partialorder %v2433, 8.507059e+37
        %v2435 = vand.u32 %v1986, 2147483648
        %v2436 = vor.u32 1.1754944e-38, %v2435
        %v2437 = vsel %vm2434, %v2436, %v2432
        %v2438 = vmul.f32 1.0, %v2437
        %v2439 = vrcp.pop %v1987
        %v2440 = vmul.f32 %v1987, %v2439
        %v2441 = vsub.f32 1.0, %v2440
        %v2442 = vmul.f32 %v2439, %v2441
        %v2443 = vadd.f32 %v2439, %v2442
        %vm2444 = vweird.f32 %v1987
        %vm2445 = vweird.f32 %v2439
        %vm2446 = vmor %vm2444, %vm2445
        %v2447 = vsel %vm2446, %v2439, %v2443
        %v2448 = vand.u32 2147483647, %v1987
        %vm2449 = vcmp.eq.f32.partialorder %v2448, 8.507059e+37
        %v2450 = vand.u32 %v1987, 2147483648
        %v2451 = vor.u32 1.1754944e-38, %v2450
        %v2452 = vsel %vm2449, %v2451, %v2447
        %v2453 = vmul.f32 1.0, %v2452
        %v2454 = vrcp.pop %v1988
        %v2455 = vmul.f32 %v1988, %v2454
        %v2456 = vsub.f32 1.0, %v2455
        %v2457 = vmul.f32 %v2454, %v2456
        %v2458 = vadd.f32 %v2454, %v2457
        %vm2459 = vweird.f32 %v1988
        %vm2460 = vweird.f32 %v2454
        %vm2461 = vmor %vm2459, %vm2460
        %v2462 = vsel %vm2461, %v2454, %v2458
        %v2463 = vand.u32 2147483647, %v1988
        %vm2464 = vcmp.eq.f32.partialorder %v2463, 8.507059e+37
        %v2465 = vand.u32 %v1988, 2147483648
        %v2466 = vor.u32 1.1754944e-38, %v2465
        %v2467 = vsel %vm2464, %v2466, %v2462
        %v2468 = vmul.f32 1.0, %v2467
        %v2469 = vmul.f32 %v1684, %v2003
        %v2470 = vmul.f32 %v1814, %v2018
        %v2471 = vmul.f32 %v1687, %v2033
        %v2472 = vmul.f32 %v1817, %v2048
        %v2473 = vmul.f32 %v1690, %v2063
        %v2474 = vmul.f32 %v1820, %v2078
        %v2475 = vmul.f32 %v1693, %v2093
        %v2476 = vmul.f32 %v1823, %v2108
        %v2477 = vmul.f32 %v1696, %v2123
        %v2478 = vmul.f32 %v1826, %v2138
        %v2479 = vmul.f32 %v1699, %v2153
        %v2480 = vmul.f32 %v1829, %v2168
        %v2481 = vmul.f32 %v1702, %v2183
        %v2482 = vmul.f32 %v1832, %v2198
        %v2483 = vmul.f32 %v1705, %v2213
        %v2484 = vmul.f32 %v1835, %v2228
        %v2485 = vmul.f32 %v1708, %v2243
        %v2486 = vmul.f32 %v1838, %v2258
        %v2487 = vmul.f32 %v1711, %v2273
        %v2488 = vmul.f32 %v1841, %v2288
        %v2489 = vmul.f32 %v1714, %v2303
        %v2490 = vmul.f32 %v1844, %v2318
        %v2491 = vmul.f32 %v1717, %v2333
        %v2492 = vmul.f32 %v1847, %v2348
        %v2493 = vmul.f32 %v1720, %v2363
        %v2494 = vmul.f32 %v1850, %v2378
        %v2495 = vmul.f32 %v1723, %v2393
        %v2496 = vmul.f32 %v1853, %v2408
        %v2497 = vmul.f32 %v1726, %v2423
        %v2498 = vmul.f32 %v1856, %v2438
        %v2499 = vmul.f32 %v1729, %v2453
        %v2500 = vmul.f32 %v1859, %v2468
        %v2501 = vmul.f32 %v1354, %v2469
        %v2502 = vmul.f32 %v1484, %v2470
        %v2503 = vmul.f32 %v1357, %v2471
        %v2504 = vmul.f32 %v1487, %v2472
        %v2505 = vmul.f32 %v1360, %v2473
        %v2506 = vmul.f32 %v1490, %v2474
        %v2507 = vmul.f32 %v1363, %v2475
        %v2508 = vmul.f32 %v1493, %v2476
        %v2509 = vmul.f32 %v1366, %v2477
        %v2510 = vmul.f32 %v1496, %v2478
        %v2511 = vmul.f32 %v1369, %v2479
        %v2512 = vmul.f32 %v1499, %v2480
        %v2513 = vmul.f32 %v1372, %v2481
        %v2514 = vmul.f32 %v1502, %v2482
        %v2515 = vmul.f32 %v1375, %v2483
        %v2516 = vmul.f32 %v1505, %v2484
        %v2517 = vmul.f32 %v1378, %v2485
        %v2518 = vmul.f32 %v1508, %v2486
        %v2519 = vmul.f32 %v1381, %v2487
        %v2520 = vmul.f32 %v1511, %v2488
        %v2521 = vmul.f32 %v1384, %v2489
        %v2522 = vmul.f32 %v1514, %v2490
        %v2523 = vmul.f32 %v1387, %v2491
        %v2524 = vmul.f32 %v1517, %v2492
        %v2525 = vmul.f32 %v1390, %v2493
        %v2526 = vmul.f32 %v1520, %v2494
        %v2527 = vmul.f32 %v1393, %v2495
        %v2528 = vmul.f32 %v1523, %v2496
        %v2529 = vmul.f32 %v1396, %v2497
        %v2530 = vmul.f32 %v1526, %v2498
        %v2531 = vmul.f32 %v1399, %v2499
        %v2532 = vmul.f32 %v1529, %v2500
        %v2533 = vld [vmem:[#allocation3] sm:$0xff]
        %v2534 = vld [vmem:[#allocation3 + $0x8] sm:$0xff]
        %v2535 = vld [vmem:[#allocation3 + $0x10] sm:$0xff]
        %v2536 = vld [vmem:[#allocation3 + $0x18] sm:$0xff]
        %v2537 = vld [vmem:[#allocation3 + $0x20] sm:$0xff]
        %v2538 = vld [vmem:[#allocation3 + $0x28] sm:$0xff]
        %v2539 = vld [vmem:[#allocation3 + $0x30] sm:$0xff]
        %v2540 = vld [vmem:[#allocation3 + $0x38] sm:$0xff]
        %v2541 = vld [vmem:[#allocation3 + $0x40] sm:$0xff]
        %v2542 = vld [vmem:[#allocation3 + $0x48] sm:$0xff]
        %v2543 = vld [vmem:[#allocation3 + $0x50] sm:$0xff]
        %v2544 = vld [vmem:[#allocation3 + $0x58] sm:$0xff]
        %v2545 = vld [vmem:[#allocation3 + $0x60] sm:$0xff]
        %v2546 = vld [vmem:[#allocation3 + $0x68] sm:$0xff]
        %v2547 = vld [vmem:[#allocation3 + $0x70] sm:$0xff]
        %v2548 = vld [vmem:[#allocation3 + $0x78] sm:$0xff]
        %v2549 = vld [vmem:[#allocation3 + $0x80] sm:$0xff]
        %v2550 = vld [vmem:[#allocation3 + $0x88] sm:$0xff]
        %v2551 = vld [vmem:[#allocation3 + $0x90] sm:$0xff]
        %v2552 = vld [vmem:[#allocation3 + $0x98] sm:$0xff]
        %v2553 = vld [vmem:[#allocation3 + $0xa0] sm:$0xff]
        %v2554 = vld [vmem:[#allocation3 + $0xa8] sm:$0xff]
        %v2555 = vld [vmem:[#allocation3 + $0xb0] sm:$0xff]
        %v2556 = vld [vmem:[#allocation3 + $0xb8] sm:$0xff]
        %v2557 = vld [vmem:[#allocation3 + $0xc0] sm:$0xff]
        %v2558 = vld [vmem:[#allocation3 + $0xc8] sm:$0xff]
        %v2559 = vld [vmem:[#allocation3 + $0xd0] sm:$0xff]
        %v2560 = vld [vmem:[#allocation3 + $0xd8] sm:$0xff]
        %v2561 = vld [vmem:[#allocation3 + $0xe0] sm:$0xff]
        %v2562 = vld [vmem:[#allocation3 + $0xe8] sm:$0xff]
        %v2563 = vld [vmem:[#allocation3 + $0xf0] sm:$0xff]
        %v2564 = vld [vmem:[#allocation3 + $0xf8] sm:$0xff]
        %v2565 = vld [vmem:[%s509] sm:$0xff]
        %v2566 = vld [vmem:[%s509 + $0x8] sm:$0xff]
        %v2567 = vld [vmem:[%s509 + $0x10] sm:$0xff]
        %v2568 = vld [vmem:[%s509 + $0x18] sm:$0xff]
        %v2569 = vld [vmem:[%s509 + $0x20] sm:$0xff]
        %v2570 = vld [vmem:[%s509 + $0x28] sm:$0xff]
        %v2571 = vld [vmem:[%s509 + $0x30] sm:$0xff]
        %v2572 = vld [vmem:[%s509 + $0x38] sm:$0xff]
        %v2573 = vld [vmem:[%s509 + $0x40] sm:$0xff]
        %v2574 = vld [vmem:[%s509 + $0x48] sm:$0xff]
        %v2575 = vld [vmem:[%s509 + $0x50] sm:$0xff]
        %v2576 = vld [vmem:[%s509 + $0x58] sm:$0xff]
        %v2577 = vld [vmem:[%s509 + $0x60] sm:$0xff]
        %v2578 = vld [vmem:[%s509 + $0x68] sm:$0xff]
        %v2579 = vld [vmem:[%s509 + $0x70] sm:$0xff]
        %v2580 = vld [vmem:[%s509 + $0x78] sm:$0xff]
        %v2581 = vld [vmem:[%s509 + $0x80] sm:$0xff]
        %v2582 = vld [vmem:[%s509 + $0x88] sm:$0xff]
        %v2583 = vld [vmem:[%s509 + $0x90] sm:$0xff]
        %v2584 = vld [vmem:[%s509 + $0x98] sm:$0xff]
        %v2585 = vld [vmem:[%s509 + $0xa0] sm:$0xff]
        %v2586 = vld [vmem:[%s509 + $0xa8] sm:$0xff]
        %v2587 = vld [vmem:[%s509 + $0xb0] sm:$0xff]
        %v2588 = vld [vmem:[%s509 + $0xb8] sm:$0xff]
        %v2589 = vld [vmem:[%s509 + $0xc0] sm:$0xff]
        %v2590 = vld [vmem:[%s509 + $0xc8] sm:$0xff]
        %v2591 = vld [vmem:[%s509 + $0xd0] sm:$0xff]
        %v2592 = vld [vmem:[%s509 + $0xd8] sm:$0xff]
        %v2593 = vld [vmem:[%s509 + $0xe0] sm:$0xff]
        %v2594 = vld [vmem:[%s509 + $0xe8] sm:$0xff]
        %v2595 = vld [vmem:[%s509 + $0xf0] sm:$0xff]
        %v2596 = vld [vmem:[%s509 + $0xf8] sm:$0xff]
        %v2597 = vld [vmem:[%s509 + $0x100] sm:$0xff]
        %v2598 = vld [vmem:[%s509 + $0x108] sm:$0xff]
        %v2599 = vld [vmem:[%s509 + $0x110] sm:$0xff]
        %v2600 = vld [vmem:[%s509 + $0x118] sm:$0xff]
        %v2601 = vld [vmem:[%s509 + $0x120] sm:$0xff]
        %v2602 = vld [vmem:[%s509 + $0x128] sm:$0xff]
        %v2603 = vld [vmem:[%s509 + $0x130] sm:$0xff]
        %v2604 = vld [vmem:[%s509 + $0x138] sm:$0xff]
        %v2605 = vld [vmem:[%s509 + $0x140] sm:$0xff]
        %v2606 = vld [vmem:[%s509 + $0x148] sm:$0xff]
        %v2607 = vld [vmem:[%s509 + $0x150] sm:$0xff]
        %v2608 = vld [vmem:[%s509 + $0x158] sm:$0xff]
        %v2609 = vld [vmem:[%s509 + $0x160] sm:$0xff]
        %v2610 = vld [vmem:[%s509 + $0x168] sm:$0xff]
        %v2611 = vld [vmem:[%s509 + $0x170] sm:$0xff]
        %v2612 = vld [vmem:[%s509 + $0x178] sm:$0xff]
        %v2613 = vld [vmem:[%s509 + $0x180] sm:$0xff]
        %v2614 = vld [vmem:[%s509 + $0x188] sm:$0xff]
        %v2615 = vld [vmem:[%s509 + $0x190] sm:$0xff]
        %v2616 = vld [vmem:[%s509 + $0x198] sm:$0xff]
        %v2617 = vld [vmem:[%s509 + $0x1a0] sm:$0xff]
        %v2618 = vld [vmem:[%s509 + $0x1a8] sm:$0xff]
        %v2619 = vld [vmem:[%s509 + $0x1b0] sm:$0xff]
        %v2620 = vld [vmem:[%s509 + $0x1b8] sm:$0xff]
        %v2621 = vld [vmem:[%s509 + $0x1c0] sm:$0xff]
        %v2622 = vld [vmem:[%s509 + $0x1c8] sm:$0xff]
        %v2623 = vld [vmem:[%s509 + $0x1d0] sm:$0xff]
        %v2624 = vld [vmem:[%s509 + $0x1d8] sm:$0xff]
        %v2625 = vld [vmem:[%s509 + $0x1e0] sm:$0xff]
        %v2626 = vld [vmem:[%s509 + $0x1e8] sm:$0xff]
        %v2627 = vld [vmem:[%s509 + $0x1f0] sm:$0xff]
        %v2628 = vld [vmem:[%s509 + $0x1f8] sm:$0xff]
        %2629 = vmatpush.msra.mxu0 %v2595
        %2630 = vmatpush.msra.mxu0 %v2593
        %2631 = vmatpush.msra.mxu0 %v2591
        %2632 = vmatpush.msra.mxu0 %v2589
        %2633 = vmatpush.msra.mxu0 %v2587
        %2634 = vmatpush.msra.mxu0 %v2585
        %2635 = vmatpush.msra.mxu0 %v2583
        %2636 = vmatpush.msra.mxu0 %v2581
        %2637 = vmatpush.msra.mxu0 %v2579
        %2638 = vmatpush.msra.mxu0 %v2577
        %2639 = vmatpush.msra.mxu0 %v2575
        %2640 = vmatpush.msra.mxu0 %v2573
        %2641 = vmatpush.msra.mxu0 %v2571
        %2642 = vmatpush.msra.mxu0 %v2569
        %2643 = vmatpush.msra.mxu0 %v2567
        %2644 = vmatpush.msra.mxu0 %v2565
        %2645 = vmatmul.f32.gmra.mxu0 %v2501
        %v2646 = vpop.f32.mrf.mxu0
        %v2647 = vadd.f32 0.0, %v2646
        %2648 = vmatmul.f32.gmra.mxu0 %v2503
        %v2649 = vpop.f32.mrf.mxu0
        %v2650 = vadd.f32 0.0, %v2649
        %2651 = vmatmul.f32.gmra.mxu0 %v2505
        %v2652 = vpop.f32.mrf.mxu0
        %v2653 = vadd.f32 0.0, %v2652
        %2654 = vmatmul.f32.gmra.mxu0 %v2507
        %v2655 = vpop.f32.mrf.mxu0
        %v2656 = vadd.f32 0.0, %v2655
        %2657 = vmatmul.f32.gmra.mxu0 %v2509
        %v2658 = vpop.f32.mrf.mxu0
        %v2659 = vadd.f32 0.0, %v2658
        %2660 = vmatmul.f32.gmra.mxu0 %v2511
        %v2661 = vpop.f32.mrf.mxu0
        %v2662 = vadd.f32 0.0, %v2661
        %2663 = vmatmul.f32.gmra.mxu0 %v2513
        %v2664 = vpop.f32.mrf.mxu0
        %v2665 = vadd.f32 0.0, %v2664
        %2666 = vmatmul.f32.gmra.mxu0 %v2515
        %v2667 = vpop.f32.mrf.mxu0
        %v2668 = vadd.f32 0.0, %v2667
        %2669 = vmatmul.f32.gmra.mxu0 %v2517
        %v2670 = vpop.f32.mrf.mxu0
        %v2671 = vadd.f32 0.0, %v2670
        %2672 = vmatmul.f32.gmra.mxu0 %v2519
        %v2673 = vpop.f32.mrf.mxu0
        %v2674 = vadd.f32 0.0, %v2673
        %2675 = vmatmul.f32.gmra.mxu0 %v2521
        %v2676 = vpop.f32.mrf.mxu0
        %v2677 = vadd.f32 0.0, %v2676
        %2678 = vmatmul.f32.gmra.mxu0 %v2523
        %v2679 = vpop.f32.mrf.mxu0
        %v2680 = vadd.f32 0.0, %v2679
        %2681 = vmatmul.f32.gmra.mxu0 %v2525
        %v2682 = vpop.f32.mrf.mxu0
        %v2683 = vadd.f32 0.0, %v2682
        %2684 = vmatmul.f32.gmra.mxu0 %v2527
        %v2685 = vpop.f32.mrf.mxu0
        %v2686 = vadd.f32 0.0, %v2685
        %2687 = vmatmul.f32.gmra.mxu0 %v2529
        %v2688 = vpop.f32.mrf.mxu0
        %v2689 = vadd.f32 0.0, %v2688
        %2690 = vmatmul.f32.gmra.mxu0 %v2531
        %v2691 = vpop.f32.mrf.mxu0
        %v2692 = vadd.f32 0.0, %v2691
        %2693 = vdwg.mxu0
        %2694 = vmatpush.msra.mxu0 %v2627
        %2695 = vmatpush.msra.mxu0 %v2625
        %2696 = vmatpush.msra.mxu0 %v2623
        %2697 = vmatpush.msra.mxu0 %v2621
        %2698 = vmatpush.msra.mxu0 %v2619
        %2699 = vmatpush.msra.mxu0 %v2617
        %2700 = vmatpush.msra.mxu0 %v2615
        %2701 = vmatpush.msra.mxu0 %v2613
        %2702 = vmatpush.msra.mxu0 %v2611
        %2703 = vmatpush.msra.mxu0 %v2609
        %2704 = vmatpush.msra.mxu0 %v2607
        %2705 = vmatpush.msra.mxu0 %v2605
        %2706 = vmatpush.msra.mxu0 %v2603
        %2707 = vmatpush.msra.mxu0 %v2601
        %2708 = vmatpush.msra.mxu0 %v2599
        %2709 = vmatpush.msra.mxu0 %v2597
        %2710 = vmatmul.f32.gmra.mxu0 %v2502
        %v2711 = vpop.f32.mrf.mxu0
        %v2712 = vadd.f32 %v2647, %v2711
        %2713 = vmatmul.f32.gmra.mxu0 %v2504
        %v2714 = vpop.f32.mrf.mxu0
        %v2715 = vadd.f32 %v2650, %v2714
        %2716 = vmatmul.f32.gmra.mxu0 %v2506
        %v2717 = vpop.f32.mrf.mxu0
        %v2718 = vadd.f32 %v2653, %v2717
        %2719 = vmatmul.f32.gmra.mxu0 %v2508
        %v2720 = vpop.f32.mrf.mxu0
        %v2721 = vadd.f32 %v2656, %v2720
        %2722 = vmatmul.f32.gmra.mxu0 %v2510
        %v2723 = vpop.f32.mrf.mxu0
        %v2724 = vadd.f32 %v2659, %v2723
        %2725 = vmatmul.f32.gmra.mxu0 %v2512
        %v2726 = vpop.f32.mrf.mxu0
        %v2727 = vadd.f32 %v2662, %v2726
        %2728 = vmatmul.f32.gmra.mxu0 %v2514
        %v2729 = vpop.f32.mrf.mxu0
        %v2730 = vadd.f32 %v2665, %v2729
        %2731 = vmatmul.f32.gmra.mxu0 %v2516
        %v2732 = vpop.f32.mrf.mxu0
        %v2733 = vadd.f32 %v2668, %v2732
        %2734 = vmatmul.f32.gmra.mxu0 %v2518
        %v2735 = vpop.f32.mrf.mxu0
        %v2736 = vadd.f32 %v2671, %v2735
        %2737 = vmatmul.f32.gmra.mxu0 %v2520
        %v2738 = vpop.f32.mrf.mxu0
        %v2739 = vadd.f32 %v2674, %v2738
        %2740 = vmatmul.f32.gmra.mxu0 %v2522
        %v2741 = vpop.f32.mrf.mxu0
        %v2742 = vadd.f32 %v2677, %v2741
        %2743 = vmatmul.f32.gmra.mxu0 %v2524
        %v2744 = vpop.f32.mrf.mxu0
        %v2745 = vadd.f32 %v2680, %v2744
        %2746 = vmatmul.f32.gmra.mxu0 %v2526
        %v2747 = vpop.f32.mrf.mxu0
        %v2748 = vadd.f32 %v2683, %v2747
        %2749 = vmatmul.f32.gmra.mxu0 %v2528
        %v2750 = vpop.f32.mrf.mxu0
        %v2751 = vadd.f32 %v2686, %v2750
        %2752 = vmatmul.f32.gmra.mxu0 %v2530
        %v2753 = vpop.f32.mrf.mxu0
        %v2754 = vadd.f32 %v2689, %v2753
        %2755 = vmatmul.f32.gmra.mxu0 %v2532
        %v2756 = vpop.f32.mrf.mxu0
        %v2757 = vadd.f32 %v2692, %v2756
        %2758 = vdwg.mxu0
        %2759 = vmatpush.msra.mxu0 %v2596
        %2760 = vmatpush.msra.mxu0 %v2594
        %2761 = vmatpush.msra.mxu0 %v2592
        %2762 = vmatpush.msra.mxu0 %v2590
        %2763 = vmatpush.msra.mxu0 %v2588
        %2764 = vmatpush.msra.mxu0 %v2586
        %2765 = vmatpush.msra.mxu0 %v2584
        %2766 = vmatpush.msra.mxu0 %v2582
        %2767 = vmatpush.msra.mxu0 %v2580
        %2768 = vmatpush.msra.mxu0 %v2578
        %2769 = vmatpush.msra.mxu0 %v2576
        %2770 = vmatpush.msra.mxu0 %v2574
        %2771 = vmatpush.msra.mxu0 %v2572
        %2772 = vmatpush.msra.mxu0 %v2570
        %2773 = vmatpush.msra.mxu0 %v2568
        %2774 = vmatpush.msra.mxu0 %v2566
        %2775 = vmatmul.f32.gmra.mxu0 %v2501
        %v2776 = vpop.f32.mrf.mxu0
        %v2777 = vadd.f32 0.0, %v2776
        %2778 = vmatmul.f32.gmra.mxu0 %v2503
        %v2779 = vpop.f32.mrf.mxu0
        %v2780 = vadd.f32 0.0, %v2779
        %2781 = vmatmul.f32.gmra.mxu0 %v2505
        %v2782 = vpop.f32.mrf.mxu0
        %v2783 = vadd.f32 0.0, %v2782
        %2784 = vmatmul.f32.gmra.mxu0 %v2507
        %v2785 = vpop.f32.mrf.mxu0
        %v2786 = vadd.f32 0.0, %v2785
        %2787 = vmatmul.f32.gmra.mxu0 %v2509
        %v2788 = vpop.f32.mrf.mxu0
        %v2789 = vadd.f32 0.0, %v2788
        %2790 = vmatmul.f32.gmra.mxu0 %v2511
        %v2791 = vpop.f32.mrf.mxu0
        %v2792 = vadd.f32 0.0, %v2791
        %2793 = vmatmul.f32.gmra.mxu0 %v2513
        %v2794 = vpop.f32.mrf.mxu0
        %v2795 = vadd.f32 0.0, %v2794
        %2796 = vmatmul.f32.gmra.mxu0 %v2515
        %v2797 = vpop.f32.mrf.mxu0
        %v2798 = vadd.f32 0.0, %v2797
        %2799 = vmatmul.f32.gmra.mxu0 %v2517
        %v2800 = vpop.f32.mrf.mxu0
        %v2801 = vadd.f32 0.0, %v2800
        %2802 = vmatmul.f32.gmra.mxu0 %v2519
        %v2803 = vpop.f32.mrf.mxu0
        %v2804 = vadd.f32 0.0, %v2803
        %2805 = vmatmul.f32.gmra.mxu0 %v2521
        %v2806 = vpop.f32.mrf.mxu0
        %v2807 = vadd.f32 0.0, %v2806
        %2808 = vmatmul.f32.gmra.mxu0 %v2523
        %v2809 = vpop.f32.mrf.mxu0
        %v2810 = vadd.f32 0.0, %v2809
        %2811 = vmatmul.f32.gmra.mxu0 %v2525
        %v2812 = vpop.f32.mrf.mxu0
        %v2813 = vadd.f32 0.0, %v2812
        %2814 = vmatmul.f32.gmra.mxu0 %v2527
        %v2815 = vpop.f32.mrf.mxu0
        %v2816 = vadd.f32 0.0, %v2815
        %2817 = vmatmul.f32.gmra.mxu0 %v2529
        %v2818 = vpop.f32.mrf.mxu0
        %v2819 = vadd.f32 0.0, %v2818
        %2820 = vmatmul.f32.gmra.mxu0 %v2531
        %v2821 = vpop.f32.mrf.mxu0
        %v2822 = vadd.f32 0.0, %v2821
        %2823 = vdwg.mxu0
        %2824 = vmatpush.msra.mxu0 %v2628
        %2825 = vmatpush.msra.mxu0 %v2626
        %2826 = vmatpush.msra.mxu0 %v2624
        %2827 = vmatpush.msra.mxu0 %v2622
        %2828 = vmatpush.msra.mxu0 %v2620
        %2829 = vmatpush.msra.mxu0 %v2618
        %2830 = vmatpush.msra.mxu0 %v2616
        %2831 = vmatpush.msra.mxu0 %v2614
        %2832 = vmatpush.msra.mxu0 %v2612
        %2833 = vmatpush.msra.mxu0 %v2610
        %2834 = vmatpush.msra.mxu0 %v2608
        %2835 = vmatpush.msra.mxu0 %v2606
        %2836 = vmatpush.msra.mxu0 %v2604
        %2837 = vmatpush.msra.mxu0 %v2602
        %2838 = vmatpush.msra.mxu0 %v2600
        %2839 = vmatpush.msra.mxu0 %v2598
        %2840 = vmatmul.f32.gmra.mxu0 %v2502
        %v2841 = vpop.f32.mrf.mxu0
        %v2842 = vadd.f32 %v2777, %v2841
        %2843 = vmatmul.f32.gmra.mxu0 %v2504
        %v2844 = vpop.f32.mrf.mxu0
        %v2845 = vadd.f32 %v2780, %v2844
        %2846 = vmatmul.f32.gmra.mxu0 %v2506
        %v2847 = vpop.f32.mrf.mxu0
        %v2848 = vadd.f32 %v2783, %v2847
        %2849 = vmatmul.f32.gmra.mxu0 %v2508
        %v2850 = vpop.f32.mrf.mxu0
        %v2851 = vadd.f32 %v2786, %v2850
        %2852 = vmatmul.f32.gmra.mxu0 %v2510
        %v2853 = vpop.f32.mrf.mxu0
        %v2854 = vadd.f32 %v2789, %v2853
        %2855 = vmatmul.f32.gmra.mxu0 %v2512
        %v2856 = vpop.f32.mrf.mxu0
        %v2857 = vadd.f32 %v2792, %v2856
        %2858 = vmatmul.f32.gmra.mxu0 %v2514
        %v2859 = vpop.f32.mrf.mxu0
        %v2860 = vadd.f32 %v2795, %v2859
        %2861 = vmatmul.f32.gmra.mxu0 %v2516
        %v2862 = vpop.f32.mrf.mxu0
        %v2863 = vadd.f32 %v2798, %v2862
        %2864 = vmatmul.f32.gmra.mxu0 %v2518
        %v2865 = vpop.f32.mrf.mxu0
        %v2866 = vadd.f32 %v2801, %v2865
        %2867 = vmatmul.f32.gmra.mxu0 %v2520
        %v2868 = vpop.f32.mrf.mxu0
        %v2869 = vadd.f32 %v2804, %v2868
        %2870 = vmatmul.f32.gmra.mxu0 %v2522
        %v2871 = vpop.f32.mrf.mxu0
        %v2872 = vadd.f32 %v2807, %v2871
        %2873 = vmatmul.f32.gmra.mxu0 %v2524
        %v2874 = vpop.f32.mrf.mxu0
        %v2875 = vadd.f32 %v2810, %v2874
        %2876 = vmatmul.f32.gmra.mxu0 %v2526
        %v2877 = vpop.f32.mrf.mxu0
        %v2878 = vadd.f32 %v2813, %v2877
        %2879 = vmatmul.f32.gmra.mxu0 %v2528
        %v2880 = vpop.f32.mrf.mxu0
        %v2881 = vadd.f32 %v2816, %v2880
        %2882 = vmatmul.f32.gmra.mxu0 %v2530
        %v2883 = vpop.f32.mrf.mxu0
        %v2884 = vadd.f32 %v2819, %v2883
        %2885 = vmatmul.f32.gmra.mxu0 %v2532
        %v2886 = vpop.f32.mrf.mxu0
        %v2887 = vadd.f32 %v2822, %v2886
        %2888 = vdwg.mxu0
        %v2889 = vadd.f32 %v2533, %v2712
        %v2890 = vadd.f32 %v2534, %v2842
        %v2891 = vadd.f32 %v2535, %v2715
        %v2892 = vadd.f32 %v2536, %v2845
        %v2893 = vadd.f32 %v2537, %v2718
        %v2894 = vadd.f32 %v2538, %v2848
        %v2895 = vadd.f32 %v2539, %v2721
        %v2896 = vadd.f32 %v2540, %v2851
        %v2897 = vadd.f32 %v2541, %v2724
        %v2898 = vadd.f32 %v2542, %v2854
        %v2899 = vadd.f32 %v2543, %v2727
        %v2900 = vadd.f32 %v2544, %v2857
        %v2901 = vadd.f32 %v2545, %v2730
        %v2902 = vadd.f32 %v2546, %v2860
        %v2903 = vadd.f32 %v2547, %v2733
        %v2904 = vadd.f32 %v2548, %v2863
        %v2905 = vadd.f32 %v2549, %v2736
        %v2906 = vadd.f32 %v2550, %v2866
        %v2907 = vadd.f32 %v2551, %v2739
        %v2908 = vadd.f32 %v2552, %v2869
        %v2909 = vadd.f32 %v2553, %v2742
        %v2910 = vadd.f32 %v2554, %v2872
        %v2911 = vadd.f32 %v2555, %v2745
        %v2912 = vadd.f32 %v2556, %v2875
        %v2913 = vadd.f32 %v2557, %v2748
        %v2914 = vadd.f32 %v2558, %v2878
        %v2915 = vadd.f32 %v2559, %v2751
        %v2916 = vadd.f32 %v2560, %v2881
        %v2917 = vadd.f32 %v2561, %v2754
        %v2918 = vadd.f32 %v2562, %v2884
        %v2919 = vadd.f32 %v2563, %v2757
        %v2920 = vadd.f32 %v2564, %v2887
        %2921 = vst [vmem:[#allocation3] sm:$0xff] %v2889
        %2922 = vst [vmem:[#allocation3 + $0x8] sm:$0xff] %v2890
        %2923 = vst [vmem:[#allocation3 + $0x10] sm:$0xff] %v2891
        %2924 = vst [vmem:[#allocation3 + $0x18] sm:$0xff] %v2892
        %2925 = vst [vmem:[#allocation3 + $0x20] sm:$0xff] %v2893
        %2926 = vst [vmem:[#allocation3 + $0x28] sm:$0xff] %v2894
        %2927 = vst [vmem:[#allocation3 + $0x30] sm:$0xff] %v2895
        %2928 = vst [vmem:[#allocation3 + $0x38] sm:$0xff] %v2896
        %2929 = vst [vmem:[#allocation3 + $0x40] sm:$0xff] %v2897
        %2930 = vst [vmem:[#allocation3 + $0x48] sm:$0xff] %v2898
        %2931 = vst [vmem:[#allocation3 + $0x50] sm:$0xff] %v2899
        %2932 = vst [vmem:[#allocation3 + $0x58] sm:$0xff] %v2900
        %2933 = vst [vmem:[#allocation3 + $0x60] sm:$0xff] %v2901
        %2934 = vst [vmem:[#allocation3 + $0x68] sm:$0xff] %v2902
        %2935 = vst [vmem:[#allocation3 + $0x70] sm:$0xff] %v2903
        %2936 = vst [vmem:[#allocation3 + $0x78] sm:$0xff] %v2904
        %2937 = vst [vmem:[#allocation3 + $0x80] sm:$0xff] %v2905
        %2938 = vst [vmem:[#allocation3 + $0x88] sm:$0xff] %v2906
        %2939 = vst [vmem:[#allocation3 + $0x90] sm:$0xff] %v2907
        %2940 = vst [vmem:[#allocation3 + $0x98] sm:$0xff] %v2908
        %2941 = vst [vmem:[#allocation3 + $0xa0] sm:$0xff] %v2909
        %2942 = vst [vmem:[#allocation3 + $0xa8] sm:$0xff] %v2910
        %2943 = vst [vmem:[#allocation3 + $0xb0] sm:$0xff] %v2911
        %2944 = vst [vmem:[#allocation3 + $0xb8] sm:$0xff] %v2912
        %2945 = vst [vmem:[#allocation3 + $0xc0] sm:$0xff] %v2913
        %2946 = vst [vmem:[#allocation3 + $0xc8] sm:$0xff] %v2914
        %2947 = vst [vmem:[#allocation3 + $0xd0] sm:$0xff] %v2915
        %2948 = vst [vmem:[#allocation3 + $0xd8] sm:$0xff] %v2916
        %2949 = vst [vmem:[#allocation3 + $0xe0] sm:$0xff] %v2917
        %2950 = vst [vmem:[#allocation3 + $0xe8] sm:$0xff] %v2918
        %2951 = vst [vmem:[#allocation3 + $0xf0] sm:$0xff] %v2919
        %2952 = vst [vmem:[#allocation3 + $0xf8] sm:$0xff] %v2920
        %p2953 = scmp.eq.s32.totalorder %s38, 1
        // Predicated region
        $region89: #{tpu_custom_call.1} parent=55 // pred_check
          %p2954 = pneg %p2953
        $region90: #{tpu_custom_call.1} parent=55 // pred_check_branch
          %2956 = sbr.rel (%p2954) target = $region92
        $region91: #{tpu_custom_call.1} parent=55 // pred_region
          %v2957 = vld [vmem:[#allocation3] sm:$0xff]
          %v2958 = vld [vmem:[#allocation3 + $0x8] sm:$0xff]
          %v2959 = vld [vmem:[#allocation3 + $0x10] sm:$0xff]
          %v2960 = vld [vmem:[#allocation3 + $0x18] sm:$0xff]
          %v2961 = vld [vmem:[#allocation3 + $0x20] sm:$0xff]
          %v2962 = vld [vmem:[#allocation3 + $0x28] sm:$0xff]
          %v2963 = vld [vmem:[#allocation3 + $0x30] sm:$0xff]
          %v2964 = vld [vmem:[#allocation3 + $0x38] sm:$0xff]
          %v2965 = vld [vmem:[#allocation3 + $0x40] sm:$0xff]
          %v2966 = vld [vmem:[#allocation3 + $0x48] sm:$0xff]
          %v2967 = vld [vmem:[#allocation3 + $0x50] sm:$0xff]
          %v2968 = vld [vmem:[#allocation3 + $0x58] sm:$0xff]
          %v2969 = vld [vmem:[#allocation3 + $0x60] sm:$0xff]
          %v2970 = vld [vmem:[#allocation3 + $0x68] sm:$0xff]
          %v2971 = vld [vmem:[#allocation3 + $0x70] sm:$0xff]
          %v2972 = vld [vmem:[#allocation3 + $0x78] sm:$0xff]
          %v2973 = vld [vmem:[#allocation3 + $0x80] sm:$0xff]
          %v2974 = vld [vmem:[#allocation3 + $0x88] sm:$0xff]
          %v2975 = vld [vmem:[#allocation3 + $0x90] sm:$0xff]
          %v2976 = vld [vmem:[#allocation3 + $0x98] sm:$0xff]
          %v2977 = vld [vmem:[#allocation3 + $0xa0] sm:$0xff]
          %v2978 = vld [vmem:[#allocation3 + $0xa8] sm:$0xff]
          %v2979 = vld [vmem:[#allocation3 + $0xb0] sm:$0xff]
          %v2980 = vld [vmem:[#allocation3 + $0xb8] sm:$0xff]
          %v2981 = vld [vmem:[#allocation3 + $0xc0] sm:$0xff]
          %v2982 = vld [vmem:[#allocation3 + $0xc8] sm:$0xff]
          %v2983 = vld [vmem:[#allocation3 + $0xd0] sm:$0xff]
          %v2984 = vld [vmem:[#allocation3 + $0xd8] sm:$0xff]
          %v2985 = vld [vmem:[#allocation3 + $0xe0] sm:$0xff]
          %v2986 = vld [vmem:[#allocation3 + $0xe8] sm:$0xff]
          %v2987 = vld [vmem:[#allocation3 + $0xf0] sm:$0xff]
          %v2988 = vld [vmem:[#allocation3 + $0xf8] sm:$0xff]
          %2989 = vst [vmem:[%s568] sm:$0xff] %v2957
          %2990 = vst [vmem:[%s568 + $0x8] sm:$0xff] %v2958
          %2991 = vst [vmem:[%s568 + $0x10] sm:$0xff] %v2959
          %2992 = vst [vmem:[%s568 + $0x18] sm:$0xff] %v2960
          %2993 = vst [vmem:[%s568 + $0x20] sm:$0xff] %v2961
          %2994 = vst [vmem:[%s568 + $0x28] sm:$0xff] %v2962
          %2995 = vst [vmem:[%s568 + $0x30] sm:$0xff] %v2963
          %2996 = vst [vmem:[%s568 + $0x38] sm:$0xff] %v2964
          %2997 = vst [vmem:[%s568 + $0x40] sm:$0xff] %v2965
          %2998 = vst [vmem:[%s568 + $0x48] sm:$0xff] %v2966
          %2999 = vst [vmem:[%s568 + $0x50] sm:$0xff] %v2967
          %3000 = vst [vmem:[%s568 + $0x58] sm:$0xff] %v2968
          %3001 = vst [vmem:[%s568 + $0x60] sm:$0xff] %v2969
          %3002 = vst [vmem:[%s568 + $0x68] sm:$0xff] %v2970
          %3003 = vst [vmem:[%s568 + $0x70] sm:$0xff] %v2971
          %3004 = vst [vmem:[%s568 + $0x78] sm:$0xff] %v2972
          %3005 = vst [vmem:[%s568 + $0x80] sm:$0xff] %v2973
          %3006 = vst [vmem:[%s568 + $0x88] sm:$0xff] %v2974
          %3007 = vst [vmem:[%s568 + $0x90] sm:$0xff] %v2975
          %3008 = vst [vmem:[%s568 + $0x98] sm:$0xff] %v2976
          %3009 = vst [vmem:[%s568 + $0xa0] sm:$0xff] %v2977
          %3010 = vst [vmem:[%s568 + $0xa8] sm:$0xff] %v2978
          %3011 = vst [vmem:[%s568 + $0xb0] sm:$0xff] %v2979
          %3012 = vst [vmem:[%s568 + $0xb8] sm:$0xff] %v2980
          %3013 = vst [vmem:[%s568 + $0xc0] sm:$0xff] %v2981
          %3014 = vst [vmem:[%s568 + $0xc8] sm:$0xff] %v2982
          %3015 = vst [vmem:[%s568 + $0xd0] sm:$0xff] %v2983
          %3016 = vst [vmem:[%s568 + $0xd8] sm:$0xff] %v2984
          %3017 = vst [vmem:[%s568 + $0xe0] sm:$0xff] %v2985
          %3018 = vst [vmem:[%s568 + $0xe8] sm:$0xff] %v2986
          %3019 = vst [vmem:[%s568 + $0xf0] sm:$0xff] %v2987
          %3020 = vst [vmem:[%s568 + $0xf8] sm:$0xff] %v2988
        $region92: #{tpu_custom_call.1} parent=55 // pred_fallthru
          _
        %s3021 = sand.u32 %s272, 1
        %s3022 = scalar_lea.sflag [#allocation6], %s3021
        %s3023 = sand.u32 %s272, 1
        %s3024 = smul.addr %s3023, 256
        %s3025 = scalar_lea.vmem [#allocation16], %s3024
        // Predicated region
        $region93: #{tpu_custom_call.1} parent=55 // pred_check
          %p3026 = pneg %p282
        $region94: #{tpu_custom_call.1} parent=55 // pred_check_branch
          %3028 = sbr.rel (%p3026) target = $region96
        $region95: #{tpu_custom_call.1} parent=55 // pred_region
          %s3029 = smul.u32 16, %s37
          %3031 = vsyncadd %s3022, 0
          %s3032 = smul.addr %s3029, 2
          %s3033 = smul.addr %s3032, 8
          %s3034 = scalar_lea.hbm %s9, %s3033
          %s3035 = sshll.u32 %s3025, 4
          %s3036 = int_to_ptr.vmem [resolvable:$true] %s3035
          %s3037 = sshll.u32 %s3034, 4
          %s3038 = int_to_ptr.hbm [resolvable:$true] %s3037
          %3043 = dma.vmem_to_hbm [thread:$0]  %s3036, 4096, %s3038, %s3022, 256, 256, 16
        $region96: #{tpu_custom_call.1} parent=55 // pred_fallthru
          _
      $region56: #{tpu_custom_call.1} parent=5 // pred_fallthru
        _
      %p3044 = scmp.le.s32.totalorder 2, %s28
      // Predicated region
      $region97: #{tpu_custom_call.1} parent=5 // pred_check
        %p3045 = pneg %p3044
      $region98: #{tpu_custom_call.1} parent=5 // pred_check_branch
        %3047 = sbr.rel (%p3045) target = $region100
      $region99: #{tpu_custom_call.1} parent=5 // pred_region
        %s3048 = ssub.s32 %s28, 2
        // Predicated region
        $region101: #{tpu_custom_call.1} parent=99 // pred_check
          %p3049 = pneg %p288
        $region102: #{tpu_custom_call.1} parent=99 // pred_check_branch
          %3051 = sbr.rel (%p3049) target = $region104
        $region103: #{tpu_custom_call.1} parent=99 // pred_region
          %s3052 = sand.u32 %s273, 1
          %s3053 = scalar_lea.sflag [#allocation6], %s3052
          %s3054 = sand.u32 %s273, 1
          %s3055 = smul.addr %s3054, 256
          %s3056 = scalar_lea.vmem [#allocation16], %s3055
          %3058 = dma.done %s3053, 4096
        $region104: #{tpu_custom_call.1} parent=99 // pred_fallthru
          _
      $region100: #{tpu_custom_call.1} parent=5 // pred_fallthru
        _
    $region6: #{tpu_custom_call.1} parent=1 // loop_footer
      %s32 = sadd.s32 1, %s28
    $region7: #{tpu_custom_call.1} parent=1 // loop_footer_branch
      %27 = sbr.rel target = $region3
    $region8: #{tpu_custom_call.1} parent=1 // loop_exit
      _
    %3059 = vsyncpa [#allocation5], 1
    %s3060 = scalar_lea.sflag [#allocation5], 1
    %3061 = vsyncpa %s3060, 1
    %3062 = vsyncpa [#allocation8], 1
    %3063 = vsyncpa [#allocation11], 1
    %s3064 = scalar_lea.sflag [#allocation11], 1
    %3065 = vsyncpa %s3064, 1
    %3066 = vsyncpa [#allocation14], 1
    %s3067 = scalar_lea.sflag [#allocation14], 1
    %3068 = vsyncpa %s3067, 1
    %3069 = vsyncpa [#allocation6], 1
    %s3070 = scalar_lea.sflag [#allocation6], 1
    %3071 = vsyncpa %s3070, 1

</llo_original>
